<compile_context>
chip_gen: v5e
topology: v5e:2x2
jax: 0.10.0
libtpu: 0.0.40
codegen_flags: <defaults>
</compile_context>

<pallas_src>
import functools

import jax
import jax.numpy as jnp
from jax import lax
from jax.experimental import pallas as pl
from jax.experimental.pallas import tpu as pltpu

EPS = 1e-5
NUM_CLASSES = 100
FC_PAD = 128     # fc output rows padded to a sublane/MXU-friendly 128
C = 24           # hidden channels of conv1..conv3
C4 = 128         # channels of conv4
K = 7            # kernel size of conv1..conv3


# --------------------------------- kernel ----------------------------------------
def _kernel(x_ref, w1_ref, t1_ref, w2_ref, t2_ref, w3_ref, s3_ref, t3_ref,
            w4_ref, t5_ref, fcw_ref, fcb_ref, o_ref):
    f32 = jnp.float32
    bf16 = jnp.bfloat16
    x = x_ref[0]                                                      # (L, TB) bf16

    # conv1 + bn1 + relu   (bn1 scale & conv bias pre-folded into w1/t1)
    h1 = jnp.maximum(
        jnp.dot(w1_ref[...], x, preferred_element_type=f32) + t1_ref[...], 0.0)

    # conv2 + bn2 + relu   (bn2 scale & conv bias pre-folded)
    h2 = jnp.maximum(
        jnp.dot(w2_ref[...], h1.astype(bf16), preferred_element_type=f32)
        + t2_ref[...], 0.0)

    # conv3 + residual + bn3 + relu (bn3 scale folded into w3; residual scaled here, f32)
    h3 = jnp.maximum(
        jnp.dot(w3_ref[...], h2.astype(bf16), preferred_element_type=f32)
        + s3_ref[...] * h1 + t3_ref[...], 0.0)

    # conv4 (kernel length L1 -> single output position) + bn5 + relu
    feat = jnp.maximum(
        jnp.dot(w4_ref[...], h3.astype(bf16), preferred_element_type=f32)
        + t5_ref[...], 0.0)

    # fc1 (padded to 128 rows) -> lane-dense (FC_PAD, TB) slab
    o_ref[0] = jnp.dot(fcw_ref[...], feat.astype(bf16),
                       preferred_element_type=f32) + fcb_ref[...]


# -------------------------- host-side weight restructuring ------------------------
def _conv1_banded(w1, L, L1):
    """w1: (C, 1, K) -> (C*L1, L) matrix for the stride-2 valid conv."""
    w1 = w1[:, 0, :]                                  # (C, K)
    p = jnp.arange(L1)
    m = jnp.zeros((C, L1, L), jnp.float32)
    for k in range(K):
        sel = jnp.zeros((L1, L), jnp.float32).at[p, 2 * p + k].set(1.0)
        m = m + w1[:, k][:, None, None] * sel[None]
    return m.reshape(C * L1, L)


def _conv_banded(w, L1):
    """w: (C, C, K) -> (C*L1, C*L1) matrix for the stride-1 pad-3 conv."""
    p = jnp.arange(L1)
    m = jnp.zeros((C, L1, C, L1), jnp.float32)
    for k in range(K):
        q = p + (k - K // 2)
        valid = ((q >= 0) & (q < L1)).astype(jnp.float32)
        sel = jnp.zeros((L1, L1), jnp.float32).at[p, jnp.clip(q, 0, L1 - 1)].set(valid)
        m = m + w[:, :, k][:, None, :, None] * sel[None, :, None, :]
    return m.reshape(C * L1, C * L1)


def _fold_bn(bias, bn):
    gamma, beta, mean, var = bn
    scale = gamma / jnp.sqrt(var + EPS)
    shift = (bias - mean) * scale + beta
    return scale, shift


def prepare_params(params, L):
    """One-time restructuring of the PyTorch-style params.

    Builds the banded conv matrices, folds conv bias + inference-mode BN into
    them, casts matmul weights to bf16 and pads the fc to 128 rows.  Call ONCE
    when the weights are loaded, not per forward call.
    """
    L1 = (L - K) // 2 + 1
    bf16 = jnp.bfloat16

    s1, t1 = _fold_bn(params["b1"], params["bn1"])     # (24,)
    s2, t2 = _fold_bn(params["b2"], params["bn2"])
    s3, t3 = _fold_bn(params["b3"], params["bn3"])
    s5, t5 = _fold_bn(params["b4"], params["bn5"])     # (128,)

    w1b = (_conv1_banded(params["w1"], L, L1) * jnp.repeat(s1, L1)[:, None]).astype(bf16)
    w2b = (_conv_banded(params["w2"], L1) * jnp.repeat(s2, L1)[:, None]).astype(bf16)
    w3b = (_conv_banded(params["w3"], L1) * jnp.repeat(s3, L1)[:, None]).astype(bf16)
    w4f = (params["w4"].reshape(C4, C * L1) * s5[:, None]).astype(bf16)

    fcw = jnp.zeros((FC_PAD, C4), jnp.float32).at[:NUM_CLASSES].set(params["fc_w"]).astype(bf16)
    fcb = jnp.zeros((FC_PAD, 1), jnp.float32).at[:NUM_CLASSES, 0].set(params["fc_b"])

    return {
        "w1b": w1b, "w2b": w2b, "w3b": w3b, "w4f": w4f, "fcw": fcw, "fcb": fcb,
        "t1e": jnp.repeat(t1, L1)[:, None],            # (C*L1, 1) f32 shifts
        "t2e": jnp.repeat(t2, L1)[:, None],
        "t3e": jnp.repeat(t3, L1)[:, None],
        "s3e": jnp.repeat(s3, L1)[:, None],            # bn3 scale for the residual branch
        "t5e": t5[:, None],                            # (C4, 1)
    }


# ----------------------------- batch-tile selection --------------------------------
def _pick_block_b(B):
    """Lane width (batch tile) per TPU generation."""
    kind = ""
    try:
        kind = jax.devices()[0].device_kind.lower()
    except Exception:
        pass
    two_tc = any(tag in kind for tag in ("v4", "v5p", "7"))   # 2 TensorCores / chip
    for tb in (256, 128):
        if B % tb != 0:
            continue
        steps = B // tb
        # On 2-TC chips keep >= 2 "parallel" grid steps (one per core) as long
        # as that doesn't drop the lane width below 128.
        if two_tc and steps < 2 and tb > 128 and B % (tb // 2) == 0:
            continue
        return tb
    # Fallback: whole batch in one step (non-128-multiple B -> masked stores,
    # partial MXU lanes; fine for small B).
    return B


# ----------------------------------- wrapper --------------------------------------
@functools.partial(jax.jit, static_argnames=("tb",))
def _forward_jit(x, folded, tb):
    B, _, L = x.shape
    assert B % tb == 0
    G = B // tb

    # batch on the lane axis, one (L, TB) bf16 slab per grid step
    xb = x[:, 0, :].reshape(G, tb, L).transpose(0, 2, 1).astype(jnp.bfloat16)   # (G, L, TB)

    ins = (xb,
           folded["w1b"], folded["t1e"],
           folded["w2b"], folded["t2e"],
           folded["w3b"], folded["s3e"], folded["t3e"],
           folded["w4f"], folded["t5e"],
           folded["fcw"], folded["fcb"])

    in_specs = [pl.BlockSpec((1, L, tb), lambda g: (g, 0, 0))] + \
               [pl.BlockSpec(a.shape, lambda g: (0, 0)) for a in ins[1:]]

    out = pl.pallas_call(
        _kernel,
        out_shape=jax.ShapeDtypeStruct((G, FC_PAD, tb), jnp.float32),
        grid_spec=pltpu.PrefetchScalarGridSpec(
            num_scalar_prefetch=0,
            grid=(G,),
            in_specs=in_specs,
            out_specs=pl.BlockSpec((1, FC_PAD, tb), lambda g: (g, 0, 0)),
        ),
        compiler_params=pltpu.CompilerParams(dimension_semantics=("parallel",)),
    )(*ins)

    # (G, FC_PAD, TB) -> (B, FC_PAD) -> slice the real 100 classes
    return out.transpose(0, 2, 1).reshape(B, FC_PAD)[:, :NUM_CLASSES]


def spectral_1d_forward(x, folded):
    """x: (B, 1, L) float32, folded: output of prepare_params -> (B, 100) float32."""
    tb = _pick_block_b(x.shape[0])
    return _forward_jit(x, folded, tb)


# ------------------------------ pure-JAX reference --------------------------------
def reference_forward(x, params):
    def conv1d(h, w, bias, stride, pad):
        y = lax.conv_general_dilated(h, w, (stride,), [(pad, pad)],
                                     dimension_numbers=("NCH", "OIH", "NCH"))
        return y + bias[None, :, None]

    def bn(h, p):
        g, b, m, v = p
        return (h - m[None, :, None]) / jnp.sqrt(v[None, :, None] + EPS) \
               * g[None, :, None] + b[None, :, None]

    h = conv1d(x, params["w1"], params["b1"], 2, 0)
    h = jax.nn.relu(bn(h, params["bn1"]))
    res = h
    h = conv1d(h, params["w2"], params["b2"], 1, 3)
    h = jax.nn.relu(bn(h, params["bn2"]))
    h = conv1d(h, params["w3"], params["b3"], 1, 3)
    h = res + h
    h = jax.nn.relu(bn(h, params["bn3"]))
    h = conv1d(h, params["w4"], params["b4"], 1, 0)
    h = jax.nn.relu(bn(h, params["bn5"]))
    h = h.reshape(h.shape[0], -1)                      # (B, 128)
    return h @ params["fc_w"].T + params["fc_b"][None, :]


# ------------------------------ deterministic init --------------------------------
def init_params(key, L):
    L1 = (L - K) // 2 + 1
    ks = jax.random.split(key, 14)

    def nrm(k, shape, s=0.1):
        return s * jax.random.normal(k, shape, jnp.float32)

    def bn_init(k, c):
        k1, k2, k3, k4 = jax.random.split(k, 4)
        gamma = 1.0 + 0.1 * jax.random.normal(k1, (c,), jnp.float32)
        beta = 0.1 * jax.random.normal(k2, (c,), jnp.float32)
        mean = 0.1 * jax.random.normal(k3, (c,), jnp.float32)
        var = 0.5 + jax.random.uniform(k4, (c,), jnp.float32)
        return (gamma, beta, mean, var)

    return {
        "w1": nrm(ks[0], (C, 1, K)),   "b1": nrm(ks[1], (C,)),   "bn1": bn_init(ks[2], C),
        "w2": nrm(ks[3], (C, C, K)),   "b2": nrm(ks[4], (C,)),   "bn2": bn_init(ks[5], C),
        "w3": nrm(ks[6], (C, C, K)),   "b3": nrm(ks[7], (C,)),   "bn3": bn_init(ks[8], C),
        "w4": nrm(ks[9], (C4, C, L1)), "b4": nrm(ks[10], (C4,)), "bn5": bn_init(ks[11], C4),
        "fc_w": nrm(ks[12], (NUM_CLASSES, C4)), "fc_b": nrm(ks[13], (NUM_CLASSES,)),
    }


if __name__ == "__main__":
    B = 256   # 256 lanes on single-TC chips (one grid step) or 2 x 128-lane shards on v7x
    L = 32    # input_channels (spectral band count); x is (B, 1, L)

    key = jax.random.PRNGKey(0)
    kx, kp = jax.random.split(key)
    x = jax.random.normal(kx, (B, 1, L), jnp.float32)
    params = init_params(kp, L)

    folded = prepare_params(params, L)            # one-time weight restructuring
    out = spectral_1d_forward(x, folded)
    out = jax.block_until_ready(out)

    ref = reference_forward(x, params)
    assert out.shape == (B, NUM_CLASSES), out.shape
    err = float(jnp.max(jnp.abs(out - ref)))
    scale = float(jnp.max(jnp.abs(ref)))
    # bf16 matmul operands with f32 accumulation: allow a few percent of output scale.
    assert err <= 8e-2 * max(scale, 1.0), f"max abs error {err} vs ref scale {scale}"
    print("KERNEL_OK")
</pallas_src>

<mosaic_0001>
module attributes {stable_mosaic.version = 11 : i64} {
  func.func @_kernel(%arg0: i32, %arg1: memref<1x32x256xbf16, #tpu.memory_space<vmem>>, %arg2: memref<312x32xbf16, #tpu.memory_space<vmem>>, %arg3: memref<312x1xf32, #tpu.memory_space<vmem>>, %arg4: memref<312x312xbf16, #tpu.memory_space<vmem>>, %arg5: memref<312x1xf32, #tpu.memory_space<vmem>>, %arg6: memref<312x312xbf16, #tpu.memory_space<vmem>>, %arg7: memref<312x1xf32, #tpu.memory_space<vmem>>, %arg8: memref<312x1xf32, #tpu.memory_space<vmem>>, %arg9: memref<128x312xbf16, #tpu.memory_space<vmem>>, %arg10: memref<128x1xf32, #tpu.memory_space<vmem>>, %arg11: memref<128x128xbf16, #tpu.memory_space<vmem>>, %arg12: memref<128x1xf32, #tpu.memory_space<vmem>>, %arg13: memref<1x128x256xf32, #tpu.memory_space<vmem>>) attributes {dimension_semantics = [#tpu.dimension_semantics<parallel>], iteration_bounds = array<i64: 1>, scalar_prefetch = 0 : i64, scratch_operands = 0 : i64, tpu.core_type = #tpu.core_type<tc>, window_params = [{transform_indices = @transform_0, window_bounds = array<i64: 1, 32, 256>}, {pipeline_mode = #tpu.pipeline_mode<synchronous>, transform_indices = @transform_1, window_bounds = array<i64: 312, 32>}, {pipeline_mode = #tpu.pipeline_mode<synchronous>, transform_indices = @transform_2, window_bounds = array<i64: 312, 1>}, {pipeline_mode = #tpu.pipeline_mode<synchronous>, transform_indices = @transform_3, window_bounds = array<i64: 312, 312>}, {pipeline_mode = #tpu.pipeline_mode<synchronous>, transform_indices = @transform_4, window_bounds = array<i64: 312, 1>}, {pipeline_mode = #tpu.pipeline_mode<synchronous>, transform_indices = @transform_5, window_bounds = array<i64: 312, 312>}, {pipeline_mode = #tpu.pipeline_mode<synchronous>, transform_indices = @transform_6, window_bounds = array<i64: 312, 1>}, {pipeline_mode = #tpu.pipeline_mode<synchronous>, transform_indices = @transform_7, window_bounds = array<i64: 312, 1>}, {pipeline_mode = #tpu.pipeline_mode<synchronous>, transform_indices = @transform_8, window_bounds = array<i64: 128, 312>}, {pipeline_mode = #tpu.pipeline_mode<synchronous>, transform_indices = @transform_9, window_bounds = array<i64: 128, 1>}, {pipeline_mode = #tpu.pipeline_mode<synchronous>, transform_indices = @transform_10, window_bounds = array<i64: 128, 128>}, {pipeline_mode = #tpu.pipeline_mode<synchronous>, transform_indices = @transform_11, window_bounds = array<i64: 128, 1>}, {transform_indices = @transform_12, window_bounds = array<i64: 1, 128, 256>}]} {
    %c0 = arith.constant 0 : index
    %c0_0 = arith.constant 0 : index
    %c0_1 = arith.constant 0 : index
    %0 = vector.load %arg1[%c0, %c0_0, %c0_1] : memref<1x32x256xbf16, #tpu.memory_space<vmem>>, vector<1x32x256xbf16>
    %1 = vector.shape_cast %0 : vector<1x32x256xbf16> to vector<32x256xbf16>
    %c0_2 = arith.constant 0 : index
    %c0_3 = arith.constant 0 : index
    %2 = vector.load %arg2[%c0_2, %c0_3] : memref<312x32xbf16, #tpu.memory_space<vmem>>, vector<312x32xbf16>
    %cst = arith.constant dense<0.000000e+00> : vector<312x256xf32>
    %3 = tpu.matmul %2, %1, %cst {dimension_numbers = #tpu.dot_dimension_numbers<[1], [0], [0], [1], [0, 0, 1, 1], [], []>} : vector<312x32xbf16>, vector<32x256xbf16>, vector<312x256xf32> -> vector<312x256xf32>
    %c0_4 = arith.constant 0 : index
    %c0_5 = arith.constant 0 : index
    %4 = vector.load %arg3[%c0_4, %c0_5] : memref<312x1xf32, #tpu.memory_space<vmem>>, vector<312x1xf32>
    %5 = vector.broadcast %4 : vector<312x1xf32> to vector<312x256xf32>
    %6 = arith.addf %3, %5 : vector<312x256xf32>
    %cst_6 = arith.constant 0.000000e+00 : f32
    %7 = vector.broadcast %cst_6 : f32 to vector<312x256xf32>
    %8 = arith.maximumf %6, %7 : vector<312x256xf32>
    %c0_7 = arith.constant 0 : index
    %c0_8 = arith.constant 0 : index
    %9 = vector.load %arg4[%c0_7, %c0_8] : memref<312x312xbf16, #tpu.memory_space<vmem>>, vector<312x312xbf16>
    %10 = arith.truncf %8 : vector<312x256xf32> to vector<312x256xbf16>
    %cst_9 = arith.constant dense<0.000000e+00> : vector<312x256xf32>
    %11 = tpu.matmul %9, %10, %cst_9 {dimension_numbers = #tpu.dot_dimension_numbers<[1], [0], [0], [1], [0, 0, 1, 1], [], []>} : vector<312x312xbf16>, vector<312x256xbf16>, vector<312x256xf32> -> vector<312x256xf32>
    %c0_10 = arith.constant 0 : index
    %c0_11 = arith.constant 0 : index
    %12 = vector.load %arg5[%c0_10, %c0_11] : memref<312x1xf32, #tpu.memory_space<vmem>>, vector<312x1xf32>
    %13 = vector.broadcast %12 : vector<312x1xf32> to vector<312x256xf32>
    %14 = arith.addf %11, %13 : vector<312x256xf32>
    %cst_12 = arith.constant 0.000000e+00 : f32
    %15 = vector.broadcast %cst_12 : f32 to vector<312x256xf32>
    %16 = arith.maximumf %14, %15 : vector<312x256xf32>
    %c0_13 = arith.constant 0 : index
    %c0_14 = arith.constant 0 : index
    %17 = vector.load %arg6[%c0_13, %c0_14] : memref<312x312xbf16, #tpu.memory_space<vmem>>, vector<312x312xbf16>
    %18 = arith.truncf %16 : vector<312x256xf32> to vector<312x256xbf16>
    %cst_15 = arith.constant dense<0.000000e+00> : vector<312x256xf32>
    %19 = tpu.matmul %17, %18, %cst_15 {dimension_numbers = #tpu.dot_dimension_numbers<[1], [0], [0], [1], [0, 0, 1, 1], [], []>} : vector<312x312xbf16>, vector<312x256xbf16>, vector<312x256xf32> -> vector<312x256xf32>
    %c0_16 = arith.constant 0 : index
    %c0_17 = arith.constant 0 : index
    %20 = vector.load %arg7[%c0_16, %c0_17] : memref<312x1xf32, #tpu.memory_space<vmem>>, vector<312x1xf32>
    %21 = vector.broadcast %20 : vector<312x1xf32> to vector<312x256xf32>
    %22 = arith.mulf %21, %8 : vector<312x256xf32>
    %23 = arith.addf %19, %22 : vector<312x256xf32>
    %c0_18 = arith.constant 0 : index
    %c0_19 = arith.constant 0 : index
    %24 = vector.load %arg8[%c0_18, %c0_19] : memref<312x1xf32, #tpu.memory_space<vmem>>, vector<312x1xf32>
    %25 = vector.broadcast %24 : vector<312x1xf32> to vector<312x256xf32>
    %26 = arith.addf %23, %25 : vector<312x256xf32>
    %cst_20 = arith.constant 0.000000e+00 : f32
    %27 = vector.broadcast %cst_20 : f32 to vector<312x256xf32>
    %28 = arith.maximumf %26, %27 : vector<312x256xf32>
    %c0_21 = arith.constant 0 : index
    %c0_22 = arith.constant 0 : index
    %29 = vector.load %arg9[%c0_21, %c0_22] : memref<128x312xbf16, #tpu.memory_space<vmem>>, vector<128x312xbf16>
    %30 = arith.truncf %28 : vector<312x256xf32> to vector<312x256xbf16>
    %cst_23 = arith.constant dense<0.000000e+00> : vector<128x256xf32>
    %31 = tpu.matmul %29, %30, %cst_23 {dimension_numbers = #tpu.dot_dimension_numbers<[1], [0], [0], [1], [0, 0, 1, 1], [], []>} : vector<128x312xbf16>, vector<312x256xbf16>, vector<128x256xf32> -> vector<128x256xf32>
    %c0_24 = arith.constant 0 : index
    %c0_25 = arith.constant 0 : index
    %32 = vector.load %arg10[%c0_24, %c0_25] : memref<128x1xf32, #tpu.memory_space<vmem>>, vector<128x1xf32>
    %33 = vector.broadcast %32 : vector<128x1xf32> to vector<128x256xf32>
    %34 = arith.addf %31, %33 : vector<128x256xf32>
    %cst_26 = arith.constant 0.000000e+00 : f32
    %35 = vector.broadcast %cst_26 : f32 to vector<128x256xf32>
    %36 = arith.maximumf %34, %35 : vector<128x256xf32>
    %c0_27 = arith.constant 0 : index
    %c0_28 = arith.constant 0 : index
    %37 = vector.load %arg11[%c0_27, %c0_28] : memref<128x128xbf16, #tpu.memory_space<vmem>>, vector<128x128xbf16>
    %38 = arith.truncf %36 : vector<128x256xf32> to vector<128x256xbf16>
    %cst_29 = arith.constant dense<0.000000e+00> : vector<128x256xf32>
    %39 = tpu.matmul %37, %38, %cst_29 {dimension_numbers = #tpu.dot_dimension_numbers<[1], [0], [0], [1], [0, 0, 1, 1], [], []>} : vector<128x128xbf16>, vector<128x256xbf16>, vector<128x256xf32> -> vector<128x256xf32>
    %c0_30 = arith.constant 0 : index
    %c0_31 = arith.constant 0 : index
    %40 = vector.load %arg12[%c0_30, %c0_31] : memref<128x1xf32, #tpu.memory_space<vmem>>, vector<128x1xf32>
    %41 = vector.broadcast %40 : vector<128x1xf32> to vector<128x256xf32>
    %42 = arith.addf %39, %41 : vector<128x256xf32>
    %c0_32 = arith.constant 0 : index
    %c0_33 = arith.constant 0 : index
    %c0_34 = arith.constant 0 : index
    %43 = vector.load %arg13[%c0_32, %c0_33, %c0_34] : memref<1x128x256xf32, #tpu.memory_space<vmem>>, vector<1x128x256xf32>
    %44 = vector.shape_cast %43 : vector<1x128x256xf32> to vector<128x256xf32>
    %45 = vector.shape_cast %42 : vector<128x256xf32> to vector<1x128x256xf32>
    tpu.vector_store %arg13[%c0_32, %c0_33, %c0_34], %45 {strides = array<i32>} : memref<1x128x256xf32, #tpu.memory_space<vmem>>, vector<1x128x256xf32>,
    return
  }
  func.func @transform_0(%arg0: i32) -> (i32, i32, i32) {
    %c0_i32 = arith.constant 0 : i32
    %c0_i32_0 = arith.constant 0 : i32
    %c0_i32_1 = arith.constant 0 : i32
    return %arg0, %c0_i32, %c0_i32_0 : i32, i32, i32
  }
  func.func @transform_1(%arg0: i32) -> (i32, i32) {
    %c0_i32 = arith.constant 0 : i32
    %c0_i32_0 = arith.constant 0 : i32
    %c0_i32_1 = arith.constant 0 : i32
    return %c0_i32, %c0_i32_0 : i32, i32
  }
  func.func @transform_2(%arg0: i32) -> (i32, i32) {
    %c0_i32 = arith.constant 0 : i32
    %c0_i32_0 = arith.constant 0 : i32
    %c0_i32_1 = arith.constant 0 : i32
    return %c0_i32, %c0_i32_0 : i32, i32
  }
  func.func @transform_3(%arg0: i32) -> (i32, i32) {
    %c0_i32 = arith.constant 0 : i32
    %c0_i32_0 = arith.constant 0 : i32
    %c0_i32_1 = arith.constant 0 : i32
    return %c0_i32, %c0_i32_0 : i32, i32
  }
  func.func @transform_4(%arg0: i32) -> (i32, i32) {
    %c0_i32 = arith.constant 0 : i32
    %c0_i32_0 = arith.constant 0 : i32
    %c0_i32_1 = arith.constant 0 : i32
    return %c0_i32, %c0_i32_0 : i32, i32
  }
  func.func @transform_5(%arg0: i32) -> (i32, i32) {
    %c0_i32 = arith.constant 0 : i32
    %c0_i32_0 = arith.constant 0 : i32
    %c0_i32_1 = arith.constant 0 : i32
    return %c0_i32, %c0_i32_0 : i32, i32
  }
  func.func @transform_6(%arg0: i32) -> (i32, i32) {
    %c0_i32 = arith.constant 0 : i32
    %c0_i32_0 = arith.constant 0 : i32
    %c0_i32_1 = arith.constant 0 : i32
    return %c0_i32, %c0_i32_0 : i32, i32
  }
  func.func @transform_7(%arg0: i32) -> (i32, i32) {
    %c0_i32 = arith.constant 0 : i32
    %c0_i32_0 = arith.constant 0 : i32
    %c0_i32_1 = arith.constant 0 : i32
    return %c0_i32, %c0_i32_0 : i32, i32
  }
  func.func @transform_8(%arg0: i32) -> (i32, i32) {
    %c0_i32 = arith.constant 0 : i32
    %c0_i32_0 = arith.constant 0 : i32
    %c0_i32_1 = arith.constant 0 : i32
    return %c0_i32, %c0_i32_0 : i32, i32
  }
  func.func @transform_9(%arg0: i32) -> (i32, i32) {
    %c0_i32 = arith.constant 0 : i32
    %c0_i32_0 = arith.constant 0 : i32
    %c0_i32_1 = arith.constant 0 : i32
    return %c0_i32, %c0_i32_0 : i32, i32
  }
  func.func @transform_10(%arg0: i32) -> (i32, i32) {
    %c0_i32 = arith.constant 0 : i32
    %c0_i32_0 = arith.constant 0 : i32
    %c0_i32_1 = arith.constant 0 : i32
    return %c0_i32, %c0_i32_0 : i32, i32
  }
  func.func @transform_11(%arg0: i32) -> (i32, i32) {
    %c0_i32 = arith.constant 0 : i32
    %c0_i32_0 = arith.constant 0 : i32
    %c0_i32_1 = arith.constant 0 : i32
    return %c0_i32, %c0_i32_0 : i32, i32
  }
  func.func @transform_12(%arg0: i32) -> (i32, i32, i32) {
    %c0_i32 = arith.constant 0 : i32
    %c0_i32_0 = arith.constant 0 : i32
    %c0_i32_1 = arith.constant 0 : i32
    return %arg0, %c0_i32, %c0_i32_0 : i32, i32, i32
  }
}

</mosaic_0001>

<llo_original>
// kernel: _forward_jit.1
$region0: #{_forward_jit.1}
  #allocation0 [shape = 'u32[]', space=smem, size = 0x4, offset = 0x4, fixed_abs, tag = 'smem constant byte address 0x4 - core index']
  #allocation1 [shape = 'u32[72,128]{1,0:T(1,128)}', space=vmem, size = 0x9000, scoped, tag = 'internal scratch']
  %s0 = inlined_call_operand.vmem [shape: bf16[1,32,256], index: 0, kind: input, shape index: {}]
  %s1 = inlined_call_operand.vmem [shape: bf16[312,32], index: 1, kind: input, shape index: {}]
  %s2 = inlined_call_operand.vmem [shape: f32[312,1], index: 2, kind: input, shape index: {}]
  %s3 = inlined_call_operand.vmem [shape: bf16[312,312], index: 3, kind: input, shape index: {}]
  %s4 = inlined_call_operand.vmem [shape: f32[312,1], index: 4, kind: input, shape index: {}]
  %s5 = inlined_call_operand.vmem [shape: bf16[312,312], index: 5, kind: input, shape index: {}]
  %s6 = inlined_call_operand.vmem [shape: f32[312,1], index: 6, kind: input, shape index: {}]
  %s7 = inlined_call_operand.vmem [shape: f32[312,1], index: 7, kind: input, shape index: {}]
  %s8 = inlined_call_operand.vmem [shape: bf16[128,312], index: 8, kind: input, shape index: {}]
  %s9 = inlined_call_operand.vmem [shape: f32[128,1], index: 9, kind: input, shape index: {}]
  %s10 = inlined_call_operand.vmem [shape: bf16[128,128], index: 10, kind: input, shape index: {}]
  %s11 = inlined_call_operand.vmem [shape: f32[128,1], index: 11, kind: input, shape index: {}]
  %s12 = inlined_call_operand.vmem [shape: f32[1,128,256], index: 12, kind: output, shape index: {}]
  %s13 = sld [smem:[#allocation0]]
  $region58: #{_forward_jit.1} parent=0
    _
  %s15 = ssub.s32 1, %s13
  %s16 = scalar_select 0, %s15, %s13
  // Predicated region
  $region2: #{_forward_jit.1} parent=0 // pred_check
    _
  $region3: #{_forward_jit.1} parent=0 // pred_check_branch
    %18 = sbr.rel (0) target = $region5
  $region4: #{_forward_jit.1} parent=0 // pred_region
    _
  $region5: #{_forward_jit.1} parent=0 // pred_fallthru
    _
  // Predicated region
  $region6: #{_forward_jit.1} parent=0 // pred_check
    _
  $region7: #{_forward_jit.1} parent=0 // pred_check_branch
    %20 = sbr.rel (0) target = $region9
  $region8: #{_forward_jit.1} parent=0 // pred_region
    _
  $region9: #{_forward_jit.1} parent=0 // pred_fallthru
    _
  // Predicated region
  $region10: #{_forward_jit.1} parent=0 // pred_check
    _
  $region11: #{_forward_jit.1} parent=0 // pred_check_branch
    %22 = sbr.rel (0) target = $region13
  $region12: #{_forward_jit.1} parent=0 // pred_region
    _
  $region13: #{_forward_jit.1} parent=0 // pred_fallthru
    _
  // Predicated region
  $region14: #{_forward_jit.1} parent=0 // pred_check
    _
  $region15: #{_forward_jit.1} parent=0 // pred_check_branch
    %24 = sbr.rel (0) target = $region17
  $region16: #{_forward_jit.1} parent=0 // pred_region
    _
  $region17: #{_forward_jit.1} parent=0 // pred_fallthru
    _
  // Predicated region
  $region18: #{_forward_jit.1} parent=0 // pred_check
    _
  $region19: #{_forward_jit.1} parent=0 // pred_check_branch
    %26 = sbr.rel (0) target = $region21
  $region20: #{_forward_jit.1} parent=0 // pred_region
    _
  $region21: #{_forward_jit.1} parent=0 // pred_fallthru
    _
  // Predicated region
  $region22: #{_forward_jit.1} parent=0 // pred_check
    _
  $region23: #{_forward_jit.1} parent=0 // pred_check_branch
    %28 = sbr.rel (0) target = $region25
  $region24: #{_forward_jit.1} parent=0 // pred_region
    _
  $region25: #{_forward_jit.1} parent=0 // pred_fallthru
    _
  // Predicated region
  $region26: #{_forward_jit.1} parent=0 // pred_check
    _
  $region27: #{_forward_jit.1} parent=0 // pred_check_branch
    %30 = sbr.rel (0) target = $region29
  $region28: #{_forward_jit.1} parent=0 // pred_region
    _
  $region29: #{_forward_jit.1} parent=0 // pred_fallthru
    _
  // Predicated region
  $region30: #{_forward_jit.1} parent=0 // pred_check
    _
  $region31: #{_forward_jit.1} parent=0 // pred_check_branch
    %32 = sbr.rel (0) target = $region33
  $region32: #{_forward_jit.1} parent=0 // pred_region
    _
  $region33: #{_forward_jit.1} parent=0 // pred_fallthru
    _
  // Predicated region
  $region34: #{_forward_jit.1} parent=0 // pred_check
    _
  $region35: #{_forward_jit.1} parent=0 // pred_check_branch
    %34 = sbr.rel (0) target = $region37
  $region36: #{_forward_jit.1} parent=0 // pred_region
    _
  $region37: #{_forward_jit.1} parent=0 // pred_fallthru
    _
  // Predicated region
  $region38: #{_forward_jit.1} parent=0 // pred_check
    _
  $region39: #{_forward_jit.1} parent=0 // pred_check_branch
    %36 = sbr.rel (0) target = $region41
  $region40: #{_forward_jit.1} parent=0 // pred_region
    _
  $region41: #{_forward_jit.1} parent=0 // pred_fallthru
    _
  // Predicated region
  $region42: #{_forward_jit.1} parent=0 // pred_check
    _
  $region43: #{_forward_jit.1} parent=0 // pred_check_branch
    %38 = sbr.rel (0) target = $region45
  $region44: #{_forward_jit.1} parent=0 // pred_region
    _
  $region45: #{_forward_jit.1} parent=0 // pred_fallthru
    _
  // Predicated region
  $region46: #{_forward_jit.1} parent=0 // pred_check
    _
  $region47: #{_forward_jit.1} parent=0 // pred_check_branch
    %40 = sbr.rel (0) target = $region49
  $region48: #{_forward_jit.1} parent=0 // pred_region
    _
  $region49: #{_forward_jit.1} parent=0 // pred_fallthru
    _
  %v42 = vld [vmem:[%s0] sm:$0xff]
  %v43 = vld [vmem:[%s0 + $0x8] sm:$0xff]
  %v44 = vld [vmem:[%s0 + $0x10] sm:$0xff]
  %v45 = vld [vmem:[%s0 + $0x18] sm:$0xff]
  %v46 = vld [vmem:[%s1] sm:$0xf]
  %v47 = vld [vmem:[%s1 + $0x4] sm:$0xf]
  %v48 = vld [vmem:[%s1 + $0x8] sm:$0xf]
  %v49 = vld [vmem:[%s1 + $0xc] sm:$0xf]
  %v50 = vld [vmem:[%s1 + $0x10] sm:$0xf]
  %v51 = vld [vmem:[%s1 + $0x14] sm:$0xf]
  %v52 = vld [vmem:[%s1 + $0x18] sm:$0xf]
  %v53 = vld [vmem:[%s1 + $0x1c] sm:$0xf]
  %v54 = vld [vmem:[%s1 + $0x20] sm:$0xf]
  %v55 = vld [vmem:[%s1 + $0x24] sm:$0xf]
  %v56 = vld [vmem:[%s1 + $0x28] sm:$0xf]
  %v57 = vld [vmem:[%s1 + $0x2c] sm:$0xf]
  %v58 = vld [vmem:[%s1 + $0x30] sm:$0xf]
  %v59 = vld [vmem:[%s1 + $0x34] sm:$0xf]
  %v60 = vld [vmem:[%s1 + $0x38] sm:$0xf]
  %v61 = vld [vmem:[%s1 + $0x3c] sm:$0xf]
  %v62 = vld [vmem:[%s1 + $0x40] sm:$0xf]
  %v63 = vld [vmem:[%s1 + $0x44] sm:$0xf]
  %v64 = vld [vmem:[%s1 + $0x48] sm:$0xf]
  %v65 = vld [vmem:[%s1 + $0x4c] sm:$0xf]
  %v66 = vld [vmem:[%s1 + $0x50] sm:$0xf]
  %v67 = vld [vmem:[%s1 + $0x54] sm:$0xf]
  %v68 = vld [vmem:[%s1 + $0x58] sm:$0xf]
  %v69 = vld [vmem:[%s1 + $0x5c] sm:$0xf]
  %v70 = vld [vmem:[%s1 + $0x60] sm:$0xf]
  %v71 = vld [vmem:[%s1 + $0x64] sm:$0xf]
  %v72 = vld [vmem:[%s1 + $0x68] sm:$0xf]
  %v73 = vld [vmem:[%s1 + $0x6c] sm:$0xf]
  %v74 = vld [vmem:[%s1 + $0x70] sm:$0xf]
  %v75 = vld [vmem:[%s1 + $0x74] sm:$0xf]
  %v76 = vld [vmem:[%s1 + $0x78] sm:$0xf]
  %v77 = vld [vmem:[%s1 + $0x7c] sm:$0xf]
  %v78 = vld [vmem:[%s1 + $0x80] sm:$0xf]
  %v79 = vld [vmem:[%s1 + $0x84] sm:$0xf]
  %v80 = vld [vmem:[%s1 + $0x88] sm:$0xf]
  %v81 = vld [vmem:[%s1 + $0x8c] sm:$0xf]
  %v82 = vld [vmem:[%s1 + $0x90] sm:$0xf]
  %v83 = vld [vmem:[%s1 + $0x94] sm:$0xf]
  %v84 = vld [vmem:[%s1 + $0x98] sm:$0xf]
  %v85 = vld [vmem:[%s2] sm:$0xff]
  %v86 = vld [vmem:[%s2 + $0x8] sm:$0xff]
  %v87 = vld [vmem:[%s2 + $0x10] sm:$0xff]
  %v88 = vld [vmem:[%s2 + $0x18] sm:$0xff]
  %v89 = vld [vmem:[%s2 + $0x20] sm:$0xff]
  %v90 = vld [vmem:[%s2 + $0x28] sm:$0xff]
  %v91 = vld [vmem:[%s2 + $0x30] sm:$0xff]
  %v92 = vld [vmem:[%s2 + $0x38] sm:$0xff]
  %v93 = vld [vmem:[%s2 + $0x40] sm:$0xff]
  %v94 = vld [vmem:[%s2 + $0x48] sm:$0xff]
  %v95 = vld [vmem:[%s2 + $0x50] sm:$0xff]
  %v96 = vld [vmem:[%s2 + $0x58] sm:$0xff]
  %v97 = vld [vmem:[%s2 + $0x60] sm:$0xff]
  %v98 = vld [vmem:[%s2 + $0x68] sm:$0xff]
  %v99 = vld [vmem:[%s2 + $0x70] sm:$0xff]
  %v100 = vld [vmem:[%s2 + $0x78] sm:$0xff]
  %v101 = vld [vmem:[%s2 + $0x80] sm:$0xff]
  %v102 = vld [vmem:[%s2 + $0x88] sm:$0xff]
  %v103 = vld [vmem:[%s2 + $0x90] sm:$0xff]
  %v104 = vld [vmem:[%s2 + $0x98] sm:$0xff]
  %v105 = vld [vmem:[%s2 + $0xa0] sm:$0xff]
  %v106 = vld [vmem:[%s2 + $0xa8] sm:$0xff]
  %v107 = vld [vmem:[%s2 + $0xb0] sm:$0xff]
  %v108 = vld [vmem:[%s2 + $0xb8] sm:$0xff]
  %v109 = vld [vmem:[%s2 + $0xc0] sm:$0xff]
  %v110 = vld [vmem:[%s2 + $0xc8] sm:$0xff]
  %v111 = vld [vmem:[%s2 + $0xd0] sm:$0xff]
  %v112 = vld [vmem:[%s2 + $0xd8] sm:$0xff]
  %v113 = vld [vmem:[%s2 + $0xe0] sm:$0xff]
  %v114 = vld [vmem:[%s2 + $0xe8] sm:$0xff]
  %v115 = vld [vmem:[%s2 + $0xf0] sm:$0xff]
  %v116 = vld [vmem:[%s2 + $0xf8] sm:$0xff]
  %v117 = vld [vmem:[%s2 + $0x100] sm:$0xff]
  %v118 = vld [vmem:[%s2 + $0x108] sm:$0xff]
  %v119 = vld [vmem:[%s2 + $0x110] sm:$0xff]
  %v120 = vld [vmem:[%s2 + $0x118] sm:$0xff]
  %v121 = vld [vmem:[%s2 + $0x120] sm:$0xff]
  %v122 = vld [vmem:[%s2 + $0x128] sm:$0xff]
  %v123 = vld [vmem:[%s2 + $0x130] sm:$0xff]
  %125 = vset.pattern.permute.xlu0 0
  %126 = vperm.xlu0 %125, %v85
  %v127 = vpop.permute.xlu0 %126
  %130 = vset.pattern.permute.xlu0 0
  %131 = vperm.xlu0 %130, %v86
  %v132 = vpop.permute.xlu0 %131
  %135 = vset.pattern.permute.xlu0 0
  %136 = vperm.xlu0 %135, %v87
  %v137 = vpop.permute.xlu0 %136
  %140 = vset.pattern.permute.xlu0 0
  %141 = vperm.xlu0 %140, %v88
  %v142 = vpop.permute.xlu0 %141
  %145 = vset.pattern.permute.xlu0 0
  %146 = vperm.xlu0 %145, %v89
  %v147 = vpop.permute.xlu0 %146
  %150 = vset.pattern.permute.xlu0 0
  %151 = vperm.xlu0 %150, %v90
  %v152 = vpop.permute.xlu0 %151
  %155 = vset.pattern.permute.xlu0 0
  %156 = vperm.xlu0 %155, %v91
  %v157 = vpop.permute.xlu0 %156
  %160 = vset.pattern.permute.xlu0 0
  %161 = vperm.xlu0 %160, %v92
  %v162 = vpop.permute.xlu0 %161
  %165 = vset.pattern.permute.xlu0 0
  %166 = vperm.xlu0 %165, %v93
  %v167 = vpop.permute.xlu0 %166
  %170 = vset.pattern.permute.xlu0 0
  %171 = vperm.xlu0 %170, %v94
  %v172 = vpop.permute.xlu0 %171
  %175 = vset.pattern.permute.xlu0 0
  %176 = vperm.xlu0 %175, %v95
  %v177 = vpop.permute.xlu0 %176
  %180 = vset.pattern.permute.xlu0 0
  %181 = vperm.xlu0 %180, %v96
  %v182 = vpop.permute.xlu0 %181
  %185 = vset.pattern.permute.xlu0 0
  %186 = vperm.xlu0 %185, %v97
  %v187 = vpop.permute.xlu0 %186
  %190 = vset.pattern.permute.xlu0 0
  %191 = vperm.xlu0 %190, %v98
  %v192 = vpop.permute.xlu0 %191
  %195 = vset.pattern.permute.xlu0 0
  %196 = vperm.xlu0 %195, %v99
  %v197 = vpop.permute.xlu0 %196
  %200 = vset.pattern.permute.xlu0 0
  %201 = vperm.xlu0 %200, %v100
  %v202 = vpop.permute.xlu0 %201
  %205 = vset.pattern.permute.xlu0 0
  %206 = vperm.xlu0 %205, %v101
  %v207 = vpop.permute.xlu0 %206
  %210 = vset.pattern.permute.xlu0 0
  %211 = vperm.xlu0 %210, %v102
  %v212 = vpop.permute.xlu0 %211
  %215 = vset.pattern.permute.xlu0 0
  %216 = vperm.xlu0 %215, %v103
  %v217 = vpop.permute.xlu0 %216
  %220 = vset.pattern.permute.xlu0 0
  %221 = vperm.xlu0 %220, %v104
  %v222 = vpop.permute.xlu0 %221
  %225 = vset.pattern.permute.xlu0 0
  %226 = vperm.xlu0 %225, %v105
  %v227 = vpop.permute.xlu0 %226
  %230 = vset.pattern.permute.xlu0 0
  %231 = vperm.xlu0 %230, %v106
  %v232 = vpop.permute.xlu0 %231
  %235 = vset.pattern.permute.xlu0 0
  %236 = vperm.xlu0 %235, %v107
  %v237 = vpop.permute.xlu0 %236
  %240 = vset.pattern.permute.xlu0 0
  %241 = vperm.xlu0 %240, %v108
  %v242 = vpop.permute.xlu0 %241
  %245 = vset.pattern.permute.xlu0 0
  %246 = vperm.xlu0 %245, %v109
  %v247 = vpop.permute.xlu0 %246
  %250 = vset.pattern.permute.xlu0 0
  %251 = vperm.xlu0 %250, %v110
  %v252 = vpop.permute.xlu0 %251
  %255 = vset.pattern.permute.xlu0 0
  %256 = vperm.xlu0 %255, %v111
  %v257 = vpop.permute.xlu0 %256
  %260 = vset.pattern.permute.xlu0 0
  %261 = vperm.xlu0 %260, %v112
  %v262 = vpop.permute.xlu0 %261
  %265 = vset.pattern.permute.xlu0 0
  %266 = vperm.xlu0 %265, %v113
  %v267 = vpop.permute.xlu0 %266
  %270 = vset.pattern.permute.xlu0 0
  %271 = vperm.xlu0 %270, %v114
  %v272 = vpop.permute.xlu0 %271
  %275 = vset.pattern.permute.xlu0 0
  %276 = vperm.xlu0 %275, %v115
  %v277 = vpop.permute.xlu0 %276
  %280 = vset.pattern.permute.xlu0 0
  %281 = vperm.xlu0 %280, %v116
  %v282 = vpop.permute.xlu0 %281
  %285 = vset.pattern.permute.xlu0 0
  %286 = vperm.xlu0 %285, %v117
  %v287 = vpop.permute.xlu0 %286
  %290 = vset.pattern.permute.xlu0 0
  %291 = vperm.xlu0 %290, %v118
  %v292 = vpop.permute.xlu0 %291
  %295 = vset.pattern.permute.xlu0 0
  %296 = vperm.xlu0 %295, %v119
  %v297 = vpop.permute.xlu0 %296
  %300 = vset.pattern.permute.xlu0 0
  %301 = vperm.xlu0 %300, %v120
  %v302 = vpop.permute.xlu0 %301
  %305 = vset.pattern.permute.xlu0 0
  %306 = vperm.xlu0 %305, %v121
  %v307 = vpop.permute.xlu0 %306
  %310 = vset.pattern.permute.xlu0 0
  %311 = vperm.xlu0 %310, %v122
  %v312 = vpop.permute.xlu0 %311
  %315 = vset.pattern.permute.xlu0 0
  %316 = vperm.xlu0 %315, %v123
  %v317 = vpop.permute.xlu0 %316
  %v358 = vunpack.c.l.b16 %v46
  %v359 = vunpack.c.l.b16 %v47
  %v360 = vunpack.c.l.b16 %v48
  %v361 = vunpack.c.l.b16 %v49
  %v362 = vunpack.c.l.b16 %v50
  %v363 = vunpack.c.l.b16 %v51
  %v364 = vunpack.c.l.b16 %v52
  %v365 = vunpack.c.l.b16 %v53
  %v366 = vunpack.c.l.b16 %v54
  %v367 = vunpack.c.l.b16 %v55
  %v368 = vunpack.c.l.b16 %v56
  %v369 = vunpack.c.l.b16 %v57
  %v370 = vunpack.c.l.b16 %v58
  %v371 = vunpack.c.l.b16 %v59
  %v372 = vunpack.c.l.b16 %v60
  %v373 = vunpack.c.l.b16 %v61
  %v374 = vunpack.c.l.b16 %v62
  %v375 = vunpack.c.l.b16 %v63
  %v376 = vunpack.c.l.b16 %v64
  %v377 = vunpack.c.l.b16 %v65
  %v378 = vunpack.c.l.b16 %v66
  %v379 = vunpack.c.l.b16 %v67
  %v380 = vunpack.c.l.b16 %v68
  %v381 = vunpack.c.l.b16 %v69
  %v382 = vunpack.c.l.b16 %v70
  %v383 = vunpack.c.l.b16 %v71
  %v384 = vunpack.c.l.b16 %v72
  %v385 = vunpack.c.l.b16 %v73
  %v386 = vunpack.c.l.b16 %v74
  %v387 = vunpack.c.l.b16 %v75
  %v388 = vunpack.c.l.b16 %v76
  %v389 = vunpack.c.l.b16 %v77
  %v390 = vunpack.c.l.b16 %v78
  %v391 = vunpack.c.l.b16 %v79
  %v392 = vunpack.c.l.b16 %v80
  %v393 = vunpack.c.l.b16 %v81
  %v394 = vunpack.c.l.b16 %v82
  %v395 = vunpack.c.l.b16 %v83
  %v396 = vunpack.c.l.b16 %v84
  %v397 = vpack.c.b16 %v359, %v358
  %v398 = vpack.c.b16 %v361, %v360
  %v399 = vpack.c.b16 %v363, %v362
  %v400 = vpack.c.b16 %v365, %v364
  %v401 = vpack.c.b16 %v367, %v366
  %v402 = vpack.c.b16 %v369, %v368
  %v403 = vpack.c.b16 %v371, %v370
  %v404 = vpack.c.b16 %v373, %v372
  %v405 = vpack.c.b16 %v375, %v374
  %v406 = vpack.c.b16 %v377, %v376
  %v407 = vpack.c.b16 %v379, %v378
  %v408 = vpack.c.b16 %v381, %v380
  %v409 = vpack.c.b16 %v383, %v382
  %v410 = vpack.c.b16 %v385, %v384
  %v411 = vpack.c.b16 %v387, %v386
  %v412 = vpack.c.b16 %v389, %v388
  %v413 = vpack.c.b16 %v391, %v390
  %v414 = vpack.c.b16 %v393, %v392
  %v415 = vpack.c.b16 %v395, %v394
  %v416 = vpack.c.b16 %v396, %v396
  %v421 = vunpack.c.l.b16 %v42
  %v422 = vunpack.c.h.b16 %v42
  %v423 = vunpack.c.l.b16 %v43
  %v424 = vunpack.c.h.b16 %v43
  %v425 = vunpack.c.l.b16 %v44
  %v426 = vunpack.c.h.b16 %v44
  %v427 = vunpack.c.l.b16 %v45
  %v428 = vunpack.c.h.b16 %v45
  %v429 = vpack.c.b16 %v423, %v421
  %v430 = vpack.c.b16 %v424, %v422
  %v431 = vpack.c.b16 %v427, %v425
  %v432 = vpack.c.b16 %v428, %v426
  %vm437 = vcmask 261120
  %v439 = vsel %vm437, %v397, 0
  %v442 = vsel %vm437, %v398, 0
  %v445 = vsel %vm437, %v399, 0
  %v448 = vsel %vm437, %v400, 0
  %v451 = vsel %vm437, %v401, 0
  %v454 = vsel %vm437, %v402, 0
  %v457 = vsel %vm437, %v403, 0
  %v460 = vsel %vm437, %v404, 0
  %v463 = vsel %vm437, %v405, 0
  %v466 = vsel %vm437, %v406, 0
  %v469 = vsel %vm437, %v407, 0
  %v472 = vsel %vm437, %v408, 0
  %v475 = vsel %vm437, %v409, 0
  %v478 = vsel %vm437, %v410, 0
  %v481 = vsel %vm437, %v411, 0
  %v484 = vsel %vm437, %v412, 0
  %v487 = vsel %vm437, %v413, 0
  %v490 = vsel %vm437, %v414, 0
  %v493 = vsel %vm437, %v415, 0
  %v496 = vsel %vm437, %v416, 0
  %498 = vmatpush.bf16.msra.mxu0 0
  %499 = vmatpush.bf16.msra.mxu0 0
  %500 = vmatpush.bf16.msra.mxu0 0
  %501 = vmatpush.bf16.msra.mxu0 0
  %502 = vmatpush.bf16.msra.mxu0 0
  %503 = vmatpush.bf16.msra.mxu0 0
  %504 = vmatpush.bf16.msra.mxu0 %v431
  %505 = vmatpush.bf16.msra.mxu0 %v429
  %506 = vmatmul.bf16.gmra.mxu0 %v439
  %v507 = vpop.f32.mrf.mxu0
  %v508 = vadd.f32 %v127, %v507
  %v509 = vpop.f32.mrf.mxu0
  %v510 = vadd.f32 %v132, %v509
  %511 = vmatmul.bf16.gmra.mxu0 %v442
  %v512 = vpop.f32.mrf.mxu0
  %v513 = vadd.f32 %v137, %v512
  %v514 = vpop.f32.mrf.mxu0
  %v515 = vadd.f32 %v142, %v514
  %516 = vmatmul.bf16.gmra.mxu0 %v445
  %v517 = vpop.f32.mrf.mxu0
  %v518 = vadd.f32 %v147, %v517
  %v519 = vpop.f32.mrf.mxu0
  %v520 = vadd.f32 %v152, %v519
  %521 = vmatmul.bf16.gmra.mxu0 %v448
  %v522 = vpop.f32.mrf.mxu0
  %v523 = vadd.f32 %v157, %v522
  %v524 = vpop.f32.mrf.mxu0
  %v525 = vadd.f32 %v162, %v524
  %526 = vmatmul.bf16.gmra.mxu0 %v451
  %v527 = vpop.f32.mrf.mxu0
  %v528 = vadd.f32 %v167, %v527
  %v529 = vpop.f32.mrf.mxu0
  %v530 = vadd.f32 %v172, %v529
  %531 = vmatmul.bf16.gmra.mxu0 %v454
  %v532 = vpop.f32.mrf.mxu0
  %v533 = vadd.f32 %v177, %v532
  %v534 = vpop.f32.mrf.mxu0
  %v535 = vadd.f32 %v182, %v534
  %536 = vmatmul.bf16.gmra.mxu0 %v457
  %v537 = vpop.f32.mrf.mxu0
  %v538 = vadd.f32 %v187, %v537
  %v539 = vpop.f32.mrf.mxu0
  %v540 = vadd.f32 %v192, %v539
  %541 = vmatmul.bf16.gmra.mxu0 %v460
  %v542 = vpop.f32.mrf.mxu0
  %v543 = vadd.f32 %v197, %v542
  %v544 = vpop.f32.mrf.mxu0
  %v545 = vadd.f32 %v202, %v544
  %546 = vmatmul.bf16.gmra.mxu0 %v463
  %v547 = vpop.f32.mrf.mxu0
  %v548 = vadd.f32 %v207, %v547
  %v549 = vpop.f32.mrf.mxu0
  %v550 = vadd.f32 %v212, %v549
  %551 = vmatmul.bf16.gmra.mxu0 %v466
  %v552 = vpop.f32.mrf.mxu0
  %v553 = vadd.f32 %v217, %v552
  %v554 = vpop.f32.mrf.mxu0
  %v555 = vadd.f32 %v222, %v554
  %556 = vmatmul.bf16.gmra.mxu0 %v469
  %v557 = vpop.f32.mrf.mxu0
  %v558 = vadd.f32 %v227, %v557
  %v559 = vpop.f32.mrf.mxu0
  %v560 = vadd.f32 %v232, %v559
  %561 = vmatmul.bf16.gmra.mxu0 %v472
  %v562 = vpop.f32.mrf.mxu0
  %v563 = vadd.f32 %v237, %v562
  %v564 = vpop.f32.mrf.mxu0
  %v565 = vadd.f32 %v242, %v564
  %566 = vmatmul.bf16.gmra.mxu0 %v475
  %v567 = vpop.f32.mrf.mxu0
  %v568 = vadd.f32 %v247, %v567
  %v569 = vpop.f32.mrf.mxu0
  %v570 = vadd.f32 %v252, %v569
  %571 = vmatmul.bf16.gmra.mxu0 %v478
  %v572 = vpop.f32.mrf.mxu0
  %v573 = vadd.f32 %v257, %v572
  %v574 = vpop.f32.mrf.mxu0
  %v575 = vadd.f32 %v262, %v574
  %576 = vmatmul.bf16.gmra.mxu0 %v481
  %v577 = vpop.f32.mrf.mxu0
  %v578 = vadd.f32 %v267, %v577
  %v579 = vpop.f32.mrf.mxu0
  %v580 = vadd.f32 %v272, %v579
  %581 = vmatmul.bf16.gmra.mxu0 %v484
  %v582 = vpop.f32.mrf.mxu0
  %v583 = vadd.f32 %v277, %v582
  %v584 = vpop.f32.mrf.mxu0
  %v585 = vadd.f32 %v282, %v584
  %586 = vmatmul.bf16.gmra.mxu0 %v487
  %v587 = vpop.f32.mrf.mxu0
  %v588 = vadd.f32 %v287, %v587
  %v589 = vpop.f32.mrf.mxu0
  %v590 = vadd.f32 %v292, %v589
  %591 = vmatmul.bf16.gmra.mxu0 %v490
  %v592 = vpop.f32.mrf.mxu0
  %v593 = vadd.f32 %v297, %v592
  %v594 = vpop.f32.mrf.mxu0
  %v595 = vadd.f32 %v302, %v594
  %596 = vmatmul.bf16.gmra.mxu0 %v493
  %v597 = vpop.f32.mrf.mxu0
  %v598 = vadd.f32 %v307, %v597
  %v599 = vpop.f32.mrf.mxu0
  %v600 = vadd.f32 %v312, %v599
  %601 = vmatmul.bf16.gmra.mxu0 %v496
  %v602 = vpop.f32.mrf.mxu0
  %v603 = vadd.f32 %v317, %v602
  %v604 = vpop.f32.mrf.mxu0
  %605 = vdwg.mxu0
  %606 = vmatpush.bf16.msra.mxu0 0
  %607 = vmatpush.bf16.msra.mxu0 0
  %608 = vmatpush.bf16.msra.mxu0 0
  %609 = vmatpush.bf16.msra.mxu0 0
  %610 = vmatpush.bf16.msra.mxu0 0
  %611 = vmatpush.bf16.msra.mxu0 0
  %612 = vmatpush.bf16.msra.mxu0 %v432
  %613 = vmatpush.bf16.msra.mxu0 %v430
  %614 = vmatmul.bf16.gmra.mxu0 %v439
  %v615 = vpop.f32.mrf.mxu0
  %v616 = vadd.f32 %v127, %v615
  %v617 = vpop.f32.mrf.mxu0
  %v618 = vadd.f32 %v132, %v617
  %619 = vmatmul.bf16.gmra.mxu0 %v442
  %v620 = vpop.f32.mrf.mxu0
  %v621 = vadd.f32 %v137, %v620
  %v622 = vpop.f32.mrf.mxu0
  %v623 = vadd.f32 %v142, %v622
  %624 = vmatmul.bf16.gmra.mxu0 %v445
  %v625 = vpop.f32.mrf.mxu0
  %v626 = vadd.f32 %v147, %v625
  %v627 = vpop.f32.mrf.mxu0
  %v628 = vadd.f32 %v152, %v627
  %629 = vmatmul.bf16.gmra.mxu0 %v448
  %v630 = vpop.f32.mrf.mxu0
  %v631 = vadd.f32 %v157, %v630
  %v632 = vpop.f32.mrf.mxu0
  %v633 = vadd.f32 %v162, %v632
  %634 = vmatmul.bf16.gmra.mxu0 %v451
  %v635 = vpop.f32.mrf.mxu0
  %v636 = vadd.f32 %v167, %v635
  %v637 = vpop.f32.mrf.mxu0
  %v638 = vadd.f32 %v172, %v637
  %639 = vmatmul.bf16.gmra.mxu0 %v454
  %v640 = vpop.f32.mrf.mxu0
  %v641 = vadd.f32 %v177, %v640
  %v642 = vpop.f32.mrf.mxu0
  %v643 = vadd.f32 %v182, %v642
  %644 = vmatmul.bf16.gmra.mxu0 %v457
  %v645 = vpop.f32.mrf.mxu0
  %v646 = vadd.f32 %v187, %v645
  %v647 = vpop.f32.mrf.mxu0
  %v648 = vadd.f32 %v192, %v647
  %649 = vmatmul.bf16.gmra.mxu0 %v460
  %v650 = vpop.f32.mrf.mxu0
  %v651 = vadd.f32 %v197, %v650
  %v652 = vpop.f32.mrf.mxu0
  %v653 = vadd.f32 %v202, %v652
  %654 = vmatmul.bf16.gmra.mxu0 %v463
  %v655 = vpop.f32.mrf.mxu0
  %v656 = vadd.f32 %v207, %v655
  %v657 = vpop.f32.mrf.mxu0
  %v658 = vadd.f32 %v212, %v657
  %659 = vmatmul.bf16.gmra.mxu0 %v466
  %v660 = vpop.f32.mrf.mxu0
  %v661 = vadd.f32 %v217, %v660
  %v662 = vpop.f32.mrf.mxu0
  %v663 = vadd.f32 %v222, %v662
  %664 = vmatmul.bf16.gmra.mxu0 %v469
  %v665 = vpop.f32.mrf.mxu0
  %v666 = vadd.f32 %v227, %v665
  %v667 = vpop.f32.mrf.mxu0
  %v668 = vadd.f32 %v232, %v667
  %669 = vmatmul.bf16.gmra.mxu0 %v472
  %v670 = vpop.f32.mrf.mxu0
  %v671 = vadd.f32 %v237, %v670
  %v672 = vpop.f32.mrf.mxu0
  %v673 = vadd.f32 %v242, %v672
  %674 = vmatmul.bf16.gmra.mxu0 %v475
  %v675 = vpop.f32.mrf.mxu0
  %v676 = vadd.f32 %v247, %v675
  %v677 = vpop.f32.mrf.mxu0
  %v678 = vadd.f32 %v252, %v677
  %679 = vmatmul.bf16.gmra.mxu0 %v478
  %v680 = vpop.f32.mrf.mxu0
  %v681 = vadd.f32 %v257, %v680
  %v682 = vpop.f32.mrf.mxu0
  %v683 = vadd.f32 %v262, %v682
  %684 = vmatmul.bf16.gmra.mxu0 %v481
  %v685 = vpop.f32.mrf.mxu0
  %v686 = vadd.f32 %v267, %v685
  %v687 = vpop.f32.mrf.mxu0
  %v688 = vadd.f32 %v272, %v687
  %689 = vmatmul.bf16.gmra.mxu0 %v484
  %v690 = vpop.f32.mrf.mxu0
  %v691 = vadd.f32 %v277, %v690
  %v692 = vpop.f32.mrf.mxu0
  %v693 = vadd.f32 %v282, %v692
  %694 = vmatmul.bf16.gmra.mxu0 %v487
  %v695 = vpop.f32.mrf.mxu0
  %v696 = vadd.f32 %v287, %v695
  %v697 = vpop.f32.mrf.mxu0
  %v698 = vadd.f32 %v292, %v697
  %699 = vmatmul.bf16.gmra.mxu0 %v490
  %v700 = vpop.f32.mrf.mxu0
  %v701 = vadd.f32 %v297, %v700
  %v702 = vpop.f32.mrf.mxu0
  %v703 = vadd.f32 %v302, %v702
  %704 = vmatmul.bf16.gmra.mxu0 %v493
  %v705 = vpop.f32.mrf.mxu0
  %v706 = vadd.f32 %v307, %v705
  %v707 = vpop.f32.mrf.mxu0
  %v708 = vadd.f32 %v312, %v707
  %709 = vmatmul.bf16.gmra.mxu0 %v496
  %v710 = vpop.f32.mrf.mxu0
  %v711 = vadd.f32 %v317, %v710
  %v712 = vpop.f32.mrf.mxu0
  %713 = vdwg.mxu0
  %v714 = vmax.f32 %v508, 0.0
  %v715 = vmax.f32 %v616, 0.0
  %v716 = vmax.f32 %v510, 0.0
  %v717 = vmax.f32 %v618, 0.0
  %v718 = vmax.f32 %v513, 0.0
  %v719 = vmax.f32 %v621, 0.0
  %v720 = vmax.f32 %v515, 0.0
  %v721 = vmax.f32 %v623, 0.0
  %v722 = vmax.f32 %v518, 0.0
  %v723 = vmax.f32 %v626, 0.0
  %v724 = vmax.f32 %v520, 0.0
  %v725 = vmax.f32 %v628, 0.0
  %v726 = vmax.f32 %v523, 0.0
  %v727 = vmax.f32 %v631, 0.0
  %v728 = vmax.f32 %v525, 0.0
  %v729 = vmax.f32 %v633, 0.0
  %v730 = vmax.f32 %v528, 0.0
  %v731 = vmax.f32 %v636, 0.0
  %v732 = vmax.f32 %v530, 0.0
  %v733 = vmax.f32 %v638, 0.0
  %v734 = vmax.f32 %v533, 0.0
  %v735 = vmax.f32 %v641, 0.0
  %v736 = vmax.f32 %v535, 0.0
  %v737 = vmax.f32 %v643, 0.0
  %v738 = vmax.f32 %v538, 0.0
  %v739 = vmax.f32 %v646, 0.0
  %v740 = vmax.f32 %v540, 0.0
  %v741 = vmax.f32 %v648, 0.0
  %v742 = vmax.f32 %v543, 0.0
  %v743 = vmax.f32 %v651, 0.0
  %v744 = vmax.f32 %v545, 0.0
  %v745 = vmax.f32 %v653, 0.0
  %v746 = vmax.f32 %v548, 0.0
  %v747 = vmax.f32 %v656, 0.0
  %v748 = vmax.f32 %v550, 0.0
  %v749 = vmax.f32 %v658, 0.0
  %v750 = vmax.f32 %v553, 0.0
  %v751 = vmax.f32 %v661, 0.0
  %v752 = vmax.f32 %v555, 0.0
  %v753 = vmax.f32 %v663, 0.0
  %v754 = vmax.f32 %v558, 0.0
  %v755 = vmax.f32 %v666, 0.0
  %v756 = vmax.f32 %v560, 0.0
  %v757 = vmax.f32 %v668, 0.0
  %v758 = vmax.f32 %v563, 0.0
  %v759 = vmax.f32 %v671, 0.0
  %v760 = vmax.f32 %v565, 0.0
  %v761 = vmax.f32 %v673, 0.0
  %v762 = vmax.f32 %v568, 0.0
  %v763 = vmax.f32 %v676, 0.0
  %v764 = vmax.f32 %v570, 0.0
  %v765 = vmax.f32 %v678, 0.0
  %v766 = vmax.f32 %v573, 0.0
  %v767 = vmax.f32 %v681, 0.0
  %v768 = vmax.f32 %v575, 0.0
  %v769 = vmax.f32 %v683, 0.0
  %v770 = vmax.f32 %v578, 0.0
  %v771 = vmax.f32 %v686, 0.0
  %v772 = vmax.f32 %v580, 0.0
  %v773 = vmax.f32 %v688, 0.0
  %v774 = vmax.f32 %v583, 0.0
  %v775 = vmax.f32 %v691, 0.0
  %v776 = vmax.f32 %v585, 0.0
  %v777 = vmax.f32 %v693, 0.0
  %v778 = vmax.f32 %v588, 0.0
  %v779 = vmax.f32 %v696, 0.0
  %v780 = vmax.f32 %v590, 0.0
  %v781 = vmax.f32 %v698, 0.0
  %v782 = vmax.f32 %v593, 0.0
  %v783 = vmax.f32 %v701, 0.0
  %v784 = vmax.f32 %v595, 0.0
  %v785 = vmax.f32 %v703, 0.0
  %v786 = vmax.f32 %v598, 0.0
  %v787 = vmax.f32 %v706, 0.0
  %v788 = vmax.f32 %v600, 0.0
  %v789 = vmax.f32 %v708, 0.0
  %v790 = vmax.f32 %v603, 0.0
  %v791 = vmax.f32 %v711, 0.0
  %v792 = vld [vmem:[%s3] sm:$0xff]
  %v793 = vld [vmem:[%s3 + $0x8] sm:$0xf]
  %v794 = vld [vmem:[%s3 + $0xc] sm:$0xff]
  %v795 = vld [vmem:[%s3 + $0x14] sm:$0xf]
  %v796 = vld [vmem:[%s3 + $0x18] sm:$0xff]
  %v797 = vld [vmem:[%s3 + $0x20] sm:$0xf]
  %v798 = vld [vmem:[%s3 + $0x24] sm:$0xff]
  %v799 = vld [vmem:[%s3 + $0x2c] sm:$0xf]
  %v800 = vld [vmem:[%s3 + $0x30] sm:$0xff]
  %v801 = vld [vmem:[%s3 + $0x38] sm:$0xf]
  %v802 = vld [vmem:[%s3 + $0x3c] sm:$0xff]
  %v803 = vld [vmem:[%s3 + $0x44] sm:$0xf]
  %v804 = vld [vmem:[%s3 + $0x48] sm:$0xff]
  %v805 = vld [vmem:[%s3 + $0x50] sm:$0xf]
  %v806 = vld [vmem:[%s3 + $0x54] sm:$0xff]
  %v807 = vld [vmem:[%s3 + $0x5c] sm:$0xf]
  %v808 = vld [vmem:[%s3 + $0x60] sm:$0xff]
  %v809 = vld [vmem:[%s3 + $0x68] sm:$0xf]
  %v810 = vld [vmem:[%s3 + $0x6c] sm:$0xff]
  %v811 = vld [vmem:[%s3 + $0x74] sm:$0xf]
  %v812 = vld [vmem:[%s3 + $0x78] sm:$0xff]
  %v813 = vld [vmem:[%s3 + $0x80] sm:$0xf]
  %v814 = vld [vmem:[%s3 + $0x84] sm:$0xff]
  %v815 = vld [vmem:[%s3 + $0x8c] sm:$0xf]
  %v816 = vld [vmem:[%s3 + $0x90] sm:$0xff]
  %v817 = vld [vmem:[%s3 + $0x98] sm:$0xf]
  %v818 = vld [vmem:[%s3 + $0x9c] sm:$0xff]
  %v819 = vld [vmem:[%s3 + $0xa4] sm:$0xf]
  %v820 = vld [vmem:[%s3 + $0xa8] sm:$0xff]
  %v821 = vld [vmem:[%s3 + $0xb0] sm:$0xf]
  %v822 = vld [vmem:[%s3 + $0xb4] sm:$0xff]
  %v823 = vld [vmem:[%s3 + $0xbc] sm:$0xf]
  %v824 = vld [vmem:[%s3 + $0xc0] sm:$0xff]
  %v825 = vld [vmem:[%s3 + $0xc8] sm:$0xf]
  %v826 = vld [vmem:[%s3 + $0xcc] sm:$0xff]
  %v827 = vld [vmem:[%s3 + $0xd4] sm:$0xf]
  %v828 = vld [vmem:[%s3 + $0xd8] sm:$0xff]
  %v829 = vld [vmem:[%s3 + $0xe0] sm:$0xf]
  %v830 = vld [vmem:[%s3 + $0xe4] sm:$0xff]
  %v831 = vld [vmem:[%s3 + $0xec] sm:$0xf]
  %v832 = vld [vmem:[%s3 + $0xf0] sm:$0xff]
  %v833 = vld [vmem:[%s3 + $0xf8] sm:$0xf]
  %v834 = vld [vmem:[%s3 + $0xfc] sm:$0xff]
  %v835 = vld [vmem:[%s3 + $0x104] sm:$0xf]
  %v836 = vld [vmem:[%s3 + $0x108] sm:$0xff]
  %v837 = vld [vmem:[%s3 + $0x110] sm:$0xf]
  %v838 = vld [vmem:[%s3 + $0x114] sm:$0xff]
  %v839 = vld [vmem:[%s3 + $0x11c] sm:$0xf]
  %v840 = vld [vmem:[%s3 + $0x120] sm:$0xff]
  %v841 = vld [vmem:[%s3 + $0x128] sm:$0xf]
  %v842 = vld [vmem:[%s3 + $0x12c] sm:$0xff]
  %v843 = vld [vmem:[%s3 + $0x134] sm:$0xf]
  %v844 = vld [vmem:[%s3 + $0x138] sm:$0xff]
  %v845 = vld [vmem:[%s3 + $0x140] sm:$0xf]
  %v846 = vld [vmem:[%s3 + $0x144] sm:$0xff]
  %v847 = vld [vmem:[%s3 + $0x14c] sm:$0xf]
  %v848 = vld [vmem:[%s3 + $0x150] sm:$0xff]
  %v849 = vld [vmem:[%s3 + $0x158] sm:$0xf]
  %v850 = vld [vmem:[%s3 + $0x15c] sm:$0xff]
  %v851 = vld [vmem:[%s3 + $0x164] sm:$0xf]
  %v852 = vld [vmem:[%s3 + $0x168] sm:$0xff]
  %v853 = vld [vmem:[%s3 + $0x170] sm:$0xf]
  %v854 = vld [vmem:[%s3 + $0x174] sm:$0xff]
  %v855 = vld [vmem:[%s3 + $0x17c] sm:$0xf]
  %v856 = vld [vmem:[%s3 + $0x180] sm:$0xff]
  %v857 = vld [vmem:[%s3 + $0x188] sm:$0xf]
  %v858 = vld [vmem:[%s3 + $0x18c] sm:$0xff]
  %v859 = vld [vmem:[%s3 + $0x194] sm:$0xf]
  %v860 = vld [vmem:[%s3 + $0x198] sm:$0xff]
  %v861 = vld [vmem:[%s3 + $0x1a0] sm:$0xf]
  %v862 = vld [vmem:[%s3 + $0x1a4] sm:$0xff]
  %v863 = vld [vmem:[%s3 + $0x1ac] sm:$0xf]
  %v864 = vld [vmem:[%s3 + $0x1b0] sm:$0xff]
  %v865 = vld [vmem:[%s3 + $0x1b8] sm:$0xf]
  %v866 = vld [vmem:[%s3 + $0x1bc] sm:$0xff]
  %v867 = vld [vmem:[%s3 + $0x1c4] sm:$0xf]
  %v868 = vld [vmem:[%s3 + $0x1c8] sm:$0xff]
  %v869 = vld [vmem:[%s3 + $0x1d0] sm:$0xf]
  %v870 = vpack.c.bf16 %v716, %v714
  %v871 = vpack.c.bf16 %v717, %v715
  %v872 = vpack.c.bf16 %v720, %v718
  %v873 = vpack.c.bf16 %v721, %v719
  %v874 = vpack.c.bf16 %v724, %v722
  %v875 = vpack.c.bf16 %v725, %v723
  %v876 = vpack.c.bf16 %v728, %v726
  %v877 = vpack.c.bf16 %v729, %v727
  %v878 = vpack.c.bf16 %v732, %v730
  %v879 = vpack.c.bf16 %v733, %v731
  %v880 = vpack.c.bf16 %v736, %v734
  %v881 = vpack.c.bf16 %v737, %v735
  %v882 = vpack.c.bf16 %v740, %v738
  %v883 = vpack.c.bf16 %v741, %v739
  %v884 = vpack.c.bf16 %v744, %v742
  %v885 = vpack.c.bf16 %v745, %v743
  %v886 = vpack.c.bf16 %v748, %v746
  %v887 = vpack.c.bf16 %v749, %v747
  %v888 = vpack.c.bf16 %v752, %v750
  %v889 = vpack.c.bf16 %v753, %v751
  %v890 = vpack.c.bf16 %v756, %v754
  %v891 = vpack.c.bf16 %v757, %v755
  %v892 = vpack.c.bf16 %v760, %v758
  %v893 = vpack.c.bf16 %v761, %v759
  %v894 = vpack.c.bf16 %v764, %v762
  %v895 = vpack.c.bf16 %v765, %v763
  %v896 = vpack.c.bf16 %v768, %v766
  %v897 = vpack.c.bf16 %v769, %v767
  %v898 = vpack.c.bf16 %v772, %v770
  %v899 = vpack.c.bf16 %v773, %v771
  %v900 = vpack.c.bf16 %v776, %v774
  %v901 = vpack.c.bf16 %v777, %v775
  %v902 = vpack.c.bf16 %v780, %v778
  %v903 = vpack.c.bf16 %v781, %v779
  %v904 = vpack.c.bf16 %v784, %v782
  %v905 = vpack.c.bf16 %v785, %v783
  %v906 = vpack.c.bf16 %v788, %v786
  %v907 = vpack.c.bf16 %v789, %v787
  %v908 = vpack.c.bf16 %v790, %v790
  %v909 = vpack.c.bf16 %v791, %v791
  %v910 = vld [vmem:[%s4] sm:$0xff]
  %v911 = vld [vmem:[%s4 + $0x8] sm:$0xff]
  %v912 = vld [vmem:[%s4 + $0x10] sm:$0xff]
  %v913 = vld [vmem:[%s4 + $0x18] sm:$0xff]
  %v914 = vld [vmem:[%s4 + $0x20] sm:$0xff]
  %v915 = vld [vmem:[%s4 + $0x28] sm:$0xff]
  %v916 = vld [vmem:[%s4 + $0x30] sm:$0xff]
  %v917 = vld [vmem:[%s4 + $0x38] sm:$0xff]
  %v918 = vld [vmem:[%s4 + $0x40] sm:$0xff]
  %v919 = vld [vmem:[%s4 + $0x48] sm:$0xff]
  %v920 = vld [vmem:[%s4 + $0x50] sm:$0xff]
  %v921 = vld [vmem:[%s4 + $0x58] sm:$0xff]
  %v922 = vld [vmem:[%s4 + $0x60] sm:$0xff]
  %v923 = vld [vmem:[%s4 + $0x68] sm:$0xff]
  %v924 = vld [vmem:[%s4 + $0x70] sm:$0xff]
  %v925 = vld [vmem:[%s4 + $0x78] sm:$0xff]
  %v926 = vld [vmem:[%s4 + $0x80] sm:$0xff]
  %v927 = vld [vmem:[%s4 + $0x88] sm:$0xff]
  %v928 = vld [vmem:[%s4 + $0x90] sm:$0xff]
  %v929 = vld [vmem:[%s4 + $0x98] sm:$0xff]
  %v930 = vld [vmem:[%s4 + $0xa0] sm:$0xff]
  %v931 = vld [vmem:[%s4 + $0xa8] sm:$0xff]
  %v932 = vld [vmem:[%s4 + $0xb0] sm:$0xff]
  %v933 = vld [vmem:[%s4 + $0xb8] sm:$0xff]
  %v934 = vld [vmem:[%s4 + $0xc0] sm:$0xff]
  %v935 = vld [vmem:[%s4 + $0xc8] sm:$0xff]
  %v936 = vld [vmem:[%s4 + $0xd0] sm:$0xff]
  %v937 = vld [vmem:[%s4 + $0xd8] sm:$0xff]
  %v938 = vld [vmem:[%s4 + $0xe0] sm:$0xff]
  %v939 = vld [vmem:[%s4 + $0xe8] sm:$0xff]
  %v940 = vld [vmem:[%s4 + $0xf0] sm:$0xff]
  %v941 = vld [vmem:[%s4 + $0xf8] sm:$0xff]
  %v942 = vld [vmem:[%s4 + $0x100] sm:$0xff]
  %v943 = vld [vmem:[%s4 + $0x108] sm:$0xff]
  %v944 = vld [vmem:[%s4 + $0x110] sm:$0xff]
  %v945 = vld [vmem:[%s4 + $0x118] sm:$0xff]
  %v946 = vld [vmem:[%s4 + $0x120] sm:$0xff]
  %v947 = vld [vmem:[%s4 + $0x128] sm:$0xff]
  %v948 = vld [vmem:[%s4 + $0x130] sm:$0xff]
  %950 = vset.pattern.permute.xlu0 0
  %951 = vperm.xlu0 %950, %v910
  %v952 = vpop.permute.xlu0 %951
  %955 = vset.pattern.permute.xlu0 0
  %956 = vperm.xlu0 %955, %v911
  %v957 = vpop.permute.xlu0 %956
  %960 = vset.pattern.permute.xlu0 0
  %961 = vperm.xlu0 %960, %v912
  %v962 = vpop.permute.xlu0 %961
  %965 = vset.pattern.permute.xlu0 0
  %966 = vperm.xlu0 %965, %v913
  %v967 = vpop.permute.xlu0 %966
  %970 = vset.pattern.permute.xlu0 0
  %971 = vperm.xlu0 %970, %v914
  %v972 = vpop.permute.xlu0 %971
  %975 = vset.pattern.permute.xlu0 0
  %976 = vperm.xlu0 %975, %v915
  %v977 = vpop.permute.xlu0 %976
  %980 = vset.pattern.permute.xlu0 0
  %981 = vperm.xlu0 %980, %v916
  %v982 = vpop.permute.xlu0 %981
  %985 = vset.pattern.permute.xlu0 0
  %986 = vperm.xlu0 %985, %v917
  %v987 = vpop.permute.xlu0 %986
  %990 = vset.pattern.permute.xlu0 0
  %991 = vperm.xlu0 %990, %v918
  %v992 = vpop.permute.xlu0 %991
  %995 = vset.pattern.permute.xlu0 0
  %996 = vperm.xlu0 %995, %v919
  %v997 = vpop.permute.xlu0 %996
  %1000 = vset.pattern.permute.xlu0 0
  %1001 = vperm.xlu0 %1000, %v920
  %v1002 = vpop.permute.xlu0 %1001
  %1005 = vset.pattern.permute.xlu0 0
  %1006 = vperm.xlu0 %1005, %v921
  %v1007 = vpop.permute.xlu0 %1006
  %1010 = vset.pattern.permute.xlu0 0
  %1011 = vperm.xlu0 %1010, %v922
  %v1012 = vpop.permute.xlu0 %1011
  %1015 = vset.pattern.permute.xlu0 0
  %1016 = vperm.xlu0 %1015, %v923
  %v1017 = vpop.permute.xlu0 %1016
  %1020 = vset.pattern.permute.xlu0 0
  %1021 = vperm.xlu0 %1020, %v924
  %v1022 = vpop.permute.xlu0 %1021
  %1025 = vset.pattern.permute.xlu0 0
  %1026 = vperm.xlu0 %1025, %v925
  %v1027 = vpop.permute.xlu0 %1026
  %1030 = vset.pattern.permute.xlu0 0
  %1031 = vperm.xlu0 %1030, %v926
  %v1032 = vpop.permute.xlu0 %1031
  %1035 = vset.pattern.permute.xlu0 0
  %1036 = vperm.xlu0 %1035, %v927
  %v1037 = vpop.permute.xlu0 %1036
  %1040 = vset.pattern.permute.xlu0 0
  %1041 = vperm.xlu0 %1040, %v928
  %v1042 = vpop.permute.xlu0 %1041
  %1045 = vset.pattern.permute.xlu0 0
  %1046 = vperm.xlu0 %1045, %v929
  %v1047 = vpop.permute.xlu0 %1046
  %1050 = vset.pattern.permute.xlu0 0
  %1051 = vperm.xlu0 %1050, %v930
  %v1052 = vpop.permute.xlu0 %1051
  %1055 = vset.pattern.permute.xlu0 0
  %1056 = vperm.xlu0 %1055, %v931
  %v1057 = vpop.permute.xlu0 %1056
  %1060 = vset.pattern.permute.xlu0 0
  %1061 = vperm.xlu0 %1060, %v932
  %v1062 = vpop.permute.xlu0 %1061
  %1065 = vset.pattern.permute.xlu0 0
  %1066 = vperm.xlu0 %1065, %v933
  %v1067 = vpop.permute.xlu0 %1066
  %1070 = vset.pattern.permute.xlu0 0
  %1071 = vperm.xlu0 %1070, %v934
  %v1072 = vpop.permute.xlu0 %1071
  %1075 = vset.pattern.permute.xlu0 0
  %1076 = vperm.xlu0 %1075, %v935
  %v1077 = vpop.permute.xlu0 %1076
  %1080 = vset.pattern.permute.xlu0 0
  %1081 = vperm.xlu0 %1080, %v936
  %v1082 = vpop.permute.xlu0 %1081
  %1085 = vset.pattern.permute.xlu0 0
  %1086 = vperm.xlu0 %1085, %v937
  %v1087 = vpop.permute.xlu0 %1086
  %1090 = vset.pattern.permute.xlu0 0
  %1091 = vperm.xlu0 %1090, %v938
  %v1092 = vpop.permute.xlu0 %1091
  %1095 = vset.pattern.permute.xlu0 0
  %1096 = vperm.xlu0 %1095, %v939
  %v1097 = vpop.permute.xlu0 %1096
  %1100 = vset.pattern.permute.xlu0 0
  %1101 = vperm.xlu0 %1100, %v940
  %v1102 = vpop.permute.xlu0 %1101
  %1105 = vset.pattern.permute.xlu0 0
  %1106 = vperm.xlu0 %1105, %v941
  %v1107 = vpop.permute.xlu0 %1106
  %1110 = vset.pattern.permute.xlu0 0
  %1111 = vperm.xlu0 %1110, %v942
  %v1112 = vpop.permute.xlu0 %1111
  %1115 = vset.pattern.permute.xlu0 0
  %1116 = vperm.xlu0 %1115, %v943
  %v1117 = vpop.permute.xlu0 %1116
  %1120 = vset.pattern.permute.xlu0 0
  %1121 = vperm.xlu0 %1120, %v944
  %v1122 = vpop.permute.xlu0 %1121
  %1125 = vset.pattern.permute.xlu0 0
  %1126 = vperm.xlu0 %1125, %v945
  %v1127 = vpop.permute.xlu0 %1126
  %1130 = vset.pattern.permute.xlu0 0
  %1131 = vperm.xlu0 %1130, %v946
  %v1132 = vpop.permute.xlu0 %1131
  %1135 = vset.pattern.permute.xlu0 0
  %1136 = vperm.xlu0 %1135, %v947
  %v1137 = vpop.permute.xlu0 %1136
  %1140 = vset.pattern.permute.xlu0 0
  %1141 = vperm.xlu0 %1140, %v948
  %v1142 = vpop.permute.xlu0 %1141
  %v1222 = vunpack.c.l.b16 %v792
  %v1223 = vunpack.c.h.b16 %v792
  %v1224 = vunpack.c.l.b16 %v793
  %v1225 = vunpack.c.l.b16 %v794
  %v1226 = vunpack.c.h.b16 %v794
  %v1227 = vunpack.c.l.b16 %v795
  %v1228 = vunpack.c.l.b16 %v796
  %v1229 = vunpack.c.h.b16 %v796
  %v1230 = vunpack.c.l.b16 %v797
  %v1231 = vunpack.c.l.b16 %v798
  %v1232 = vunpack.c.h.b16 %v798
  %v1233 = vunpack.c.l.b16 %v799
  %v1234 = vunpack.c.l.b16 %v800
  %v1235 = vunpack.c.h.b16 %v800
  %v1236 = vunpack.c.l.b16 %v801
  %v1237 = vunpack.c.l.b16 %v802
  %v1238 = vunpack.c.h.b16 %v802
  %v1239 = vunpack.c.l.b16 %v803
  %v1240 = vunpack.c.l.b16 %v804
  %v1241 = vunpack.c.h.b16 %v804
  %v1242 = vunpack.c.l.b16 %v805
  %v1243 = vunpack.c.l.b16 %v806
  %v1244 = vunpack.c.h.b16 %v806
  %v1245 = vunpack.c.l.b16 %v807
  %v1246 = vunpack.c.l.b16 %v808
  %v1247 = vunpack.c.h.b16 %v808
  %v1248 = vunpack.c.l.b16 %v809
  %v1249 = vunpack.c.l.b16 %v810
  %v1250 = vunpack.c.h.b16 %v810
  %v1251 = vunpack.c.l.b16 %v811
  %v1252 = vunpack.c.l.b16 %v812
  %v1253 = vunpack.c.h.b16 %v812
  %v1254 = vunpack.c.l.b16 %v813
  %v1255 = vunpack.c.l.b16 %v814
  %v1256 = vunpack.c.h.b16 %v814
  %v1257 = vunpack.c.l.b16 %v815
  %v1258 = vunpack.c.l.b16 %v816
  %v1259 = vunpack.c.h.b16 %v816
  %v1260 = vunpack.c.l.b16 %v817
  %v1261 = vunpack.c.l.b16 %v818
  %v1262 = vunpack.c.h.b16 %v818
  %v1263 = vunpack.c.l.b16 %v819
  %v1264 = vunpack.c.l.b16 %v820
  %v1265 = vunpack.c.h.b16 %v820
  %v1266 = vunpack.c.l.b16 %v821
  %v1267 = vunpack.c.l.b16 %v822
  %v1268 = vunpack.c.h.b16 %v822
  %v1269 = vunpack.c.l.b16 %v823
  %v1270 = vunpack.c.l.b16 %v824
  %v1271 = vunpack.c.h.b16 %v824
  %v1272 = vunpack.c.l.b16 %v825
  %v1273 = vunpack.c.l.b16 %v826
  %v1274 = vunpack.c.h.b16 %v826
  %v1275 = vunpack.c.l.b16 %v827
  %v1276 = vunpack.c.l.b16 %v828
  %v1277 = vunpack.c.h.b16 %v828
  %v1278 = vunpack.c.l.b16 %v829
  %v1279 = vunpack.c.l.b16 %v830
  %v1280 = vunpack.c.h.b16 %v830
  %v1281 = vunpack.c.l.b16 %v831
  %v1282 = vunpack.c.l.b16 %v832
  %v1283 = vunpack.c.h.b16 %v832
  %v1284 = vunpack.c.l.b16 %v833
  %v1285 = vunpack.c.l.b16 %v834
  %v1286 = vunpack.c.h.b16 %v834
  %v1287 = vunpack.c.l.b16 %v835
  %v1288 = vunpack.c.l.b16 %v836
  %v1289 = vunpack.c.h.b16 %v836
  %v1290 = vunpack.c.l.b16 %v837
  %v1291 = vunpack.c.l.b16 %v838
  %v1292 = vunpack.c.h.b16 %v838
  %v1293 = vunpack.c.l.b16 %v839
  %v1294 = vunpack.c.l.b16 %v840
  %v1295 = vunpack.c.h.b16 %v840
  %v1296 = vunpack.c.l.b16 %v841
  %v1297 = vunpack.c.l.b16 %v842
  %v1298 = vunpack.c.h.b16 %v842
  %v1299 = vunpack.c.l.b16 %v843
  %v1300 = vunpack.c.l.b16 %v844
  %v1301 = vunpack.c.h.b16 %v844
  %v1302 = vunpack.c.l.b16 %v845
  %v1303 = vunpack.c.l.b16 %v846
  %v1304 = vunpack.c.h.b16 %v846
  %v1305 = vunpack.c.l.b16 %v847
  %v1306 = vunpack.c.l.b16 %v848
  %v1307 = vunpack.c.h.b16 %v848
  %v1308 = vunpack.c.l.b16 %v849
  %v1309 = vunpack.c.l.b16 %v850
  %v1310 = vunpack.c.h.b16 %v850
  %v1311 = vunpack.c.l.b16 %v851
  %v1312 = vunpack.c.l.b16 %v852
  %v1313 = vunpack.c.h.b16 %v852
  %v1314 = vunpack.c.l.b16 %v853
  %v1315 = vunpack.c.l.b16 %v854
  %v1316 = vunpack.c.h.b16 %v854
  %v1317 = vunpack.c.l.b16 %v855
  %v1318 = vunpack.c.l.b16 %v856
  %v1319 = vunpack.c.h.b16 %v856
  %v1320 = vunpack.c.l.b16 %v857
  %v1321 = vunpack.c.l.b16 %v858
  %v1322 = vunpack.c.h.b16 %v858
  %v1323 = vunpack.c.l.b16 %v859
  %v1324 = vunpack.c.l.b16 %v860
  %v1325 = vunpack.c.h.b16 %v860
  %v1326 = vunpack.c.l.b16 %v861
  %v1327 = vunpack.c.l.b16 %v862
  %v1328 = vunpack.c.h.b16 %v862
  %v1329 = vunpack.c.l.b16 %v863
  %v1330 = vunpack.c.l.b16 %v864
  %v1331 = vunpack.c.h.b16 %v864
  %v1332 = vunpack.c.l.b16 %v865
  %v1333 = vunpack.c.l.b16 %v866
  %v1334 = vunpack.c.h.b16 %v866
  %v1335 = vunpack.c.l.b16 %v867
  %v1336 = vunpack.c.l.b16 %v868
  %v1337 = vunpack.c.h.b16 %v868
  %v1338 = vunpack.c.l.b16 %v869
  %v1339 = vpack.c.b16 %v1225, %v1222
  %v1340 = vpack.c.b16 %v1226, %v1223
  %v1341 = vpack.c.b16 %v1227, %v1224
  %v1342 = vpack.c.b16 %v1231, %v1228
  %v1343 = vpack.c.b16 %v1232, %v1229
  %v1344 = vpack.c.b16 %v1233, %v1230
  %v1345 = vpack.c.b16 %v1237, %v1234
  %v1346 = vpack.c.b16 %v1238, %v1235
  %v1347 = vpack.c.b16 %v1239, %v1236
  %v1348 = vpack.c.b16 %v1243, %v1240
  %v1349 = vpack.c.b16 %v1244, %v1241
  %v1350 = vpack.c.b16 %v1245, %v1242
  %v1351 = vpack.c.b16 %v1249, %v1246
  %v1352 = vpack.c.b16 %v1250, %v1247
  %v1353 = vpack.c.b16 %v1251, %v1248
  %v1354 = vpack.c.b16 %v1255, %v1252
  %v1355 = vpack.c.b16 %v1256, %v1253
  %v1356 = vpack.c.b16 %v1257, %v1254
  %v1357 = vpack.c.b16 %v1261, %v1258
  %v1358 = vpack.c.b16 %v1262, %v1259
  %v1359 = vpack.c.b16 %v1263, %v1260
  %v1360 = vpack.c.b16 %v1267, %v1264
  %v1361 = vpack.c.b16 %v1268, %v1265
  %v1362 = vpack.c.b16 %v1269, %v1266
  %v1363 = vpack.c.b16 %v1273, %v1270
  %v1364 = vpack.c.b16 %v1274, %v1271
  %v1365 = vpack.c.b16 %v1275, %v1272
  %v1366 = vpack.c.b16 %v1279, %v1276
  %v1367 = vpack.c.b16 %v1280, %v1277
  %v1368 = vpack.c.b16 %v1281, %v1278
  %v1369 = vpack.c.b16 %v1285, %v1282
  %v1370 = vpack.c.b16 %v1286, %v1283
  %v1371 = vpack.c.b16 %v1287, %v1284
  %v1372 = vpack.c.b16 %v1291, %v1288
  %v1373 = vpack.c.b16 %v1292, %v1289
  %v1374 = vpack.c.b16 %v1293, %v1290
  %v1375 = vpack.c.b16 %v1297, %v1294
  %v1376 = vpack.c.b16 %v1298, %v1295
  %v1377 = vpack.c.b16 %v1299, %v1296
  %v1378 = vpack.c.b16 %v1303, %v1300
  %v1379 = vpack.c.b16 %v1304, %v1301
  %v1380 = vpack.c.b16 %v1305, %v1302
  %v1381 = vpack.c.b16 %v1309, %v1306
  %v1382 = vpack.c.b16 %v1310, %v1307
  %v1383 = vpack.c.b16 %v1311, %v1308
  %v1384 = vpack.c.b16 %v1315, %v1312
  %v1385 = vpack.c.b16 %v1316, %v1313
  %v1386 = vpack.c.b16 %v1317, %v1314
  %v1387 = vpack.c.b16 %v1321, %v1318
  %v1388 = vpack.c.b16 %v1322, %v1319
  %v1389 = vpack.c.b16 %v1323, %v1320
  %v1390 = vpack.c.b16 %v1327, %v1324
  %v1391 = vpack.c.b16 %v1328, %v1325
  %v1392 = vpack.c.b16 %v1329, %v1326
  %v1393 = vpack.c.b16 %v1333, %v1330
  %v1394 = vpack.c.b16 %v1334, %v1331
  %v1395 = vpack.c.b16 %v1335, %v1332
  %v1396 = vpack.c.b16 %v1336, %v1336
  %v1397 = vpack.c.b16 %v1337, %v1337
  %v1398 = vpack.c.b16 %v1338, %v1338
  %vm1439 = vcmask 457728
  %v1441 = vsel %vm1439, %v1341, 0
  %v1444 = vsel %vm1439, %v1344, 0
  %v1447 = vsel %vm1439, %v1347, 0
  %v1450 = vsel %vm1439, %v1350, 0
  %v1453 = vsel %vm1439, %v1353, 0
  %v1456 = vsel %vm1439, %v1356, 0
  %v1459 = vsel %vm1439, %v1359, 0
  %v1462 = vsel %vm1439, %v1362, 0
  %v1465 = vsel %vm1439, %v1365, 0
  %v1468 = vsel %vm1439, %v1368, 0
  %v1471 = vsel %vm1439, %v1371, 0
  %v1474 = vsel %vm1439, %v1374, 0
  %v1477 = vsel %vm1439, %v1377, 0
  %v1480 = vsel %vm1439, %v1380, 0
  %v1483 = vsel %vm1439, %v1383, 0
  %v1486 = vsel %vm1439, %v1386, 0
  %v1489 = vsel %vm1439, %v1389, 0
  %v1492 = vsel %vm1439, %v1392, 0
  %v1495 = vsel %vm1439, %v1395, 0
  %v1498 = vsel %vm1439, %v1398, 0
  %vm1500 = vcmask 1043456
  %v1502 = vsel %vm1500, %v908, 0
  %v1505 = vsel %vm1500, %v909, 0
  %1507 = vmatpush.bf16.msra.mxu0 %v884
  %1508 = vmatpush.bf16.msra.mxu0 %v882
  %1509 = vmatpush.bf16.msra.mxu0 %v880
  %1510 = vmatpush.bf16.msra.mxu0 %v878
  %1511 = vmatpush.bf16.msra.mxu0 %v876
  %1512 = vmatpush.bf16.msra.mxu0 %v874
  %1513 = vmatpush.bf16.msra.mxu0 %v872
  %1514 = vmatpush.bf16.msra.mxu0 %v870
  %1515 = vmatmul.bf16.gmra.mxu0 %v1339
  %v1516 = vpop.f32.mrf.mxu0
  %v1517 = vadd.f32 %v952, %v1516
  %v1518 = vpop.f32.mrf.mxu0
  %v1519 = vadd.f32 %v957, %v1518
  %1520 = vmatmul.bf16.gmra.mxu0 %v1342
  %v1521 = vpop.f32.mrf.mxu0
  %v1522 = vadd.f32 %v962, %v1521
  %v1523 = vpop.f32.mrf.mxu0
  %v1524 = vadd.f32 %v967, %v1523
  %1525 = vmatmul.bf16.gmra.mxu0 %v1345
  %v1526 = vpop.f32.mrf.mxu0
  %v1527 = vadd.f32 %v972, %v1526
  %v1528 = vpop.f32.mrf.mxu0
  %v1529 = vadd.f32 %v977, %v1528
  %1530 = vmatmul.bf16.gmra.mxu0 %v1348
  %v1531 = vpop.f32.mrf.mxu0
  %v1532 = vadd.f32 %v982, %v1531
  %v1533 = vpop.f32.mrf.mxu0
  %v1534 = vadd.f32 %v987, %v1533
  %1535 = vmatmul.bf16.gmra.mxu0 %v1351
  %v1536 = vpop.f32.mrf.mxu0
  %v1537 = vadd.f32 %v992, %v1536
  %v1538 = vpop.f32.mrf.mxu0
  %v1539 = vadd.f32 %v997, %v1538
  %1540 = vmatmul.bf16.gmra.mxu0 %v1354
  %v1541 = vpop.f32.mrf.mxu0
  %v1542 = vadd.f32 %v1002, %v1541
  %v1543 = vpop.f32.mrf.mxu0
  %v1544 = vadd.f32 %v1007, %v1543
  %1545 = vmatmul.bf16.gmra.mxu0 %v1357
  %v1546 = vpop.f32.mrf.mxu0
  %v1547 = vadd.f32 %v1012, %v1546
  %v1548 = vpop.f32.mrf.mxu0
  %v1549 = vadd.f32 %v1017, %v1548
  %1550 = vmatmul.bf16.gmra.mxu0 %v1360
  %v1551 = vpop.f32.mrf.mxu0
  %v1552 = vadd.f32 %v1022, %v1551
  %v1553 = vpop.f32.mrf.mxu0
  %v1554 = vadd.f32 %v1027, %v1553
  %1555 = vmatmul.bf16.gmra.mxu0 %v1363
  %v1556 = vpop.f32.mrf.mxu0
  %v1557 = vadd.f32 %v1032, %v1556
  %v1558 = vpop.f32.mrf.mxu0
  %v1559 = vadd.f32 %v1037, %v1558
  %1560 = vmatmul.bf16.gmra.mxu0 %v1366
  %v1561 = vpop.f32.mrf.mxu0
  %v1562 = vadd.f32 %v1042, %v1561
  %v1563 = vpop.f32.mrf.mxu0
  %v1564 = vadd.f32 %v1047, %v1563
  %1565 = vmatmul.bf16.gmra.mxu0 %v1369
  %v1566 = vpop.f32.mrf.mxu0
  %v1567 = vadd.f32 %v1052, %v1566
  %v1568 = vpop.f32.mrf.mxu0
  %v1569 = vadd.f32 %v1057, %v1568
  %1570 = vmatmul.bf16.gmra.mxu0 %v1372
  %v1571 = vpop.f32.mrf.mxu0
  %v1572 = vadd.f32 %v1062, %v1571
  %v1573 = vpop.f32.mrf.mxu0
  %v1574 = vadd.f32 %v1067, %v1573
  %1575 = vmatmul.bf16.gmra.mxu0 %v1375
  %v1576 = vpop.f32.mrf.mxu0
  %v1577 = vadd.f32 %v1072, %v1576
  %v1578 = vpop.f32.mrf.mxu0
  %v1579 = vadd.f32 %v1077, %v1578
  %1580 = vmatmul.bf16.gmra.mxu0 %v1378
  %v1581 = vpop.f32.mrf.mxu0
  %v1582 = vadd.f32 %v1082, %v1581
  %v1583 = vpop.f32.mrf.mxu0
  %v1584 = vadd.f32 %v1087, %v1583
  %1585 = vmatmul.bf16.gmra.mxu0 %v1381
  %v1586 = vpop.f32.mrf.mxu0
  %v1587 = vadd.f32 %v1092, %v1586
  %v1588 = vpop.f32.mrf.mxu0
  %v1589 = vadd.f32 %v1097, %v1588
  %1590 = vmatmul.bf16.gmra.mxu0 %v1384
  %v1591 = vpop.f32.mrf.mxu0
  %v1592 = vadd.f32 %v1102, %v1591
  %v1593 = vpop.f32.mrf.mxu0
  %v1594 = vadd.f32 %v1107, %v1593
  %1595 = vmatmul.bf16.gmra.mxu0 %v1387
  %v1596 = vpop.f32.mrf.mxu0
  %v1597 = vadd.f32 %v1112, %v1596
  %v1598 = vpop.f32.mrf.mxu0
  %v1599 = vadd.f32 %v1117, %v1598
  %1600 = vmatmul.bf16.gmra.mxu0 %v1390
  %v1601 = vpop.f32.mrf.mxu0
  %v1602 = vadd.f32 %v1122, %v1601
  %v1603 = vpop.f32.mrf.mxu0
  %v1604 = vadd.f32 %v1127, %v1603
  %1605 = vmatmul.bf16.gmra.mxu0 %v1393
  %v1606 = vpop.f32.mrf.mxu0
  %v1607 = vadd.f32 %v1132, %v1606
  %v1608 = vpop.f32.mrf.mxu0
  %v1609 = vadd.f32 %v1137, %v1608
  %1610 = vmatmul.bf16.gmra.mxu0 %v1396
  %v1611 = vpop.f32.mrf.mxu0
  %v1612 = vadd.f32 %v1142, %v1611
  %v1613 = vpop.f32.mrf.mxu0
  %1614 = vdwg.mxu0
  %1615 = vmatpush.bf16.msra.mxu0 %v900
  %1616 = vmatpush.bf16.msra.mxu0 %v898
  %1617 = vmatpush.bf16.msra.mxu0 %v896
  %1618 = vmatpush.bf16.msra.mxu0 %v894
  %1619 = vmatpush.bf16.msra.mxu0 %v892
  %1620 = vmatpush.bf16.msra.mxu0 %v890
  %1621 = vmatpush.bf16.msra.mxu0 %v888
  %1622 = vmatpush.bf16.msra.mxu0 %v886
  %1623 = vmatmul.bf16.gmra.mxu0 %v1340
  %v1624 = vpop.f32.mrf.mxu0
  %v1625 = vadd.f32 %v1517, %v1624
  %v1626 = vpop.f32.mrf.mxu0
  %v1627 = vadd.f32 %v1519, %v1626
  %1628 = vmatmul.bf16.gmra.mxu0 %v1343
  %v1629 = vpop.f32.mrf.mxu0
  %v1630 = vadd.f32 %v1522, %v1629
  %v1631 = vpop.f32.mrf.mxu0
  %v1632 = vadd.f32 %v1524, %v1631
  %1633 = vmatmul.bf16.gmra.mxu0 %v1346
  %v1634 = vpop.f32.mrf.mxu0
  %v1635 = vadd.f32 %v1527, %v1634
  %v1636 = vpop.f32.mrf.mxu0
  %v1637 = vadd.f32 %v1529, %v1636
  %1638 = vmatmul.bf16.gmra.mxu0 %v1349
  %v1639 = vpop.f32.mrf.mxu0
  %v1640 = vadd.f32 %v1532, %v1639
  %v1641 = vpop.f32.mrf.mxu0
  %v1642 = vadd.f32 %v1534, %v1641
  %1643 = vmatmul.bf16.gmra.mxu0 %v1352
  %v1644 = vpop.f32.mrf.mxu0
  %v1645 = vadd.f32 %v1537, %v1644
  %v1646 = vpop.f32.mrf.mxu0
  %v1647 = vadd.f32 %v1539, %v1646
  %1648 = vmatmul.bf16.gmra.mxu0 %v1355
  %v1649 = vpop.f32.mrf.mxu0
  %v1650 = vadd.f32 %v1542, %v1649
  %v1651 = vpop.f32.mrf.mxu0
  %v1652 = vadd.f32 %v1544, %v1651
  %1653 = vmatmul.bf16.gmra.mxu0 %v1358
  %v1654 = vpop.f32.mrf.mxu0
  %v1655 = vadd.f32 %v1547, %v1654
  %v1656 = vpop.f32.mrf.mxu0
  %v1657 = vadd.f32 %v1549, %v1656
  %1658 = vmatmul.bf16.gmra.mxu0 %v1361
  %v1659 = vpop.f32.mrf.mxu0
  %v1660 = vadd.f32 %v1552, %v1659
  %v1661 = vpop.f32.mrf.mxu0
  %v1662 = vadd.f32 %v1554, %v1661
  %1663 = vmatmul.bf16.gmra.mxu0 %v1364
  %v1664 = vpop.f32.mrf.mxu0
  %v1665 = vadd.f32 %v1557, %v1664
  %v1666 = vpop.f32.mrf.mxu0
  %v1667 = vadd.f32 %v1559, %v1666
  %1668 = vmatmul.bf16.gmra.mxu0 %v1367
  %v1669 = vpop.f32.mrf.mxu0
  %v1670 = vadd.f32 %v1562, %v1669
  %v1671 = vpop.f32.mrf.mxu0
  %v1672 = vadd.f32 %v1564, %v1671
  %1673 = vmatmul.bf16.gmra.mxu0 %v1370
  %v1674 = vpop.f32.mrf.mxu0
  %v1675 = vadd.f32 %v1567, %v1674
  %v1676 = vpop.f32.mrf.mxu0
  %v1677 = vadd.f32 %v1569, %v1676
  %1678 = vmatmul.bf16.gmra.mxu0 %v1373
  %v1679 = vpop.f32.mrf.mxu0
  %v1680 = vadd.f32 %v1572, %v1679
  %v1681 = vpop.f32.mrf.mxu0
  %v1682 = vadd.f32 %v1574, %v1681
  %1683 = vmatmul.bf16.gmra.mxu0 %v1376
  %v1684 = vpop.f32.mrf.mxu0
  %v1685 = vadd.f32 %v1577, %v1684
  %v1686 = vpop.f32.mrf.mxu0
  %v1687 = vadd.f32 %v1579, %v1686
  %1688 = vmatmul.bf16.gmra.mxu0 %v1379
  %v1689 = vpop.f32.mrf.mxu0
  %v1690 = vadd.f32 %v1582, %v1689
  %v1691 = vpop.f32.mrf.mxu0
  %v1692 = vadd.f32 %v1584, %v1691
  %1693 = vmatmul.bf16.gmra.mxu0 %v1382
  %v1694 = vpop.f32.mrf.mxu0
  %v1695 = vadd.f32 %v1587, %v1694
  %v1696 = vpop.f32.mrf.mxu0
  %v1697 = vadd.f32 %v1589, %v1696
  %1698 = vmatmul.bf16.gmra.mxu0 %v1385
  %v1699 = vpop.f32.mrf.mxu0
  %v1700 = vadd.f32 %v1592, %v1699
  %v1701 = vpop.f32.mrf.mxu0
  %v1702 = vadd.f32 %v1594, %v1701
  %1703 = vmatmul.bf16.gmra.mxu0 %v1388
  %v1704 = vpop.f32.mrf.mxu0
  %v1705 = vadd.f32 %v1597, %v1704
  %v1706 = vpop.f32.mrf.mxu0
  %v1707 = vadd.f32 %v1599, %v1706
  %1708 = vmatmul.bf16.gmra.mxu0 %v1391
  %v1709 = vpop.f32.mrf.mxu0
  %v1710 = vadd.f32 %v1602, %v1709
  %v1711 = vpop.f32.mrf.mxu0
  %v1712 = vadd.f32 %v1604, %v1711
  %1713 = vmatmul.bf16.gmra.mxu0 %v1394
  %v1714 = vpop.f32.mrf.mxu0
  %v1715 = vadd.f32 %v1607, %v1714
  %v1716 = vpop.f32.mrf.mxu0
  %v1717 = vadd.f32 %v1609, %v1716
  %1718 = vmatmul.bf16.gmra.mxu0 %v1397
  %v1719 = vpop.f32.mrf.mxu0
  %v1720 = vadd.f32 %v1612, %v1719
  %v1721 = vpop.f32.mrf.mxu0
  %1722 = vdwg.mxu0
  %1723 = vmatpush.bf16.msra.mxu0 0
  %1724 = vmatpush.bf16.msra.mxu0 0
  %1725 = vmatpush.bf16.msra.mxu0 0
  %1726 = vmatpush.bf16.msra.mxu0 0
  %1727 = vmatpush.bf16.msra.mxu0 %v1502
  %1728 = vmatpush.bf16.msra.mxu0 %v906
  %1729 = vmatpush.bf16.msra.mxu0 %v904
  %1730 = vmatpush.bf16.msra.mxu0 %v902
  %1731 = vmatmul.bf16.gmra.mxu0 %v1441
  %v1732 = vpop.f32.mrf.mxu0
  %v1733 = vadd.f32 %v1625, %v1732
  %v1734 = vpop.f32.mrf.mxu0
  %v1735 = vadd.f32 %v1627, %v1734
  %1736 = vmatmul.bf16.gmra.mxu0 %v1444
  %v1737 = vpop.f32.mrf.mxu0
  %v1738 = vadd.f32 %v1630, %v1737
  %v1739 = vpop.f32.mrf.mxu0
  %v1740 = vadd.f32 %v1632, %v1739
  %1741 = vmatmul.bf16.gmra.mxu0 %v1447
  %v1742 = vpop.f32.mrf.mxu0
  %v1743 = vadd.f32 %v1635, %v1742
  %v1744 = vpop.f32.mrf.mxu0
  %v1745 = vadd.f32 %v1637, %v1744
  %1746 = vmatmul.bf16.gmra.mxu0 %v1450
  %v1747 = vpop.f32.mrf.mxu0
  %v1748 = vadd.f32 %v1640, %v1747
  %v1749 = vpop.f32.mrf.mxu0
  %v1750 = vadd.f32 %v1642, %v1749
  %1751 = vmatmul.bf16.gmra.mxu0 %v1453
  %v1752 = vpop.f32.mrf.mxu0
  %v1753 = vadd.f32 %v1645, %v1752
  %v1754 = vpop.f32.mrf.mxu0
  %v1755 = vadd.f32 %v1647, %v1754
  %1756 = vmatmul.bf16.gmra.mxu0 %v1456
  %v1757 = vpop.f32.mrf.mxu0
  %v1758 = vadd.f32 %v1650, %v1757
  %v1759 = vpop.f32.mrf.mxu0
  %v1760 = vadd.f32 %v1652, %v1759
  %1761 = vmatmul.bf16.gmra.mxu0 %v1459
  %v1762 = vpop.f32.mrf.mxu0
  %v1763 = vadd.f32 %v1655, %v1762
  %v1764 = vpop.f32.mrf.mxu0
  %v1765 = vadd.f32 %v1657, %v1764
  %1766 = vmatmul.bf16.gmra.mxu0 %v1462
  %v1767 = vpop.f32.mrf.mxu0
  %v1768 = vadd.f32 %v1660, %v1767
  %v1769 = vpop.f32.mrf.mxu0
  %v1770 = vadd.f32 %v1662, %v1769
  %1771 = vmatmul.bf16.gmra.mxu0 %v1465
  %v1772 = vpop.f32.mrf.mxu0
  %v1773 = vadd.f32 %v1665, %v1772
  %v1774 = vpop.f32.mrf.mxu0
  %v1775 = vadd.f32 %v1667, %v1774
  %1776 = vmatmul.bf16.gmra.mxu0 %v1468
  %v1777 = vpop.f32.mrf.mxu0
  %v1778 = vadd.f32 %v1670, %v1777
  %v1779 = vpop.f32.mrf.mxu0
  %v1780 = vadd.f32 %v1672, %v1779
  %1781 = vmatmul.bf16.gmra.mxu0 %v1471
  %v1782 = vpop.f32.mrf.mxu0
  %v1783 = vadd.f32 %v1675, %v1782
  %v1784 = vpop.f32.mrf.mxu0
  %v1785 = vadd.f32 %v1677, %v1784
  %1786 = vmatmul.bf16.gmra.mxu0 %v1474
  %v1787 = vpop.f32.mrf.mxu0
  %v1788 = vadd.f32 %v1680, %v1787
  %v1789 = vpop.f32.mrf.mxu0
  %v1790 = vadd.f32 %v1682, %v1789
  %1791 = vmatmul.bf16.gmra.mxu0 %v1477
  %v1792 = vpop.f32.mrf.mxu0
  %v1793 = vadd.f32 %v1685, %v1792
  %v1794 = vpop.f32.mrf.mxu0
  %v1795 = vadd.f32 %v1687, %v1794
  %1796 = vmatmul.bf16.gmra.mxu0 %v1480
  %v1797 = vpop.f32.mrf.mxu0
  %v1798 = vadd.f32 %v1690, %v1797
  %v1799 = vpop.f32.mrf.mxu0
  %v1800 = vadd.f32 %v1692, %v1799
  %1801 = vmatmul.bf16.gmra.mxu0 %v1483
  %v1802 = vpop.f32.mrf.mxu0
  %v1803 = vadd.f32 %v1695, %v1802
  %v1804 = vpop.f32.mrf.mxu0
  %v1805 = vadd.f32 %v1697, %v1804
  %1806 = vmatmul.bf16.gmra.mxu0 %v1486
  %v1807 = vpop.f32.mrf.mxu0
  %v1808 = vadd.f32 %v1700, %v1807
  %v1809 = vpop.f32.mrf.mxu0
  %v1810 = vadd.f32 %v1702, %v1809
  %1811 = vmatmul.bf16.gmra.mxu0 %v1489
  %v1812 = vpop.f32.mrf.mxu0
  %v1813 = vadd.f32 %v1705, %v1812
  %v1814 = vpop.f32.mrf.mxu0
  %v1815 = vadd.f32 %v1707, %v1814
  %1816 = vmatmul.bf16.gmra.mxu0 %v1492
  %v1817 = vpop.f32.mrf.mxu0
  %v1818 = vadd.f32 %v1710, %v1817
  %v1819 = vpop.f32.mrf.mxu0
  %v1820 = vadd.f32 %v1712, %v1819
  %1821 = vmatmul.bf16.gmra.mxu0 %v1495
  %v1822 = vpop.f32.mrf.mxu0
  %v1823 = vadd.f32 %v1715, %v1822
  %v1824 = vpop.f32.mrf.mxu0
  %v1825 = vadd.f32 %v1717, %v1824
  %1826 = vmatmul.bf16.gmra.mxu0 %v1498
  %v1827 = vpop.f32.mrf.mxu0
  %v1828 = vadd.f32 %v1720, %v1827
  %v1829 = vpop.f32.mrf.mxu0
  %1830 = vdwg.mxu0
  %1831 = vmatpush.bf16.msra.mxu0 %v885
  %1832 = vmatpush.bf16.msra.mxu0 %v883
  %1833 = vmatpush.bf16.msra.mxu0 %v881
  %1834 = vmatpush.bf16.msra.mxu0 %v879
  %1835 = vmatpush.bf16.msra.mxu0 %v877
  %1836 = vmatpush.bf16.msra.mxu0 %v875
  %1837 = vmatpush.bf16.msra.mxu0 %v873
  %1838 = vmatpush.bf16.msra.mxu0 %v871
  %1839 = vmatmul.bf16.gmra.mxu0 %v1339
  %v1840 = vpop.f32.mrf.mxu0
  %v1841 = vadd.f32 %v952, %v1840
  %v1842 = vpop.f32.mrf.mxu0
  %v1843 = vadd.f32 %v957, %v1842
  %1844 = vmatmul.bf16.gmra.mxu0 %v1342
  %v1845 = vpop.f32.mrf.mxu0
  %v1846 = vadd.f32 %v962, %v1845
  %v1847 = vpop.f32.mrf.mxu0
  %v1848 = vadd.f32 %v967, %v1847
  %1849 = vmatmul.bf16.gmra.mxu0 %v1345
  %v1850 = vpop.f32.mrf.mxu0
  %v1851 = vadd.f32 %v972, %v1850
  %v1852 = vpop.f32.mrf.mxu0
  %v1853 = vadd.f32 %v977, %v1852
  %1854 = vmatmul.bf16.gmra.mxu0 %v1348
  %v1855 = vpop.f32.mrf.mxu0
  %v1856 = vadd.f32 %v982, %v1855
  %v1857 = vpop.f32.mrf.mxu0
  %v1858 = vadd.f32 %v987, %v1857
  %1859 = vmatmul.bf16.gmra.mxu0 %v1351
  %v1860 = vpop.f32.mrf.mxu0
  %v1861 = vadd.f32 %v992, %v1860
  %v1862 = vpop.f32.mrf.mxu0
  %v1863 = vadd.f32 %v997, %v1862
  %1864 = vmatmul.bf16.gmra.mxu0 %v1354
  %v1865 = vpop.f32.mrf.mxu0
  %v1866 = vadd.f32 %v1002, %v1865
  %v1867 = vpop.f32.mrf.mxu0
  %v1868 = vadd.f32 %v1007, %v1867
  %1869 = vmatmul.bf16.gmra.mxu0 %v1357
  %v1870 = vpop.f32.mrf.mxu0
  %v1871 = vadd.f32 %v1012, %v1870
  %v1872 = vpop.f32.mrf.mxu0
  %v1873 = vadd.f32 %v1017, %v1872
  %1874 = vmatmul.bf16.gmra.mxu0 %v1360
  %v1875 = vpop.f32.mrf.mxu0
  %v1876 = vadd.f32 %v1022, %v1875
  %v1877 = vpop.f32.mrf.mxu0
  %v1878 = vadd.f32 %v1027, %v1877
  %1879 = vmatmul.bf16.gmra.mxu0 %v1363
  %v1880 = vpop.f32.mrf.mxu0
  %v1881 = vadd.f32 %v1032, %v1880
  %v1882 = vpop.f32.mrf.mxu0
  %v1883 = vadd.f32 %v1037, %v1882
  %1884 = vmatmul.bf16.gmra.mxu0 %v1366
  %v1885 = vpop.f32.mrf.mxu0
  %v1886 = vadd.f32 %v1042, %v1885
  %v1887 = vpop.f32.mrf.mxu0
  %v1888 = vadd.f32 %v1047, %v1887
  %1889 = vmatmul.bf16.gmra.mxu0 %v1369
  %v1890 = vpop.f32.mrf.mxu0
  %v1891 = vadd.f32 %v1052, %v1890
  %v1892 = vpop.f32.mrf.mxu0
  %v1893 = vadd.f32 %v1057, %v1892
  %1894 = vmatmul.bf16.gmra.mxu0 %v1372
  %v1895 = vpop.f32.mrf.mxu0
  %v1896 = vadd.f32 %v1062, %v1895
  %v1897 = vpop.f32.mrf.mxu0
  %v1898 = vadd.f32 %v1067, %v1897
  %1899 = vmatmul.bf16.gmra.mxu0 %v1375
  %v1900 = vpop.f32.mrf.mxu0
  %v1901 = vadd.f32 %v1072, %v1900
  %v1902 = vpop.f32.mrf.mxu0
  %v1903 = vadd.f32 %v1077, %v1902
  %1904 = vmatmul.bf16.gmra.mxu0 %v1378
  %v1905 = vpop.f32.mrf.mxu0
  %v1906 = vadd.f32 %v1082, %v1905
  %v1907 = vpop.f32.mrf.mxu0
  %v1908 = vadd.f32 %v1087, %v1907
  %1909 = vmatmul.bf16.gmra.mxu0 %v1381
  %v1910 = vpop.f32.mrf.mxu0
  %v1911 = vadd.f32 %v1092, %v1910
  %v1912 = vpop.f32.mrf.mxu0
  %v1913 = vadd.f32 %v1097, %v1912
  %1914 = vmatmul.bf16.gmra.mxu0 %v1384
  %v1915 = vpop.f32.mrf.mxu0
  %v1916 = vadd.f32 %v1102, %v1915
  %v1917 = vpop.f32.mrf.mxu0
  %v1918 = vadd.f32 %v1107, %v1917
  %1919 = vmatmul.bf16.gmra.mxu0 %v1387
  %v1920 = vpop.f32.mrf.mxu0
  %v1921 = vadd.f32 %v1112, %v1920
  %v1922 = vpop.f32.mrf.mxu0
  %v1923 = vadd.f32 %v1117, %v1922
  %1924 = vmatmul.bf16.gmra.mxu0 %v1390
  %v1925 = vpop.f32.mrf.mxu0
  %v1926 = vadd.f32 %v1122, %v1925
  %v1927 = vpop.f32.mrf.mxu0
  %v1928 = vadd.f32 %v1127, %v1927
  %1929 = vmatmul.bf16.gmra.mxu0 %v1393
  %v1930 = vpop.f32.mrf.mxu0
  %v1931 = vadd.f32 %v1132, %v1930
  %v1932 = vpop.f32.mrf.mxu0
  %v1933 = vadd.f32 %v1137, %v1932
  %1934 = vmatmul.bf16.gmra.mxu0 %v1396
  %v1935 = vpop.f32.mrf.mxu0
  %v1936 = vadd.f32 %v1142, %v1935
  %v1937 = vpop.f32.mrf.mxu0
  %1938 = vdwg.mxu0
  %1939 = vmatpush.bf16.msra.mxu0 %v901
  %1940 = vmatpush.bf16.msra.mxu0 %v899
  %1941 = vmatpush.bf16.msra.mxu0 %v897
  %1942 = vmatpush.bf16.msra.mxu0 %v895
  %1943 = vmatpush.bf16.msra.mxu0 %v893
  %1944 = vmatpush.bf16.msra.mxu0 %v891
  %1945 = vmatpush.bf16.msra.mxu0 %v889
  %1946 = vmatpush.bf16.msra.mxu0 %v887
  %1947 = vmatmul.bf16.gmra.mxu0 %v1340
  %v1948 = vpop.f32.mrf.mxu0
  %v1949 = vadd.f32 %v1841, %v1948
  %v1950 = vpop.f32.mrf.mxu0
  %v1951 = vadd.f32 %v1843, %v1950
  %1952 = vmatmul.bf16.gmra.mxu0 %v1343
  %v1953 = vpop.f32.mrf.mxu0
  %v1954 = vadd.f32 %v1846, %v1953
  %v1955 = vpop.f32.mrf.mxu0
  %v1956 = vadd.f32 %v1848, %v1955
  %1957 = vmatmul.bf16.gmra.mxu0 %v1346
  %v1958 = vpop.f32.mrf.mxu0
  %v1959 = vadd.f32 %v1851, %v1958
  %v1960 = vpop.f32.mrf.mxu0
  %v1961 = vadd.f32 %v1853, %v1960
  %1962 = vmatmul.bf16.gmra.mxu0 %v1349
  %v1963 = vpop.f32.mrf.mxu0
  %v1964 = vadd.f32 %v1856, %v1963
  %v1965 = vpop.f32.mrf.mxu0
  %v1966 = vadd.f32 %v1858, %v1965
  %1967 = vmatmul.bf16.gmra.mxu0 %v1352
  %v1968 = vpop.f32.mrf.mxu0
  %v1969 = vadd.f32 %v1861, %v1968
  %v1970 = vpop.f32.mrf.mxu0
  %v1971 = vadd.f32 %v1863, %v1970
  %1972 = vmatmul.bf16.gmra.mxu0 %v1355
  %v1973 = vpop.f32.mrf.mxu0
  %v1974 = vadd.f32 %v1866, %v1973
  %v1975 = vpop.f32.mrf.mxu0
  %v1976 = vadd.f32 %v1868, %v1975
  %1977 = vmatmul.bf16.gmra.mxu0 %v1358
  %v1978 = vpop.f32.mrf.mxu0
  %v1979 = vadd.f32 %v1871, %v1978
  %v1980 = vpop.f32.mrf.mxu0
  %v1981 = vadd.f32 %v1873, %v1980
  %1982 = vmatmul.bf16.gmra.mxu0 %v1361
  %v1983 = vpop.f32.mrf.mxu0
  %v1984 = vadd.f32 %v1876, %v1983
  %v1985 = vpop.f32.mrf.mxu0
  %v1986 = vadd.f32 %v1878, %v1985
  %1987 = vmatmul.bf16.gmra.mxu0 %v1364
  %v1988 = vpop.f32.mrf.mxu0
  %v1989 = vadd.f32 %v1881, %v1988
  %v1990 = vpop.f32.mrf.mxu0
  %v1991 = vadd.f32 %v1883, %v1990
  %1992 = vmatmul.bf16.gmra.mxu0 %v1367
  %v1993 = vpop.f32.mrf.mxu0
  %v1994 = vadd.f32 %v1886, %v1993
  %v1995 = vpop.f32.mrf.mxu0
  %v1996 = vadd.f32 %v1888, %v1995
  %1997 = vmatmul.bf16.gmra.mxu0 %v1370
  %v1998 = vpop.f32.mrf.mxu0
  %v1999 = vadd.f32 %v1891, %v1998
  %v2000 = vpop.f32.mrf.mxu0
  %v2001 = vadd.f32 %v1893, %v2000
  %2002 = vmatmul.bf16.gmra.mxu0 %v1373
  %v2003 = vpop.f32.mrf.mxu0
  %v2004 = vadd.f32 %v1896, %v2003
  %v2005 = vpop.f32.mrf.mxu0
  %v2006 = vadd.f32 %v1898, %v2005
  %2007 = vmatmul.bf16.gmra.mxu0 %v1376
  %v2008 = vpop.f32.mrf.mxu0
  %v2009 = vadd.f32 %v1901, %v2008
  %v2010 = vpop.f32.mrf.mxu0
  %v2011 = vadd.f32 %v1903, %v2010
  %2012 = vmatmul.bf16.gmra.mxu0 %v1379
  %v2013 = vpop.f32.mrf.mxu0
  %v2014 = vadd.f32 %v1906, %v2013
  %v2015 = vpop.f32.mrf.mxu0
  %v2016 = vadd.f32 %v1908, %v2015
  %2017 = vmatmul.bf16.gmra.mxu0 %v1382
  %v2018 = vpop.f32.mrf.mxu0
  %v2019 = vadd.f32 %v1911, %v2018
  %v2020 = vpop.f32.mrf.mxu0
  %v2021 = vadd.f32 %v1913, %v2020
  %2022 = vmatmul.bf16.gmra.mxu0 %v1385
  %v2023 = vpop.f32.mrf.mxu0
  %v2024 = vadd.f32 %v1916, %v2023
  %v2025 = vpop.f32.mrf.mxu0
  %v2026 = vadd.f32 %v1918, %v2025
  %2027 = vmatmul.bf16.gmra.mxu0 %v1388
  %v2028 = vpop.f32.mrf.mxu0
  %v2029 = vadd.f32 %v1921, %v2028
  %v2030 = vpop.f32.mrf.mxu0
  %v2031 = vadd.f32 %v1923, %v2030
  %2032 = vmatmul.bf16.gmra.mxu0 %v1391
  %v2033 = vpop.f32.mrf.mxu0
  %v2034 = vadd.f32 %v1926, %v2033
  %v2035 = vpop.f32.mrf.mxu0
  %v2036 = vadd.f32 %v1928, %v2035
  %2037 = vmatmul.bf16.gmra.mxu0 %v1394
  %v2038 = vpop.f32.mrf.mxu0
  %v2039 = vadd.f32 %v1931, %v2038
  %v2040 = vpop.f32.mrf.mxu0
  %v2041 = vadd.f32 %v1933, %v2040
  %2042 = vmatmul.bf16.gmra.mxu0 %v1397
  %v2043 = vpop.f32.mrf.mxu0
  %v2044 = vadd.f32 %v1936, %v2043
  %v2045 = vpop.f32.mrf.mxu0
  %2046 = vdwg.mxu0
  %2047 = vmatpush.bf16.msra.mxu0 0
  %2048 = vmatpush.bf16.msra.mxu0 0
  %2049 = vmatpush.bf16.msra.mxu0 0
  %2050 = vmatpush.bf16.msra.mxu0 0
  %2051 = vmatpush.bf16.msra.mxu0 %v1505
  %2052 = vmatpush.bf16.msra.mxu0 %v907
  %2053 = vmatpush.bf16.msra.mxu0 %v905
  %2054 = vmatpush.bf16.msra.mxu0 %v903
  %2055 = vmatmul.bf16.gmra.mxu0 %v1441
  %v2056 = vpop.f32.mrf.mxu0
  %v2057 = vadd.f32 %v1949, %v2056
  %v2058 = vpop.f32.mrf.mxu0
  %v2059 = vadd.f32 %v1951, %v2058
  %2060 = vmatmul.bf16.gmra.mxu0 %v1444
  %v2061 = vpop.f32.mrf.mxu0
  %v2062 = vadd.f32 %v1954, %v2061
  %v2063 = vpop.f32.mrf.mxu0
  %v2064 = vadd.f32 %v1956, %v2063
  %2065 = vmatmul.bf16.gmra.mxu0 %v1447
  %v2066 = vpop.f32.mrf.mxu0
  %v2067 = vadd.f32 %v1959, %v2066
  %v2068 = vpop.f32.mrf.mxu0
  %v2069 = vadd.f32 %v1961, %v2068
  %2070 = vmatmul.bf16.gmra.mxu0 %v1450
  %v2071 = vpop.f32.mrf.mxu0
  %v2072 = vadd.f32 %v1964, %v2071
  %v2073 = vpop.f32.mrf.mxu0
  %v2074 = vadd.f32 %v1966, %v2073
  %2075 = vmatmul.bf16.gmra.mxu0 %v1453
  %v2076 = vpop.f32.mrf.mxu0
  %v2077 = vadd.f32 %v1969, %v2076
  %v2078 = vpop.f32.mrf.mxu0
  %v2079 = vadd.f32 %v1971, %v2078
  %2080 = vmatmul.bf16.gmra.mxu0 %v1456
  %v2081 = vpop.f32.mrf.mxu0
  %v2082 = vadd.f32 %v1974, %v2081
  %v2083 = vpop.f32.mrf.mxu0
  %v2084 = vadd.f32 %v1976, %v2083
  %2085 = vmatmul.bf16.gmra.mxu0 %v1459
  %v2086 = vpop.f32.mrf.mxu0
  %v2087 = vadd.f32 %v1979, %v2086
  %v2088 = vpop.f32.mrf.mxu0
  %v2089 = vadd.f32 %v1981, %v2088
  %2090 = vmatmul.bf16.gmra.mxu0 %v1462
  %v2091 = vpop.f32.mrf.mxu0
  %v2092 = vadd.f32 %v1984, %v2091
  %v2093 = vpop.f32.mrf.mxu0
  %v2094 = vadd.f32 %v1986, %v2093
  %2095 = vmatmul.bf16.gmra.mxu0 %v1465
  %v2096 = vpop.f32.mrf.mxu0
  %v2097 = vadd.f32 %v1989, %v2096
  %v2098 = vpop.f32.mrf.mxu0
  %v2099 = vadd.f32 %v1991, %v2098
  %2100 = vmatmul.bf16.gmra.mxu0 %v1468
  %v2101 = vpop.f32.mrf.mxu0
  %v2102 = vadd.f32 %v1994, %v2101
  %v2103 = vpop.f32.mrf.mxu0
  %v2104 = vadd.f32 %v1996, %v2103
  %2105 = vmatmul.bf16.gmra.mxu0 %v1471
  %v2106 = vpop.f32.mrf.mxu0
  %v2107 = vadd.f32 %v1999, %v2106
  %v2108 = vpop.f32.mrf.mxu0
  %v2109 = vadd.f32 %v2001, %v2108
  %2110 = vmatmul.bf16.gmra.mxu0 %v1474
  %v2111 = vpop.f32.mrf.mxu0
  %v2112 = vadd.f32 %v2004, %v2111
  %v2113 = vpop.f32.mrf.mxu0
  %v2114 = vadd.f32 %v2006, %v2113
  %2115 = vmatmul.bf16.gmra.mxu0 %v1477
  %v2116 = vpop.f32.mrf.mxu0
  %v2117 = vadd.f32 %v2009, %v2116
  %v2118 = vpop.f32.mrf.mxu0
  %v2119 = vadd.f32 %v2011, %v2118
  %2120 = vmatmul.bf16.gmra.mxu0 %v1480
  %v2121 = vpop.f32.mrf.mxu0
  %v2122 = vadd.f32 %v2014, %v2121
  %v2123 = vpop.f32.mrf.mxu0
  %v2124 = vadd.f32 %v2016, %v2123
  %2125 = vmatmul.bf16.gmra.mxu0 %v1483
  %v2126 = vpop.f32.mrf.mxu0
  %v2127 = vadd.f32 %v2019, %v2126
  %v2128 = vpop.f32.mrf.mxu0
  %v2129 = vadd.f32 %v2021, %v2128
  %2130 = vmatmul.bf16.gmra.mxu0 %v1486
  %v2131 = vpop.f32.mrf.mxu0
  %v2132 = vadd.f32 %v2024, %v2131
  %v2133 = vpop.f32.mrf.mxu0
  %v2134 = vadd.f32 %v2026, %v2133
  %2135 = vmatmul.bf16.gmra.mxu0 %v1489
  %v2136 = vpop.f32.mrf.mxu0
  %v2137 = vadd.f32 %v2029, %v2136
  %v2138 = vpop.f32.mrf.mxu0
  %v2139 = vadd.f32 %v2031, %v2138
  %2140 = vmatmul.bf16.gmra.mxu0 %v1492
  %v2141 = vpop.f32.mrf.mxu0
  %v2142 = vadd.f32 %v2034, %v2141
  %v2143 = vpop.f32.mrf.mxu0
  %v2144 = vadd.f32 %v2036, %v2143
  %2145 = vmatmul.bf16.gmra.mxu0 %v1495
  %v2146 = vpop.f32.mrf.mxu0
  %v2147 = vadd.f32 %v2039, %v2146
  %v2148 = vpop.f32.mrf.mxu0
  %v2149 = vadd.f32 %v2041, %v2148
  %2150 = vmatmul.bf16.gmra.mxu0 %v1498
  %v2151 = vpop.f32.mrf.mxu0
  %v2152 = vadd.f32 %v2044, %v2151
  %v2153 = vpop.f32.mrf.mxu0
  %2154 = vdwg.mxu0
  %v2155 = vmax.f32 %v1733, 0.0
  %v2156 = vmax.f32 %v2057, 0.0
  %v2157 = vmax.f32 %v1735, 0.0
  %v2158 = vmax.f32 %v2059, 0.0
  %v2159 = vmax.f32 %v1738, 0.0
  %v2160 = vmax.f32 %v2062, 0.0
  %v2161 = vmax.f32 %v1740, 0.0
  %v2162 = vmax.f32 %v2064, 0.0
  %v2163 = vmax.f32 %v1743, 0.0
  %v2164 = vmax.f32 %v2067, 0.0
  %v2165 = vmax.f32 %v1745, 0.0
  %v2166 = vmax.f32 %v2069, 0.0
  %v2167 = vmax.f32 %v1748, 0.0
  %v2168 = vmax.f32 %v2072, 0.0
  %v2169 = vmax.f32 %v1750, 0.0
  %v2170 = vmax.f32 %v2074, 0.0
  %v2171 = vmax.f32 %v1753, 0.0
  %v2172 = vmax.f32 %v2077, 0.0
  %v2173 = vmax.f32 %v1755, 0.0
  %v2174 = vmax.f32 %v2079, 0.0
  %v2175 = vmax.f32 %v1758, 0.0
  %v2176 = vmax.f32 %v2082, 0.0
  %v2177 = vmax.f32 %v1760, 0.0
  %v2178 = vmax.f32 %v2084, 0.0
  %v2179 = vmax.f32 %v1763, 0.0
  %v2180 = vmax.f32 %v2087, 0.0
  %v2181 = vmax.f32 %v1765, 0.0
  %v2182 = vmax.f32 %v2089, 0.0
  %v2183 = vmax.f32 %v1768, 0.0
  %v2184 = vmax.f32 %v2092, 0.0
  %v2185 = vmax.f32 %v1770, 0.0
  %v2186 = vmax.f32 %v2094, 0.0
  %v2187 = vmax.f32 %v1773, 0.0
  %v2188 = vmax.f32 %v2097, 0.0
  %v2189 = vmax.f32 %v1775, 0.0
  %v2190 = vmax.f32 %v2099, 0.0
  %v2191 = vmax.f32 %v1778, 0.0
  %v2192 = vmax.f32 %v2102, 0.0
  %v2193 = vmax.f32 %v1780, 0.0
  %v2194 = vmax.f32 %v2104, 0.0
  %v2195 = vmax.f32 %v1783, 0.0
  %v2196 = vmax.f32 %v2107, 0.0
  %v2197 = vmax.f32 %v1785, 0.0
  %v2198 = vmax.f32 %v2109, 0.0
  %v2199 = vmax.f32 %v1788, 0.0
  %v2200 = vmax.f32 %v2112, 0.0
  %v2201 = vmax.f32 %v1790, 0.0
  %v2202 = vmax.f32 %v2114, 0.0
  %v2203 = vmax.f32 %v1793, 0.0
  %v2204 = vmax.f32 %v2117, 0.0
  %v2205 = vmax.f32 %v1795, 0.0
  %v2206 = vmax.f32 %v2119, 0.0
  %v2207 = vmax.f32 %v1798, 0.0
  %v2208 = vmax.f32 %v2122, 0.0
  %v2209 = vmax.f32 %v1800, 0.0
  %v2210 = vmax.f32 %v2124, 0.0
  %v2211 = vmax.f32 %v1803, 0.0
  %v2212 = vmax.f32 %v2127, 0.0
  %v2213 = vmax.f32 %v1805, 0.0
  %v2214 = vmax.f32 %v2129, 0.0
  %v2215 = vmax.f32 %v1808, 0.0
  %v2216 = vmax.f32 %v2132, 0.0
  %v2217 = vmax.f32 %v1810, 0.0
  %v2218 = vmax.f32 %v2134, 0.0
  %v2219 = vmax.f32 %v1813, 0.0
  %v2220 = vmax.f32 %v2137, 0.0
  %v2221 = vmax.f32 %v1815, 0.0
  %v2222 = vmax.f32 %v2139, 0.0
  %v2223 = vmax.f32 %v1818, 0.0
  %v2224 = vmax.f32 %v2142, 0.0
  %v2225 = vmax.f32 %v1820, 0.0
  %v2226 = vmax.f32 %v2144, 0.0
  %v2227 = vmax.f32 %v1823, 0.0
  %v2228 = vmax.f32 %v2147, 0.0
  %v2229 = vmax.f32 %v1825, 0.0
  %v2230 = vmax.f32 %v2149, 0.0
  %v2231 = vmax.f32 %v1828, 0.0
  %v2232 = vmax.f32 %v2152, 0.0
  %v2233 = vld [vmem:[%s5] sm:$0xff]
  %v2234 = vld [vmem:[%s5 + $0x8] sm:$0xf]
  %v2235 = vld [vmem:[%s5 + $0xc] sm:$0xff]
  %v2236 = vld [vmem:[%s5 + $0x14] sm:$0xf]
  %v2237 = vld [vmem:[%s5 + $0x18] sm:$0xff]
  %v2238 = vld [vmem:[%s5 + $0x20] sm:$0xf]
  %v2239 = vld [vmem:[%s5 + $0x24] sm:$0xff]
  %v2240 = vld [vmem:[%s5 + $0x2c] sm:$0xf]
  %v2241 = vld [vmem:[%s5 + $0x30] sm:$0xff]
  %v2242 = vld [vmem:[%s5 + $0x38] sm:$0xf]
  %v2243 = vld [vmem:[%s5 + $0x3c] sm:$0xff]
  %v2244 = vld [vmem:[%s5 + $0x44] sm:$0xf]
  %v2245 = vld [vmem:[%s5 + $0x48] sm:$0xff]
  %v2246 = vld [vmem:[%s5 + $0x50] sm:$0xf]
  %v2247 = vld [vmem:[%s5 + $0x54] sm:$0xff]
  %v2248 = vld [vmem:[%s5 + $0x5c] sm:$0xf]
  %v2249 = vld [vmem:[%s5 + $0x60] sm:$0xff]
  %v2250 = vld [vmem:[%s5 + $0x68] sm:$0xf]
  %v2251 = vld [vmem:[%s5 + $0x6c] sm:$0xff]
  %v2252 = vld [vmem:[%s5 + $0x74] sm:$0xf]
  %v2253 = vld [vmem:[%s5 + $0x78] sm:$0xff]
  %v2254 = vld [vmem:[%s5 + $0x80] sm:$0xf]
  %v2255 = vld [vmem:[%s5 + $0x84] sm:$0xff]
  %v2256 = vld [vmem:[%s5 + $0x8c] sm:$0xf]
  %v2257 = vld [vmem:[%s5 + $0x90] sm:$0xff]
  %v2258 = vld [vmem:[%s5 + $0x98] sm:$0xf]
  %v2259 = vld [vmem:[%s5 + $0x9c] sm:$0xff]
  %v2260 = vld [vmem:[%s5 + $0xa4] sm:$0xf]
  %v2261 = vld [vmem:[%s5 + $0xa8] sm:$0xff]
  %v2262 = vld [vmem:[%s5 + $0xb0] sm:$0xf]
  %v2263 = vld [vmem:[%s5 + $0xb4] sm:$0xff]
  %v2264 = vld [vmem:[%s5 + $0xbc] sm:$0xf]
  %v2265 = vld [vmem:[%s5 + $0xc0] sm:$0xff]
  %v2266 = vld [vmem:[%s5 + $0xc8] sm:$0xf]
  %v2267 = vld [vmem:[%s5 + $0xcc] sm:$0xff]
  %v2268 = vld [vmem:[%s5 + $0xd4] sm:$0xf]
  %v2269 = vld [vmem:[%s5 + $0xd8] sm:$0xff]
  %v2270 = vld [vmem:[%s5 + $0xe0] sm:$0xf]
  %v2271 = vld [vmem:[%s5 + $0xe4] sm:$0xff]
  %v2272 = vld [vmem:[%s5 + $0xec] sm:$0xf]
  %v2273 = vld [vmem:[%s5 + $0xf0] sm:$0xff]
  %v2274 = vld [vmem:[%s5 + $0xf8] sm:$0xf]
  %v2275 = vld [vmem:[%s5 + $0xfc] sm:$0xff]
  %v2276 = vld [vmem:[%s5 + $0x104] sm:$0xf]
  %v2277 = vld [vmem:[%s5 + $0x108] sm:$0xff]
  %v2278 = vld [vmem:[%s5 + $0x110] sm:$0xf]
  %v2279 = vld [vmem:[%s5 + $0x114] sm:$0xff]
  %v2280 = vld [vmem:[%s5 + $0x11c] sm:$0xf]
  %v2281 = vld [vmem:[%s5 + $0x120] sm:$0xff]
  %v2282 = vld [vmem:[%s5 + $0x128] sm:$0xf]
  %v2283 = vld [vmem:[%s5 + $0x12c] sm:$0xff]
  %v2284 = vld [vmem:[%s5 + $0x134] sm:$0xf]
  %v2285 = vld [vmem:[%s5 + $0x138] sm:$0xff]
  %v2286 = vld [vmem:[%s5 + $0x140] sm:$0xf]
  %v2287 = vld [vmem:[%s5 + $0x144] sm:$0xff]
  %v2288 = vld [vmem:[%s5 + $0x14c] sm:$0xf]
  %v2289 = vld [vmem:[%s5 + $0x150] sm:$0xff]
  %v2290 = vld [vmem:[%s5 + $0x158] sm:$0xf]
  %v2291 = vld [vmem:[%s5 + $0x15c] sm:$0xff]
  %v2292 = vld [vmem:[%s5 + $0x164] sm:$0xf]
  %v2293 = vld [vmem:[%s5 + $0x168] sm:$0xff]
  %v2294 = vld [vmem:[%s5 + $0x170] sm:$0xf]
  %v2295 = vld [vmem:[%s5 + $0x174] sm:$0xff]
  %v2296 = vld [vmem:[%s5 + $0x17c] sm:$0xf]
  %v2297 = vld [vmem:[%s5 + $0x180] sm:$0xff]
  %v2298 = vld [vmem:[%s5 + $0x188] sm:$0xf]
  %v2299 = vld [vmem:[%s5 + $0x18c] sm:$0xff]
  %v2300 = vld [vmem:[%s5 + $0x194] sm:$0xf]
  %v2301 = vld [vmem:[%s5 + $0x198] sm:$0xff]
  %v2302 = vld [vmem:[%s5 + $0x1a0] sm:$0xf]
  %v2303 = vld [vmem:[%s5 + $0x1a4] sm:$0xff]
  %v2304 = vld [vmem:[%s5 + $0x1ac] sm:$0xf]
  %v2305 = vld [vmem:[%s5 + $0x1b0] sm:$0xff]
  %v2306 = vld [vmem:[%s5 + $0x1b8] sm:$0xf]
  %v2307 = vld [vmem:[%s5 + $0x1bc] sm:$0xff]
  %v2308 = vld [vmem:[%s5 + $0x1c4] sm:$0xf]
  %v2309 = vld [vmem:[%s5 + $0x1c8] sm:$0xff]
  %v2310 = vld [vmem:[%s5 + $0x1d0] sm:$0xf]
  %v2311 = vpack.c.bf16 %v2157, %v2155
  %v2312 = vpack.c.bf16 %v2158, %v2156
  %v2313 = vpack.c.bf16 %v2161, %v2159
  %v2314 = vpack.c.bf16 %v2162, %v2160
  %v2315 = vpack.c.bf16 %v2165, %v2163
  %v2316 = vpack.c.bf16 %v2166, %v2164
  %v2317 = vpack.c.bf16 %v2169, %v2167
  %v2318 = vpack.c.bf16 %v2170, %v2168
  %v2319 = vpack.c.bf16 %v2173, %v2171
  %v2320 = vpack.c.bf16 %v2174, %v2172
  %v2321 = vpack.c.bf16 %v2177, %v2175
  %v2322 = vpack.c.bf16 %v2178, %v2176
  %v2323 = vpack.c.bf16 %v2181, %v2179
  %v2324 = vpack.c.bf16 %v2182, %v2180
  %v2325 = vpack.c.bf16 %v2185, %v2183
  %v2326 = vpack.c.bf16 %v2186, %v2184
  %v2327 = vpack.c.bf16 %v2189, %v2187
  %v2328 = vpack.c.bf16 %v2190, %v2188
  %v2329 = vpack.c.bf16 %v2193, %v2191
  %v2330 = vpack.c.bf16 %v2194, %v2192
  %v2331 = vpack.c.bf16 %v2197, %v2195
  %v2332 = vpack.c.bf16 %v2198, %v2196
  %v2333 = vpack.c.bf16 %v2201, %v2199
  %v2334 = vpack.c.bf16 %v2202, %v2200
  %v2335 = vpack.c.bf16 %v2205, %v2203
  %v2336 = vpack.c.bf16 %v2206, %v2204
  %v2337 = vpack.c.bf16 %v2209, %v2207
  %v2338 = vpack.c.bf16 %v2210, %v2208
  %v2339 = vpack.c.bf16 %v2213, %v2211
  %v2340 = vpack.c.bf16 %v2214, %v2212
  %v2341 = vpack.c.bf16 %v2217, %v2215
  %v2342 = vpack.c.bf16 %v2218, %v2216
  %v2343 = vpack.c.bf16 %v2221, %v2219
  %v2344 = vpack.c.bf16 %v2222, %v2220
  %v2345 = vpack.c.bf16 %v2225, %v2223
  %v2346 = vpack.c.bf16 %v2226, %v2224
  %v2347 = vpack.c.bf16 %v2229, %v2227
  %v2348 = vpack.c.bf16 %v2230, %v2228
  %v2349 = vpack.c.bf16 %v2231, %v2231
  %v2350 = vpack.c.bf16 %v2232, %v2232
  %v2351 = vld [vmem:[%s6] sm:$0xff]
  %v2352 = vld [vmem:[%s6 + $0x8] sm:$0xff]
  %v2353 = vld [vmem:[%s6 + $0x10] sm:$0xff]
  %v2354 = vld [vmem:[%s6 + $0x18] sm:$0xff]
  %v2355 = vld [vmem:[%s6 + $0x20] sm:$0xff]
  %v2356 = vld [vmem:[%s6 + $0x28] sm:$0xff]
  %v2357 = vld [vmem:[%s6 + $0x30] sm:$0xff]
  %v2358 = vld [vmem:[%s6 + $0x38] sm:$0xff]
  %v2359 = vld [vmem:[%s6 + $0x40] sm:$0xff]
  %v2360 = vld [vmem:[%s6 + $0x48] sm:$0xff]
  %v2361 = vld [vmem:[%s6 + $0x50] sm:$0xff]
  %v2362 = vld [vmem:[%s6 + $0x58] sm:$0xff]
  %v2363 = vld [vmem:[%s6 + $0x60] sm:$0xff]
  %v2364 = vld [vmem:[%s6 + $0x68] sm:$0xff]
  %v2365 = vld [vmem:[%s6 + $0x70] sm:$0xff]
  %v2366 = vld [vmem:[%s6 + $0x78] sm:$0xff]
  %v2367 = vld [vmem:[%s6 + $0x80] sm:$0xff]
  %v2368 = vld [vmem:[%s6 + $0x88] sm:$0xff]
  %v2369 = vld [vmem:[%s6 + $0x90] sm:$0xff]
  %v2370 = vld [vmem:[%s6 + $0x98] sm:$0xff]
  %v2371 = vld [vmem:[%s6 + $0xa0] sm:$0xff]
  %v2372 = vld [vmem:[%s6 + $0xa8] sm:$0xff]
  %v2373 = vld [vmem:[%s6 + $0xb0] sm:$0xff]
  %v2374 = vld [vmem:[%s6 + $0xb8] sm:$0xff]
  %v2375 = vld [vmem:[%s6 + $0xc0] sm:$0xff]
  %v2376 = vld [vmem:[%s6 + $0xc8] sm:$0xff]
  %v2377 = vld [vmem:[%s6 + $0xd0] sm:$0xff]
  %v2378 = vld [vmem:[%s6 + $0xd8] sm:$0xff]
  %v2379 = vld [vmem:[%s6 + $0xe0] sm:$0xff]
  %v2380 = vld [vmem:[%s6 + $0xe8] sm:$0xff]
  %v2381 = vld [vmem:[%s6 + $0xf0] sm:$0xff]
  %v2382 = vld [vmem:[%s6 + $0xf8] sm:$0xff]
  %v2383 = vld [vmem:[%s6 + $0x100] sm:$0xff]
  %v2384 = vld [vmem:[%s6 + $0x108] sm:$0xff]
  %v2385 = vld [vmem:[%s6 + $0x110] sm:$0xff]
  %v2386 = vld [vmem:[%s6 + $0x118] sm:$0xff]
  %v2387 = vld [vmem:[%s6 + $0x120] sm:$0xff]
  %v2388 = vld [vmem:[%s6 + $0x128] sm:$0xff]
  %v2389 = vld [vmem:[%s6 + $0x130] sm:$0xff]
  %2391 = vset.pattern.permute.xlu0 0
  %2392 = vperm.xlu0 %2391, %v2351
  %v2393 = vpop.permute.xlu0 %2392
  %2396 = vset.pattern.permute.xlu0 0
  %2397 = vperm.xlu0 %2396, %v2352
  %v2398 = vpop.permute.xlu0 %2397
  %2401 = vset.pattern.permute.xlu0 0
  %2402 = vperm.xlu0 %2401, %v2353
  %v2403 = vpop.permute.xlu0 %2402
  %2406 = vset.pattern.permute.xlu0 0
  %2407 = vperm.xlu0 %2406, %v2354
  %v2408 = vpop.permute.xlu0 %2407
  %2411 = vset.pattern.permute.xlu0 0
  %2412 = vperm.xlu0 %2411, %v2355
  %v2413 = vpop.permute.xlu0 %2412
  %2416 = vset.pattern.permute.xlu0 0
  %2417 = vperm.xlu0 %2416, %v2356
  %v2418 = vpop.permute.xlu0 %2417
  %2421 = vset.pattern.permute.xlu0 0
  %2422 = vperm.xlu0 %2421, %v2357
  %v2423 = vpop.permute.xlu0 %2422
  %2426 = vset.pattern.permute.xlu0 0
  %2427 = vperm.xlu0 %2426, %v2358
  %v2428 = vpop.permute.xlu0 %2427
  %2431 = vset.pattern.permute.xlu0 0
  %2432 = vperm.xlu0 %2431, %v2359
  %v2433 = vpop.permute.xlu0 %2432
  %2436 = vset.pattern.permute.xlu0 0
  %2437 = vperm.xlu0 %2436, %v2360
  %v2438 = vpop.permute.xlu0 %2437
  %2441 = vset.pattern.permute.xlu0 0
  %2442 = vperm.xlu0 %2441, %v2361
  %v2443 = vpop.permute.xlu0 %2442
  %2446 = vset.pattern.permute.xlu0 0
  %2447 = vperm.xlu0 %2446, %v2362
  %v2448 = vpop.permute.xlu0 %2447
  %2451 = vset.pattern.permute.xlu0 0
  %2452 = vperm.xlu0 %2451, %v2363
  %v2453 = vpop.permute.xlu0 %2452
  %2456 = vset.pattern.permute.xlu0 0
  %2457 = vperm.xlu0 %2456, %v2364
  %v2458 = vpop.permute.xlu0 %2457
  %2461 = vset.pattern.permute.xlu0 0
  %2462 = vperm.xlu0 %2461, %v2365
  %v2463 = vpop.permute.xlu0 %2462
  %2466 = vset.pattern.permute.xlu0 0
  %2467 = vperm.xlu0 %2466, %v2366
  %v2468 = vpop.permute.xlu0 %2467
  %2471 = vset.pattern.permute.xlu0 0
  %2472 = vperm.xlu0 %2471, %v2367
  %v2473 = vpop.permute.xlu0 %2472
  %2476 = vset.pattern.permute.xlu0 0
  %2477 = vperm.xlu0 %2476, %v2368
  %v2478 = vpop.permute.xlu0 %2477
  %2481 = vset.pattern.permute.xlu0 0
  %2482 = vperm.xlu0 %2481, %v2369
  %v2483 = vpop.permute.xlu0 %2482
  %2486 = vset.pattern.permute.xlu0 0
  %2487 = vperm.xlu0 %2486, %v2370
  %v2488 = vpop.permute.xlu0 %2487
  %2491 = vset.pattern.permute.xlu0 0
  %2492 = vperm.xlu0 %2491, %v2371
  %v2493 = vpop.permute.xlu0 %2492
  %2496 = vset.pattern.permute.xlu0 0
  %2497 = vperm.xlu0 %2496, %v2372
  %v2498 = vpop.permute.xlu0 %2497
  %2501 = vset.pattern.permute.xlu0 0
  %2502 = vperm.xlu0 %2501, %v2373
  %v2503 = vpop.permute.xlu0 %2502
  %2506 = vset.pattern.permute.xlu0 0
  %2507 = vperm.xlu0 %2506, %v2374
  %v2508 = vpop.permute.xlu0 %2507
  %2511 = vset.pattern.permute.xlu0 0
  %2512 = vperm.xlu0 %2511, %v2375
  %v2513 = vpop.permute.xlu0 %2512
  %2516 = vset.pattern.permute.xlu0 0
  %2517 = vperm.xlu0 %2516, %v2376
  %v2518 = vpop.permute.xlu0 %2517
  %2521 = vset.pattern.permute.xlu0 0
  %2522 = vperm.xlu0 %2521, %v2377
  %v2523 = vpop.permute.xlu0 %2522
  %2526 = vset.pattern.permute.xlu0 0
  %2527 = vperm.xlu0 %2526, %v2378
  %v2528 = vpop.permute.xlu0 %2527
  %2531 = vset.pattern.permute.xlu0 0
  %2532 = vperm.xlu0 %2531, %v2379
  %v2533 = vpop.permute.xlu0 %2532
  %2536 = vset.pattern.permute.xlu0 0
  %2537 = vperm.xlu0 %2536, %v2380
  %v2538 = vpop.permute.xlu0 %2537
  %2541 = vset.pattern.permute.xlu0 0
  %2542 = vperm.xlu0 %2541, %v2381
  %v2543 = vpop.permute.xlu0 %2542
  %2546 = vset.pattern.permute.xlu0 0
  %2547 = vperm.xlu0 %2546, %v2382
  %v2548 = vpop.permute.xlu0 %2547
  %2551 = vset.pattern.permute.xlu0 0
  %2552 = vperm.xlu0 %2551, %v2383
  %v2553 = vpop.permute.xlu0 %2552
  %2556 = vset.pattern.permute.xlu0 0
  %2557 = vperm.xlu0 %2556, %v2384
  %v2558 = vpop.permute.xlu0 %2557
  %2561 = vset.pattern.permute.xlu0 0
  %2562 = vperm.xlu0 %2561, %v2385
  %v2563 = vpop.permute.xlu0 %2562
  %2566 = vset.pattern.permute.xlu0 0
  %2567 = vperm.xlu0 %2566, %v2386
  %v2568 = vpop.permute.xlu0 %2567
  %2571 = vset.pattern.permute.xlu0 0
  %2572 = vperm.xlu0 %2571, %v2387
  %v2573 = vpop.permute.xlu0 %2572
  %2576 = vset.pattern.permute.xlu0 0
  %2577 = vperm.xlu0 %2576, %v2388
  %v2578 = vpop.permute.xlu0 %2577
  %2581 = vset.pattern.permute.xlu0 0
  %2582 = vperm.xlu0 %2581, %v2389
  %v2583 = vpop.permute.xlu0 %2582
  %v2585 = vmul.f32 %v2393, %v714
  %v2586 = vmul.f32 %v2393, %v715
  %v2587 = vmul.f32 %v2398, %v716
  %v2588 = vmul.f32 %v2398, %v717
  %v2589 = vmul.f32 %v2403, %v718
  %v2590 = vmul.f32 %v2403, %v719
  %v2591 = vmul.f32 %v2408, %v720
  %v2592 = vmul.f32 %v2408, %v721
  %v2593 = vmul.f32 %v2413, %v722
  %v2594 = vmul.f32 %v2413, %v723
  %v2595 = vmul.f32 %v2418, %v724
  %v2596 = vmul.f32 %v2418, %v725
  %v2597 = vmul.f32 %v2423, %v726
  %v2598 = vmul.f32 %v2423, %v727
  %v2599 = vmul.f32 %v2428, %v728
  %v2600 = vmul.f32 %v2428, %v729
  %v2601 = vmul.f32 %v2433, %v730
  %v2602 = vmul.f32 %v2433, %v731
  %v2603 = vmul.f32 %v2438, %v732
  %v2604 = vmul.f32 %v2438, %v733
  %v2605 = vmul.f32 %v2443, %v734
  %v2606 = vmul.f32 %v2443, %v735
  %v2607 = vmul.f32 %v2448, %v736
  %v2608 = vmul.f32 %v2448, %v737
  %v2609 = vmul.f32 %v2453, %v738
  %v2610 = vmul.f32 %v2453, %v739
  %v2611 = vmul.f32 %v2458, %v740
  %v2612 = vmul.f32 %v2458, %v741
  %v2613 = vmul.f32 %v2463, %v742
  %v2614 = vmul.f32 %v2463, %v743
  %v2615 = vmul.f32 %v2468, %v744
  %v2616 = vmul.f32 %v2468, %v745
  %v2617 = vmul.f32 %v2473, %v746
  %v2618 = vmul.f32 %v2473, %v747
  %v2619 = vmul.f32 %v2478, %v748
  %v2620 = vmul.f32 %v2478, %v749
  %v2621 = vmul.f32 %v2483, %v750
  %v2622 = vmul.f32 %v2483, %v751
  %v2623 = vmul.f32 %v2488, %v752
  %v2624 = vmul.f32 %v2488, %v753
  %v2625 = vmul.f32 %v2493, %v754
  %v2626 = vmul.f32 %v2493, %v755
  %v2627 = vmul.f32 %v2498, %v756
  %v2628 = vmul.f32 %v2498, %v757
  %v2629 = vmul.f32 %v2503, %v758
  %v2630 = vmul.f32 %v2503, %v759
  %v2631 = vmul.f32 %v2508, %v760
  %v2632 = vmul.f32 %v2508, %v761
  %v2633 = vmul.f32 %v2513, %v762
  %v2634 = vmul.f32 %v2513, %v763
  %v2635 = vmul.f32 %v2518, %v764
  %v2636 = vmul.f32 %v2518, %v765
  %v2637 = vmul.f32 %v2523, %v766
  %v2638 = vmul.f32 %v2523, %v767
  %v2639 = vmul.f32 %v2528, %v768
  %v2640 = vmul.f32 %v2528, %v769
  %v2641 = vmul.f32 %v2533, %v770
  %v2642 = vmul.f32 %v2533, %v771
  %v2643 = vmul.f32 %v2538, %v772
  %v2644 = vmul.f32 %v2538, %v773
  %v2645 = vmul.f32 %v2543, %v774
  %v2646 = vmul.f32 %v2543, %v775
  %v2647 = vmul.f32 %v2548, %v776
  %v2648 = vmul.f32 %v2548, %v777
  %v2649 = vmul.f32 %v2553, %v778
  %v2650 = vmul.f32 %v2553, %v779
  %v2651 = vmul.f32 %v2558, %v780
  %v2652 = vmul.f32 %v2558, %v781
  %v2653 = vmul.f32 %v2563, %v782
  %v2654 = vmul.f32 %v2563, %v783
  %v2655 = vmul.f32 %v2568, %v784
  %v2656 = vmul.f32 %v2568, %v785
  %v2657 = vmul.f32 %v2573, %v786
  %v2658 = vmul.f32 %v2573, %v787
  %v2659 = vmul.f32 %v2578, %v788
  %v2660 = vmul.f32 %v2578, %v789
  %v2661 = vmul.f32 %v2583, %v790
  %v2662 = vmul.f32 %v2583, %v791
  %v2741 = vunpack.c.l.b16 %v2233
  %v2742 = vunpack.c.h.b16 %v2233
  %v2743 = vunpack.c.l.b16 %v2234
  %v2744 = vunpack.c.l.b16 %v2235
  %v2745 = vunpack.c.h.b16 %v2235
  %v2746 = vunpack.c.l.b16 %v2236
  %v2747 = vunpack.c.l.b16 %v2237
  %v2748 = vunpack.c.h.b16 %v2237
  %v2749 = vunpack.c.l.b16 %v2238
  %v2750 = vunpack.c.l.b16 %v2239
  %v2751 = vunpack.c.h.b16 %v2239
  %v2752 = vunpack.c.l.b16 %v2240
  %v2753 = vunpack.c.l.b16 %v2241
  %v2754 = vunpack.c.h.b16 %v2241
  %v2755 = vunpack.c.l.b16 %v2242
  %v2756 = vunpack.c.l.b16 %v2243
  %v2757 = vunpack.c.h.b16 %v2243
  %v2758 = vunpack.c.l.b16 %v2244
  %v2759 = vunpack.c.l.b16 %v2245
  %v2760 = vunpack.c.h.b16 %v2245
  %v2761 = vunpack.c.l.b16 %v2246
  %v2762 = vunpack.c.l.b16 %v2247
  %v2763 = vunpack.c.h.b16 %v2247
  %v2764 = vunpack.c.l.b16 %v2248
  %v2765 = vunpack.c.l.b16 %v2249
  %v2766 = vunpack.c.h.b16 %v2249
  %v2767 = vunpack.c.l.b16 %v2250
  %v2768 = vunpack.c.l.b16 %v2251
  %v2769 = vunpack.c.h.b16 %v2251
  %v2770 = vunpack.c.l.b16 %v2252
  %v2771 = vunpack.c.l.b16 %v2253
  %v2772 = vunpack.c.h.b16 %v2253
  %v2773 = vunpack.c.l.b16 %v2254
  %v2774 = vunpack.c.l.b16 %v2255
  %v2775 = vunpack.c.h.b16 %v2255
  %v2776 = vunpack.c.l.b16 %v2256
  %v2777 = vunpack.c.l.b16 %v2257
  %v2778 = vunpack.c.h.b16 %v2257
  %v2779 = vunpack.c.l.b16 %v2258
  %v2780 = vunpack.c.l.b16 %v2259
  %v2781 = vunpack.c.h.b16 %v2259
  %v2782 = vunpack.c.l.b16 %v2260
  %v2783 = vunpack.c.l.b16 %v2261
  %v2784 = vunpack.c.h.b16 %v2261
  %v2785 = vunpack.c.l.b16 %v2262
  %v2786 = vunpack.c.l.b16 %v2263
  %v2787 = vunpack.c.h.b16 %v2263
  %v2788 = vunpack.c.l.b16 %v2264
  %v2789 = vunpack.c.l.b16 %v2265
  %v2790 = vunpack.c.h.b16 %v2265
  %v2791 = vunpack.c.l.b16 %v2266
  %v2792 = vunpack.c.l.b16 %v2267
  %v2793 = vunpack.c.h.b16 %v2267
  %v2794 = vunpack.c.l.b16 %v2268
  %v2795 = vunpack.c.l.b16 %v2269
  %v2796 = vunpack.c.h.b16 %v2269
  %v2797 = vunpack.c.l.b16 %v2270
  %v2798 = vunpack.c.l.b16 %v2271
  %v2799 = vunpack.c.h.b16 %v2271
  %v2800 = vunpack.c.l.b16 %v2272
  %v2801 = vunpack.c.l.b16 %v2273
  %v2802 = vunpack.c.h.b16 %v2273
  %v2803 = vunpack.c.l.b16 %v2274
  %v2804 = vunpack.c.l.b16 %v2275
  %v2805 = vunpack.c.h.b16 %v2275
  %v2806 = vunpack.c.l.b16 %v2276
  %v2807 = vunpack.c.l.b16 %v2277
  %v2808 = vunpack.c.h.b16 %v2277
  %v2809 = vunpack.c.l.b16 %v2278
  %v2810 = vunpack.c.l.b16 %v2279
  %v2811 = vunpack.c.h.b16 %v2279
  %v2812 = vunpack.c.l.b16 %v2280
  %v2813 = vunpack.c.l.b16 %v2281
  %v2814 = vunpack.c.h.b16 %v2281
  %v2815 = vunpack.c.l.b16 %v2282
  %v2816 = vunpack.c.l.b16 %v2283
  %v2817 = vunpack.c.h.b16 %v2283
  %v2818 = vunpack.c.l.b16 %v2284
  %v2819 = vunpack.c.l.b16 %v2285
  %v2820 = vunpack.c.h.b16 %v2285
  %v2821 = vunpack.c.l.b16 %v2286
  %v2822 = vunpack.c.l.b16 %v2287
  %v2823 = vunpack.c.h.b16 %v2287
  %v2824 = vunpack.c.l.b16 %v2288
  %v2825 = vunpack.c.l.b16 %v2289
  %v2826 = vunpack.c.h.b16 %v2289
  %v2827 = vunpack.c.l.b16 %v2290
  %v2828 = vunpack.c.l.b16 %v2291
  %v2829 = vunpack.c.h.b16 %v2291
  %v2830 = vunpack.c.l.b16 %v2292
  %v2831 = vunpack.c.l.b16 %v2293
  %v2832 = vunpack.c.h.b16 %v2293
  %v2833 = vunpack.c.l.b16 %v2294
  %v2834 = vunpack.c.l.b16 %v2295
  %v2835 = vunpack.c.h.b16 %v2295
  %v2836 = vunpack.c.l.b16 %v2296
  %v2837 = vunpack.c.l.b16 %v2297
  %v2838 = vunpack.c.h.b16 %v2297
  %v2839 = vunpack.c.l.b16 %v2298
  %v2840 = vunpack.c.l.b16 %v2299
  %v2841 = vunpack.c.h.b16 %v2299
  %v2842 = vunpack.c.l.b16 %v2300
  %v2843 = vunpack.c.l.b16 %v2301
  %v2844 = vunpack.c.h.b16 %v2301
  %v2845 = vunpack.c.l.b16 %v2302
  %v2846 = vunpack.c.l.b16 %v2303
  %v2847 = vunpack.c.h.b16 %v2303
  %v2848 = vunpack.c.l.b16 %v2304
  %v2849 = vunpack.c.l.b16 %v2305
  %v2850 = vunpack.c.h.b16 %v2305
  %v2851 = vunpack.c.l.b16 %v2306
  %v2852 = vunpack.c.l.b16 %v2307
  %v2853 = vunpack.c.h.b16 %v2307
  %v2854 = vunpack.c.l.b16 %v2308
  %v2855 = vunpack.c.l.b16 %v2309
  %v2856 = vunpack.c.h.b16 %v2309
  %v2857 = vunpack.c.l.b16 %v2310
  %v2858 = vpack.c.b16 %v2744, %v2741
  %v2859 = vpack.c.b16 %v2745, %v2742
  %v2860 = vpack.c.b16 %v2746, %v2743
  %v2861 = vpack.c.b16 %v2750, %v2747
  %v2862 = vpack.c.b16 %v2751, %v2748
  %v2863 = vpack.c.b16 %v2752, %v2749
  %v2864 = vpack.c.b16 %v2756, %v2753
  %v2865 = vpack.c.b16 %v2757, %v2754
  %v2866 = vpack.c.b16 %v2758, %v2755
  %v2867 = vpack.c.b16 %v2762, %v2759
  %v2868 = vpack.c.b16 %v2763, %v2760
  %v2869 = vpack.c.b16 %v2764, %v2761
  %v2870 = vpack.c.b16 %v2768, %v2765
  %v2871 = vpack.c.b16 %v2769, %v2766
  %v2872 = vpack.c.b16 %v2770, %v2767
  %v2873 = vpack.c.b16 %v2774, %v2771
  %v2874 = vpack.c.b16 %v2775, %v2772
  %v2875 = vpack.c.b16 %v2776, %v2773
  %v2876 = vpack.c.b16 %v2780, %v2777
  %v2877 = vpack.c.b16 %v2781, %v2778
  %v2878 = vpack.c.b16 %v2782, %v2779
  %v2879 = vpack.c.b16 %v2786, %v2783
  %v2880 = vpack.c.b16 %v2787, %v2784
  %v2881 = vpack.c.b16 %v2788, %v2785
  %v2882 = vpack.c.b16 %v2792, %v2789
  %v2883 = vpack.c.b16 %v2793, %v2790
  %v2884 = vpack.c.b16 %v2794, %v2791
  %v2885 = vpack.c.b16 %v2798, %v2795
  %v2886 = vpack.c.b16 %v2799, %v2796
  %v2887 = vpack.c.b16 %v2800, %v2797
  %v2888 = vpack.c.b16 %v2804, %v2801
  %v2889 = vpack.c.b16 %v2805, %v2802
  %v2890 = vpack.c.b16 %v2806, %v2803
  %v2891 = vpack.c.b16 %v2810, %v2807
  %v2892 = vpack.c.b16 %v2811, %v2808
  %v2893 = vpack.c.b16 %v2812, %v2809
  %v2894 = vpack.c.b16 %v2816, %v2813
  %v2895 = vpack.c.b16 %v2817, %v2814
  %v2896 = vpack.c.b16 %v2818, %v2815
  %v2897 = vpack.c.b16 %v2822, %v2819
  %v2898 = vpack.c.b16 %v2823, %v2820
  %v2899 = vpack.c.b16 %v2824, %v2821
  %v2900 = vpack.c.b16 %v2828, %v2825
  %v2901 = vpack.c.b16 %v2829, %v2826
  %v2902 = vpack.c.b16 %v2830, %v2827
  %v2903 = vpack.c.b16 %v2834, %v2831
  %v2904 = vpack.c.b16 %v2835, %v2832
  %v2905 = vpack.c.b16 %v2836, %v2833
  %v2906 = vpack.c.b16 %v2840, %v2837
  %v2907 = vpack.c.b16 %v2841, %v2838
  %v2908 = vpack.c.b16 %v2842, %v2839
  %v2909 = vpack.c.b16 %v2846, %v2843
  %v2910 = vpack.c.b16 %v2847, %v2844
  %v2911 = vpack.c.b16 %v2848, %v2845
  %v2912 = vpack.c.b16 %v2852, %v2849
  %v2913 = vpack.c.b16 %v2853, %v2850
  %v2914 = vpack.c.b16 %v2854, %v2851
  %v2915 = vpack.c.b16 %v2855, %v2855
  %v2916 = vpack.c.b16 %v2856, %v2856
  %v2917 = vpack.c.b16 %v2857, %v2857
  %v2959 = vsel %vm1439, %v2860, 0
  %v2962 = vsel %vm1439, %v2863, 0
  %v2965 = vsel %vm1439, %v2866, 0
  %v2968 = vsel %vm1439, %v2869, 0
  %v2971 = vsel %vm1439, %v2872, 0
  %v2974 = vsel %vm1439, %v2875, 0
  %v2977 = vsel %vm1439, %v2878, 0
  %v2980 = vsel %vm1439, %v2881, 0
  %v2983 = vsel %vm1439, %v2884, 0
  %v2986 = vsel %vm1439, %v2887, 0
  %v2989 = vsel %vm1439, %v2890, 0
  %v2992 = vsel %vm1439, %v2893, 0
  %v2995 = vsel %vm1439, %v2896, 0
  %v2998 = vsel %vm1439, %v2899, 0
  %v3001 = vsel %vm1439, %v2902, 0
  %v3004 = vsel %vm1439, %v2905, 0
  %v3007 = vsel %vm1439, %v2908, 0
  %v3010 = vsel %vm1439, %v2911, 0
  %v3013 = vsel %vm1439, %v2914, 0
  %v3016 = vsel %vm1439, %v2917, 0
  %v3019 = vsel %vm1500, %v2349, 0
  %v3022 = vsel %vm1500, %v2350, 0
  %3024 = vmatpush.bf16.msra.mxu0 %v2325
  %3025 = vmatpush.bf16.msra.mxu0 %v2323
  %3026 = vmatpush.bf16.msra.mxu0 %v2321
  %3027 = vmatpush.bf16.msra.mxu0 %v2319
  %3028 = vmatpush.bf16.msra.mxu0 %v2317
  %3029 = vmatpush.bf16.msra.mxu0 %v2315
  %3030 = vmatpush.bf16.msra.mxu0 %v2313
  %3031 = vmatpush.bf16.msra.mxu0 %v2311
  %3032 = vmatmul.bf16.gmra.mxu0 %v2858
  %v3033 = vpop.f32.mrf.mxu0
  %v3034 = vadd.f32 %v2585, %v3033
  %v3035 = vpop.f32.mrf.mxu0
  %v3036 = vadd.f32 %v2587, %v3035
  %3037 = vmatmul.bf16.gmra.mxu0 %v2861
  %v3038 = vpop.f32.mrf.mxu0
  %v3039 = vadd.f32 %v2589, %v3038
  %v3040 = vpop.f32.mrf.mxu0
  %v3041 = vadd.f32 %v2591, %v3040
  %3042 = vmatmul.bf16.gmra.mxu0 %v2864
  %v3043 = vpop.f32.mrf.mxu0
  %v3044 = vadd.f32 %v2593, %v3043
  %v3045 = vpop.f32.mrf.mxu0
  %v3046 = vadd.f32 %v2595, %v3045
  %3047 = vmatmul.bf16.gmra.mxu0 %v2867
  %v3048 = vpop.f32.mrf.mxu0
  %v3049 = vadd.f32 %v2597, %v3048
  %v3050 = vpop.f32.mrf.mxu0
  %v3051 = vadd.f32 %v2599, %v3050
  %3052 = vmatmul.bf16.gmra.mxu0 %v2870
  %v3053 = vpop.f32.mrf.mxu0
  %v3054 = vadd.f32 %v2601, %v3053
  %v3055 = vpop.f32.mrf.mxu0
  %v3056 = vadd.f32 %v2603, %v3055
  %3057 = vmatmul.bf16.gmra.mxu0 %v2873
  %v3058 = vpop.f32.mrf.mxu0
  %v3059 = vadd.f32 %v2605, %v3058
  %v3060 = vpop.f32.mrf.mxu0
  %v3061 = vadd.f32 %v2607, %v3060
  %3062 = vmatmul.bf16.gmra.mxu0 %v2876
  %v3063 = vpop.f32.mrf.mxu0
  %v3064 = vadd.f32 %v2609, %v3063
  %v3065 = vpop.f32.mrf.mxu0
  %v3066 = vadd.f32 %v2611, %v3065
  %3067 = vmatmul.bf16.gmra.mxu0 %v2879
  %v3068 = vpop.f32.mrf.mxu0
  %v3069 = vadd.f32 %v2613, %v3068
  %v3070 = vpop.f32.mrf.mxu0
  %v3071 = vadd.f32 %v2615, %v3070
  %3072 = vmatmul.bf16.gmra.mxu0 %v2882
  %v3073 = vpop.f32.mrf.mxu0
  %v3074 = vadd.f32 %v2617, %v3073
  %v3075 = vpop.f32.mrf.mxu0
  %v3076 = vadd.f32 %v2619, %v3075
  %3077 = vmatmul.bf16.gmra.mxu0 %v2885
  %v3078 = vpop.f32.mrf.mxu0
  %v3079 = vadd.f32 %v2621, %v3078
  %v3080 = vpop.f32.mrf.mxu0
  %v3081 = vadd.f32 %v2623, %v3080
  %3082 = vmatmul.bf16.gmra.mxu0 %v2888
  %v3083 = vpop.f32.mrf.mxu0
  %v3084 = vadd.f32 %v2625, %v3083
  %v3085 = vpop.f32.mrf.mxu0
  %v3086 = vadd.f32 %v2627, %v3085
  %3087 = vmatmul.bf16.gmra.mxu0 %v2891
  %v3088 = vpop.f32.mrf.mxu0
  %v3089 = vadd.f32 %v2629, %v3088
  %v3090 = vpop.f32.mrf.mxu0
  %v3091 = vadd.f32 %v2631, %v3090
  %3092 = vmatmul.bf16.gmra.mxu0 %v2894
  %v3093 = vpop.f32.mrf.mxu0
  %v3094 = vadd.f32 %v2633, %v3093
  %v3095 = vpop.f32.mrf.mxu0
  %v3096 = vadd.f32 %v2635, %v3095
  %3097 = vmatmul.bf16.gmra.mxu0 %v2897
  %v3098 = vpop.f32.mrf.mxu0
  %v3099 = vadd.f32 %v2637, %v3098
  %v3100 = vpop.f32.mrf.mxu0
  %v3101 = vadd.f32 %v2639, %v3100
  %3102 = vmatmul.bf16.gmra.mxu0 %v2900
  %v3103 = vpop.f32.mrf.mxu0
  %v3104 = vadd.f32 %v2641, %v3103
  %v3105 = vpop.f32.mrf.mxu0
  %v3106 = vadd.f32 %v2643, %v3105
  %3107 = vmatmul.bf16.gmra.mxu0 %v2903
  %v3108 = vpop.f32.mrf.mxu0
  %v3109 = vadd.f32 %v2645, %v3108
  %v3110 = vpop.f32.mrf.mxu0
  %v3111 = vadd.f32 %v2647, %v3110
  %3112 = vmatmul.bf16.gmra.mxu0 %v2906
  %v3113 = vpop.f32.mrf.mxu0
  %v3114 = vadd.f32 %v2649, %v3113
  %v3115 = vpop.f32.mrf.mxu0
  %v3116 = vadd.f32 %v2651, %v3115
  %3117 = vmatmul.bf16.gmra.mxu0 %v2909
  %v3118 = vpop.f32.mrf.mxu0
  %v3119 = vadd.f32 %v2653, %v3118
  %v3120 = vpop.f32.mrf.mxu0
  %v3121 = vadd.f32 %v2655, %v3120
  %3122 = vmatmul.bf16.gmra.mxu0 %v2912
  %v3123 = vpop.f32.mrf.mxu0
  %v3124 = vadd.f32 %v2657, %v3123
  %v3125 = vpop.f32.mrf.mxu0
  %v3126 = vadd.f32 %v2659, %v3125
  %3127 = vmatmul.bf16.gmra.mxu0 %v2915
  %v3128 = vpop.f32.mrf.mxu0
  %v3129 = vadd.f32 %v2661, %v3128
  %v3130 = vpop.f32.mrf.mxu0
  %3131 = vdwg.mxu0
  %3132 = vmatpush.bf16.msra.mxu0 %v2341
  %3133 = vmatpush.bf16.msra.mxu0 %v2339
  %3134 = vmatpush.bf16.msra.mxu0 %v2337
  %3135 = vmatpush.bf16.msra.mxu0 %v2335
  %3136 = vmatpush.bf16.msra.mxu0 %v2333
  %3137 = vmatpush.bf16.msra.mxu0 %v2331
  %3138 = vmatpush.bf16.msra.mxu0 %v2329
  %3139 = vmatpush.bf16.msra.mxu0 %v2327
  %3140 = vmatmul.bf16.gmra.mxu0 %v2859
  %v3141 = vpop.f32.mrf.mxu0
  %v3142 = vadd.f32 %v3034, %v3141
  %v3143 = vpop.f32.mrf.mxu0
  %v3144 = vadd.f32 %v3036, %v3143
  %3145 = vmatmul.bf16.gmra.mxu0 %v2862
  %v3146 = vpop.f32.mrf.mxu0
  %v3147 = vadd.f32 %v3039, %v3146
  %v3148 = vpop.f32.mrf.mxu0
  %v3149 = vadd.f32 %v3041, %v3148
  %3150 = vmatmul.bf16.gmra.mxu0 %v2865
  %v3151 = vpop.f32.mrf.mxu0
  %v3152 = vadd.f32 %v3044, %v3151
  %v3153 = vpop.f32.mrf.mxu0
  %v3154 = vadd.f32 %v3046, %v3153
  %3155 = vmatmul.bf16.gmra.mxu0 %v2868
  %v3156 = vpop.f32.mrf.mxu0
  %v3157 = vadd.f32 %v3049, %v3156
  %v3158 = vpop.f32.mrf.mxu0
  %v3159 = vadd.f32 %v3051, %v3158
  %3160 = vmatmul.bf16.gmra.mxu0 %v2871
  %v3161 = vpop.f32.mrf.mxu0
  %v3162 = vadd.f32 %v3054, %v3161
  %v3163 = vpop.f32.mrf.mxu0
  %v3164 = vadd.f32 %v3056, %v3163
  %3165 = vmatmul.bf16.gmra.mxu0 %v2874
  %v3166 = vpop.f32.mrf.mxu0
  %v3167 = vadd.f32 %v3059, %v3166
  %v3168 = vpop.f32.mrf.mxu0
  %v3169 = vadd.f32 %v3061, %v3168
  %3170 = vmatmul.bf16.gmra.mxu0 %v2877
  %v3171 = vpop.f32.mrf.mxu0
  %v3172 = vadd.f32 %v3064, %v3171
  %v3173 = vpop.f32.mrf.mxu0
  %v3174 = vadd.f32 %v3066, %v3173
  %3175 = vmatmul.bf16.gmra.mxu0 %v2880
  %v3176 = vpop.f32.mrf.mxu0
  %v3177 = vadd.f32 %v3069, %v3176
  %v3178 = vpop.f32.mrf.mxu0
  %v3179 = vadd.f32 %v3071, %v3178
  %3180 = vmatmul.bf16.gmra.mxu0 %v2883
  %v3181 = vpop.f32.mrf.mxu0
  %v3182 = vadd.f32 %v3074, %v3181
  %v3183 = vpop.f32.mrf.mxu0
  %v3184 = vadd.f32 %v3076, %v3183
  %3185 = vmatmul.bf16.gmra.mxu0 %v2886
  %v3186 = vpop.f32.mrf.mxu0
  %v3187 = vadd.f32 %v3079, %v3186
  %v3188 = vpop.f32.mrf.mxu0
  %v3189 = vadd.f32 %v3081, %v3188
  %3190 = vmatmul.bf16.gmra.mxu0 %v2889
  %v3191 = vpop.f32.mrf.mxu0
  %v3192 = vadd.f32 %v3084, %v3191
  %v3193 = vpop.f32.mrf.mxu0
  %v3194 = vadd.f32 %v3086, %v3193
  %3195 = vmatmul.bf16.gmra.mxu0 %v2892
  %v3196 = vpop.f32.mrf.mxu0
  %v3197 = vadd.f32 %v3089, %v3196
  %v3198 = vpop.f32.mrf.mxu0
  %v3199 = vadd.f32 %v3091, %v3198
  %3200 = vmatmul.bf16.gmra.mxu0 %v2895
  %v3201 = vpop.f32.mrf.mxu0
  %v3202 = vadd.f32 %v3094, %v3201
  %v3203 = vpop.f32.mrf.mxu0
  %v3204 = vadd.f32 %v3096, %v3203
  %3205 = vmatmul.bf16.gmra.mxu0 %v2898
  %v3206 = vpop.f32.mrf.mxu0
  %v3207 = vadd.f32 %v3099, %v3206
  %v3208 = vpop.f32.mrf.mxu0
  %v3209 = vadd.f32 %v3101, %v3208
  %3210 = vmatmul.bf16.gmra.mxu0 %v2901
  %v3211 = vpop.f32.mrf.mxu0
  %v3212 = vadd.f32 %v3104, %v3211
  %v3213 = vpop.f32.mrf.mxu0
  %v3214 = vadd.f32 %v3106, %v3213
  %3215 = vmatmul.bf16.gmra.mxu0 %v2904
  %v3216 = vpop.f32.mrf.mxu0
  %v3217 = vadd.f32 %v3109, %v3216
  %v3218 = vpop.f32.mrf.mxu0
  %v3219 = vadd.f32 %v3111, %v3218
  %3220 = vmatmul.bf16.gmra.mxu0 %v2907
  %v3221 = vpop.f32.mrf.mxu0
  %v3222 = vadd.f32 %v3114, %v3221
  %v3223 = vpop.f32.mrf.mxu0
  %v3224 = vadd.f32 %v3116, %v3223
  %3225 = vmatmul.bf16.gmra.mxu0 %v2910
  %v3226 = vpop.f32.mrf.mxu0
  %v3227 = vadd.f32 %v3119, %v3226
  %v3228 = vpop.f32.mrf.mxu0
  %v3229 = vadd.f32 %v3121, %v3228
  %3230 = vmatmul.bf16.gmra.mxu0 %v2913
  %v3231 = vpop.f32.mrf.mxu0
  %v3232 = vadd.f32 %v3124, %v3231
  %v3233 = vpop.f32.mrf.mxu0
  %v3234 = vadd.f32 %v3126, %v3233
  %3235 = vmatmul.bf16.gmra.mxu0 %v2916
  %v3236 = vpop.f32.mrf.mxu0
  %v3237 = vadd.f32 %v3129, %v3236
  %v3238 = vpop.f32.mrf.mxu0
  %3239 = vdwg.mxu0
  %3240 = vmatpush.bf16.msra.mxu0 0
  %3241 = vmatpush.bf16.msra.mxu0 0
  %3242 = vmatpush.bf16.msra.mxu0 0
  %3243 = vmatpush.bf16.msra.mxu0 0
  %3244 = vmatpush.bf16.msra.mxu0 %v3019
  %3245 = vmatpush.bf16.msra.mxu0 %v2347
  %3246 = vmatpush.bf16.msra.mxu0 %v2345
  %3247 = vmatpush.bf16.msra.mxu0 %v2343
  %3248 = vmatmul.bf16.gmra.mxu0 %v2959
  %v3249 = vpop.f32.mrf.mxu0
  %v3250 = vadd.f32 %v3142, %v3249
  %v3251 = vpop.f32.mrf.mxu0
  %v3252 = vadd.f32 %v3144, %v3251
  %3253 = vmatmul.bf16.gmra.mxu0 %v2962
  %v3254 = vpop.f32.mrf.mxu0
  %v3255 = vadd.f32 %v3147, %v3254
  %v3256 = vpop.f32.mrf.mxu0
  %v3257 = vadd.f32 %v3149, %v3256
  %3258 = vmatmul.bf16.gmra.mxu0 %v2965
  %v3259 = vpop.f32.mrf.mxu0
  %v3260 = vadd.f32 %v3152, %v3259
  %v3261 = vpop.f32.mrf.mxu0
  %v3262 = vadd.f32 %v3154, %v3261
  %3263 = vmatmul.bf16.gmra.mxu0 %v2968
  %v3264 = vpop.f32.mrf.mxu0
  %v3265 = vadd.f32 %v3157, %v3264
  %v3266 = vpop.f32.mrf.mxu0
  %v3267 = vadd.f32 %v3159, %v3266
  %3268 = vmatmul.bf16.gmra.mxu0 %v2971
  %v3269 = vpop.f32.mrf.mxu0
  %v3270 = vadd.f32 %v3162, %v3269
  %v3271 = vpop.f32.mrf.mxu0
  %v3272 = vadd.f32 %v3164, %v3271
  %3273 = vmatmul.bf16.gmra.mxu0 %v2974
  %v3274 = vpop.f32.mrf.mxu0
  %v3275 = vadd.f32 %v3167, %v3274
  %v3276 = vpop.f32.mrf.mxu0
  %v3277 = vadd.f32 %v3169, %v3276
  %3278 = vmatmul.bf16.gmra.mxu0 %v2977
  %v3279 = vpop.f32.mrf.mxu0
  %v3280 = vadd.f32 %v3172, %v3279
  %v3281 = vpop.f32.mrf.mxu0
  %v3282 = vadd.f32 %v3174, %v3281
  %3283 = vmatmul.bf16.gmra.mxu0 %v2980
  %v3284 = vpop.f32.mrf.mxu0
  %v3285 = vadd.f32 %v3177, %v3284
  %v3286 = vpop.f32.mrf.mxu0
  %v3287 = vadd.f32 %v3179, %v3286
  %3288 = vmatmul.bf16.gmra.mxu0 %v2983
  %v3289 = vpop.f32.mrf.mxu0
  %v3290 = vadd.f32 %v3182, %v3289
  %v3291 = vpop.f32.mrf.mxu0
  %v3292 = vadd.f32 %v3184, %v3291
  %3293 = vmatmul.bf16.gmra.mxu0 %v2986
  %v3294 = vpop.f32.mrf.mxu0
  %v3295 = vadd.f32 %v3187, %v3294
  %v3296 = vpop.f32.mrf.mxu0
  %v3297 = vadd.f32 %v3189, %v3296
  %3298 = vmatmul.bf16.gmra.mxu0 %v2989
  %v3299 = vpop.f32.mrf.mxu0
  %v3300 = vadd.f32 %v3192, %v3299
  %v3301 = vpop.f32.mrf.mxu0
  %v3302 = vadd.f32 %v3194, %v3301
  %3303 = vmatmul.bf16.gmra.mxu0 %v2992
  %v3304 = vpop.f32.mrf.mxu0
  %v3305 = vadd.f32 %v3197, %v3304
  %v3306 = vpop.f32.mrf.mxu0
  %v3307 = vadd.f32 %v3199, %v3306
  %3308 = vmatmul.bf16.gmra.mxu0 %v2995
  %v3309 = vpop.f32.mrf.mxu0
  %v3310 = vadd.f32 %v3202, %v3309
  %v3311 = vpop.f32.mrf.mxu0
  %v3312 = vadd.f32 %v3204, %v3311
  %3313 = vmatmul.bf16.gmra.mxu0 %v2998
  %v3314 = vpop.f32.mrf.mxu0
  %v3315 = vadd.f32 %v3207, %v3314
  %v3316 = vpop.f32.mrf.mxu0
  %v3317 = vadd.f32 %v3209, %v3316
  %3318 = vmatmul.bf16.gmra.mxu0 %v3001
  %v3319 = vpop.f32.mrf.mxu0
  %v3320 = vadd.f32 %v3212, %v3319
  %v3321 = vpop.f32.mrf.mxu0
  %v3322 = vadd.f32 %v3214, %v3321
  %3323 = vmatmul.bf16.gmra.mxu0 %v3004
  %v3324 = vpop.f32.mrf.mxu0
  %v3325 = vadd.f32 %v3217, %v3324
  %v3326 = vpop.f32.mrf.mxu0
  %v3327 = vadd.f32 %v3219, %v3326
  %3328 = vmatmul.bf16.gmra.mxu0 %v3007
  %v3329 = vpop.f32.mrf.mxu0
  %v3330 = vadd.f32 %v3222, %v3329
  %v3331 = vpop.f32.mrf.mxu0
  %v3332 = vadd.f32 %v3224, %v3331
  %3333 = vmatmul.bf16.gmra.mxu0 %v3010
  %v3334 = vpop.f32.mrf.mxu0
  %v3335 = vadd.f32 %v3227, %v3334
  %v3336 = vpop.f32.mrf.mxu0
  %v3337 = vadd.f32 %v3229, %v3336
  %3338 = vmatmul.bf16.gmra.mxu0 %v3013
  %v3339 = vpop.f32.mrf.mxu0
  %v3340 = vadd.f32 %v3232, %v3339
  %v3341 = vpop.f32.mrf.mxu0
  %v3342 = vadd.f32 %v3234, %v3341
  %3343 = vmatmul.bf16.gmra.mxu0 %v3016
  %v3344 = vpop.f32.mrf.mxu0
  %v3345 = vadd.f32 %v3237, %v3344
  %v3346 = vpop.f32.mrf.mxu0
  %3347 = vdwg.mxu0
  %3348 = vmatpush.bf16.msra.mxu0 %v2326
  %3349 = vmatpush.bf16.msra.mxu0 %v2324
  %3350 = vmatpush.bf16.msra.mxu0 %v2322
  %3351 = vmatpush.bf16.msra.mxu0 %v2320
  %3352 = vmatpush.bf16.msra.mxu0 %v2318
  %3353 = vmatpush.bf16.msra.mxu0 %v2316
  %3354 = vmatpush.bf16.msra.mxu0 %v2314
  %3355 = vmatpush.bf16.msra.mxu0 %v2312
  %3356 = vmatmul.bf16.gmra.mxu0 %v2858
  %v3357 = vpop.f32.mrf.mxu0
  %v3358 = vadd.f32 %v2586, %v3357
  %v3359 = vpop.f32.mrf.mxu0
  %v3360 = vadd.f32 %v2588, %v3359
  %3361 = vmatmul.bf16.gmra.mxu0 %v2861
  %v3362 = vpop.f32.mrf.mxu0
  %v3363 = vadd.f32 %v2590, %v3362
  %v3364 = vpop.f32.mrf.mxu0
  %v3365 = vadd.f32 %v2592, %v3364
  %3366 = vmatmul.bf16.gmra.mxu0 %v2864
  %v3367 = vpop.f32.mrf.mxu0
  %v3368 = vadd.f32 %v2594, %v3367
  %v3369 = vpop.f32.mrf.mxu0
  %v3370 = vadd.f32 %v2596, %v3369
  %3371 = vmatmul.bf16.gmra.mxu0 %v2867
  %v3372 = vpop.f32.mrf.mxu0
  %v3373 = vadd.f32 %v2598, %v3372
  %v3374 = vpop.f32.mrf.mxu0
  %v3375 = vadd.f32 %v2600, %v3374
  %3376 = vmatmul.bf16.gmra.mxu0 %v2870
  %v3377 = vpop.f32.mrf.mxu0
  %v3378 = vadd.f32 %v2602, %v3377
  %v3379 = vpop.f32.mrf.mxu0
  %v3380 = vadd.f32 %v2604, %v3379
  %3381 = vmatmul.bf16.gmra.mxu0 %v2873
  %v3382 = vpop.f32.mrf.mxu0
  %v3383 = vadd.f32 %v2606, %v3382
  %v3384 = vpop.f32.mrf.mxu0
  %v3385 = vadd.f32 %v2608, %v3384
  %3386 = vmatmul.bf16.gmra.mxu0 %v2876
  %v3387 = vpop.f32.mrf.mxu0
  %v3388 = vadd.f32 %v2610, %v3387
  %v3389 = vpop.f32.mrf.mxu0
  %v3390 = vadd.f32 %v2612, %v3389
  %3391 = vmatmul.bf16.gmra.mxu0 %v2879
  %v3392 = vpop.f32.mrf.mxu0
  %v3393 = vadd.f32 %v2614, %v3392
  %v3394 = vpop.f32.mrf.mxu0
  %v3395 = vadd.f32 %v2616, %v3394
  %3396 = vmatmul.bf16.gmra.mxu0 %v2882
  %v3397 = vpop.f32.mrf.mxu0
  %v3398 = vadd.f32 %v2618, %v3397
  %v3399 = vpop.f32.mrf.mxu0
  %v3400 = vadd.f32 %v2620, %v3399
  %3401 = vmatmul.bf16.gmra.mxu0 %v2885
  %v3402 = vpop.f32.mrf.mxu0
  %v3403 = vadd.f32 %v2622, %v3402
  %v3404 = vpop.f32.mrf.mxu0
  %v3405 = vadd.f32 %v2624, %v3404
  %3406 = vmatmul.bf16.gmra.mxu0 %v2888
  %v3407 = vpop.f32.mrf.mxu0
  %v3408 = vadd.f32 %v2626, %v3407
  %v3409 = vpop.f32.mrf.mxu0
  %v3410 = vadd.f32 %v2628, %v3409
  %3411 = vmatmul.bf16.gmra.mxu0 %v2891
  %v3412 = vpop.f32.mrf.mxu0
  %v3413 = vadd.f32 %v2630, %v3412
  %v3414 = vpop.f32.mrf.mxu0
  %v3415 = vadd.f32 %v2632, %v3414
  %3416 = vmatmul.bf16.gmra.mxu0 %v2894
  %v3417 = vpop.f32.mrf.mxu0
  %v3418 = vadd.f32 %v2634, %v3417
  %v3419 = vpop.f32.mrf.mxu0
  %v3420 = vadd.f32 %v2636, %v3419
  %3421 = vmatmul.bf16.gmra.mxu0 %v2897
  %v3422 = vpop.f32.mrf.mxu0
  %v3423 = vadd.f32 %v2638, %v3422
  %v3424 = vpop.f32.mrf.mxu0
  %v3425 = vadd.f32 %v2640, %v3424
  %3426 = vmatmul.bf16.gmra.mxu0 %v2900
  %v3427 = vpop.f32.mrf.mxu0
  %v3428 = vadd.f32 %v2642, %v3427
  %v3429 = vpop.f32.mrf.mxu0
  %v3430 = vadd.f32 %v2644, %v3429
  %3431 = vmatmul.bf16.gmra.mxu0 %v2903
  %v3432 = vpop.f32.mrf.mxu0
  %v3433 = vadd.f32 %v2646, %v3432
  %v3434 = vpop.f32.mrf.mxu0
  %v3435 = vadd.f32 %v2648, %v3434
  %3436 = vmatmul.bf16.gmra.mxu0 %v2906
  %v3437 = vpop.f32.mrf.mxu0
  %v3438 = vadd.f32 %v2650, %v3437
  %v3439 = vpop.f32.mrf.mxu0
  %v3440 = vadd.f32 %v2652, %v3439
  %3441 = vmatmul.bf16.gmra.mxu0 %v2909
  %v3442 = vpop.f32.mrf.mxu0
  %v3443 = vadd.f32 %v2654, %v3442
  %v3444 = vpop.f32.mrf.mxu0
  %v3445 = vadd.f32 %v2656, %v3444
  %3446 = vmatmul.bf16.gmra.mxu0 %v2912
  %v3447 = vpop.f32.mrf.mxu0
  %v3448 = vadd.f32 %v2658, %v3447
  %v3449 = vpop.f32.mrf.mxu0
  %v3450 = vadd.f32 %v2660, %v3449
  %3451 = vmatmul.bf16.gmra.mxu0 %v2915
  %v3452 = vpop.f32.mrf.mxu0
  %v3453 = vadd.f32 %v2662, %v3452
  %v3454 = vpop.f32.mrf.mxu0
  %3455 = vdwg.mxu0
  %3456 = vmatpush.bf16.msra.mxu0 %v2342
  %3457 = vmatpush.bf16.msra.mxu0 %v2340
  %3458 = vmatpush.bf16.msra.mxu0 %v2338
  %3459 = vmatpush.bf16.msra.mxu0 %v2336
  %3460 = vmatpush.bf16.msra.mxu0 %v2334
  %3461 = vmatpush.bf16.msra.mxu0 %v2332
  %3462 = vmatpush.bf16.msra.mxu0 %v2330
  %3463 = vmatpush.bf16.msra.mxu0 %v2328
  %3464 = vmatmul.bf16.gmra.mxu0 %v2859
  %v3465 = vpop.f32.mrf.mxu0
  %v3466 = vadd.f32 %v3358, %v3465
  %v3467 = vpop.f32.mrf.mxu0
  %v3468 = vadd.f32 %v3360, %v3467
  %3469 = vmatmul.bf16.gmra.mxu0 %v2862
  %v3470 = vpop.f32.mrf.mxu0
  %v3471 = vadd.f32 %v3363, %v3470
  %v3472 = vpop.f32.mrf.mxu0
  %v3473 = vadd.f32 %v3365, %v3472
  %3474 = vmatmul.bf16.gmra.mxu0 %v2865
  %v3475 = vpop.f32.mrf.mxu0
  %v3476 = vadd.f32 %v3368, %v3475
  %v3477 = vpop.f32.mrf.mxu0
  %v3478 = vadd.f32 %v3370, %v3477
  %3479 = vmatmul.bf16.gmra.mxu0 %v2868
  %v3480 = vpop.f32.mrf.mxu0
  %v3481 = vadd.f32 %v3373, %v3480
  %v3482 = vpop.f32.mrf.mxu0
  %v3483 = vadd.f32 %v3375, %v3482
  %3484 = vmatmul.bf16.gmra.mxu0 %v2871
  %v3485 = vpop.f32.mrf.mxu0
  %v3486 = vadd.f32 %v3378, %v3485
  %v3487 = vpop.f32.mrf.mxu0
  %v3488 = vadd.f32 %v3380, %v3487
  %3489 = vmatmul.bf16.gmra.mxu0 %v2874
  %v3490 = vpop.f32.mrf.mxu0
  %v3491 = vadd.f32 %v3383, %v3490
  %v3492 = vpop.f32.mrf.mxu0
  %v3493 = vadd.f32 %v3385, %v3492
  %3494 = vmatmul.bf16.gmra.mxu0 %v2877
  %v3495 = vpop.f32.mrf.mxu0
  %v3496 = vadd.f32 %v3388, %v3495
  %v3497 = vpop.f32.mrf.mxu0
  %v3498 = vadd.f32 %v3390, %v3497
  %3499 = vmatmul.bf16.gmra.mxu0 %v2880
  %v3500 = vpop.f32.mrf.mxu0
  %v3501 = vadd.f32 %v3393, %v3500
  %v3502 = vpop.f32.mrf.mxu0
  %v3503 = vadd.f32 %v3395, %v3502
  %3504 = vmatmul.bf16.gmra.mxu0 %v2883
  %v3505 = vpop.f32.mrf.mxu0
  %v3506 = vadd.f32 %v3398, %v3505
  %v3507 = vpop.f32.mrf.mxu0
  %v3508 = vadd.f32 %v3400, %v3507
  %3509 = vmatmul.bf16.gmra.mxu0 %v2886
  %v3510 = vpop.f32.mrf.mxu0
  %v3511 = vadd.f32 %v3403, %v3510
  %v3512 = vpop.f32.mrf.mxu0
  %v3513 = vadd.f32 %v3405, %v3512
  %3514 = vmatmul.bf16.gmra.mxu0 %v2889
  %v3515 = vpop.f32.mrf.mxu0
  %v3516 = vadd.f32 %v3408, %v3515
  %v3517 = vpop.f32.mrf.mxu0
  %v3518 = vadd.f32 %v3410, %v3517
  %3519 = vmatmul.bf16.gmra.mxu0 %v2892
  %v3520 = vpop.f32.mrf.mxu0
  %v3521 = vadd.f32 %v3413, %v3520
  %v3522 = vpop.f32.mrf.mxu0
  %v3523 = vadd.f32 %v3415, %v3522
  %3524 = vmatmul.bf16.gmra.mxu0 %v2895
  %v3525 = vpop.f32.mrf.mxu0
  %v3526 = vadd.f32 %v3418, %v3525
  %v3527 = vpop.f32.mrf.mxu0
  %v3528 = vadd.f32 %v3420, %v3527
  %3529 = vmatmul.bf16.gmra.mxu0 %v2898
  %v3530 = vpop.f32.mrf.mxu0
  %v3531 = vadd.f32 %v3423, %v3530
  %v3532 = vpop.f32.mrf.mxu0
  %v3533 = vadd.f32 %v3425, %v3532
  %3534 = vmatmul.bf16.gmra.mxu0 %v2901
  %v3535 = vpop.f32.mrf.mxu0
  %v3536 = vadd.f32 %v3428, %v3535
  %v3537 = vpop.f32.mrf.mxu0
  %v3538 = vadd.f32 %v3430, %v3537
  %3539 = vmatmul.bf16.gmra.mxu0 %v2904
  %v3540 = vpop.f32.mrf.mxu0
  %v3541 = vadd.f32 %v3433, %v3540
  %v3542 = vpop.f32.mrf.mxu0
  %v3543 = vadd.f32 %v3435, %v3542
  %3544 = vmatmul.bf16.gmra.mxu0 %v2907
  %v3545 = vpop.f32.mrf.mxu0
  %v3546 = vadd.f32 %v3438, %v3545
  %v3547 = vpop.f32.mrf.mxu0
  %v3548 = vadd.f32 %v3440, %v3547
  %3549 = vmatmul.bf16.gmra.mxu0 %v2910
  %v3550 = vpop.f32.mrf.mxu0
  %v3551 = vadd.f32 %v3443, %v3550
  %v3552 = vpop.f32.mrf.mxu0
  %v3553 = vadd.f32 %v3445, %v3552
  %3554 = vmatmul.bf16.gmra.mxu0 %v2913
  %v3555 = vpop.f32.mrf.mxu0
  %v3556 = vadd.f32 %v3448, %v3555
  %v3557 = vpop.f32.mrf.mxu0
  %v3558 = vadd.f32 %v3450, %v3557
  %3559 = vmatmul.bf16.gmra.mxu0 %v2916
  %v3560 = vpop.f32.mrf.mxu0
  %v3561 = vadd.f32 %v3453, %v3560
  %v3562 = vpop.f32.mrf.mxu0
  %3563 = vdwg.mxu0
  %3564 = vmatpush.bf16.msra.mxu0 0
  %3565 = vmatpush.bf16.msra.mxu0 0
  %3566 = vmatpush.bf16.msra.mxu0 0
  %3567 = vmatpush.bf16.msra.mxu0 0
  %3568 = vmatpush.bf16.msra.mxu0 %v3022
  %3569 = vmatpush.bf16.msra.mxu0 %v2348
  %3570 = vmatpush.bf16.msra.mxu0 %v2346
  %3571 = vmatpush.bf16.msra.mxu0 %v2344
  %3572 = vmatmul.bf16.gmra.mxu0 %v2959
  %v3573 = vpop.f32.mrf.mxu0
  %v3574 = vadd.f32 %v3466, %v3573
  %v3575 = vpop.f32.mrf.mxu0
  %v3576 = vadd.f32 %v3468, %v3575
  %3577 = vmatmul.bf16.gmra.mxu0 %v2962
  %v3578 = vpop.f32.mrf.mxu0
  %v3579 = vadd.f32 %v3471, %v3578
  %v3580 = vpop.f32.mrf.mxu0
  %v3581 = vadd.f32 %v3473, %v3580
  %3582 = vmatmul.bf16.gmra.mxu0 %v2965
  %v3583 = vpop.f32.mrf.mxu0
  %v3584 = vadd.f32 %v3476, %v3583
  %v3585 = vpop.f32.mrf.mxu0
  %v3586 = vadd.f32 %v3478, %v3585
  %3587 = vmatmul.bf16.gmra.mxu0 %v2968
  %v3588 = vpop.f32.mrf.mxu0
  %v3589 = vadd.f32 %v3481, %v3588
  %v3590 = vpop.f32.mrf.mxu0
  %v3591 = vadd.f32 %v3483, %v3590
  %3592 = vmatmul.bf16.gmra.mxu0 %v2971
  %v3593 = vpop.f32.mrf.mxu0
  %v3594 = vadd.f32 %v3486, %v3593
  %v3595 = vpop.f32.mrf.mxu0
  %v3596 = vadd.f32 %v3488, %v3595
  %3597 = vmatmul.bf16.gmra.mxu0 %v2974
  %v3598 = vpop.f32.mrf.mxu0
  %v3599 = vadd.f32 %v3491, %v3598
  %v3600 = vpop.f32.mrf.mxu0
  %v3601 = vadd.f32 %v3493, %v3600
  %3602 = vmatmul.bf16.gmra.mxu0 %v2977
  %v3603 = vpop.f32.mrf.mxu0
  %v3604 = vadd.f32 %v3496, %v3603
  %v3605 = vpop.f32.mrf.mxu0
  %v3606 = vadd.f32 %v3498, %v3605
  %3607 = vmatmul.bf16.gmra.mxu0 %v2980
  %v3608 = vpop.f32.mrf.mxu0
  %v3609 = vadd.f32 %v3501, %v3608
  %v3610 = vpop.f32.mrf.mxu0
  %v3611 = vadd.f32 %v3503, %v3610
  %3612 = vmatmul.bf16.gmra.mxu0 %v2983
  %v3613 = vpop.f32.mrf.mxu0
  %v3614 = vadd.f32 %v3506, %v3613
  %v3615 = vpop.f32.mrf.mxu0
  %v3616 = vadd.f32 %v3508, %v3615
  %3617 = vmatmul.bf16.gmra.mxu0 %v2986
  %v3618 = vpop.f32.mrf.mxu0
  %v3619 = vadd.f32 %v3511, %v3618
  %v3620 = vpop.f32.mrf.mxu0
  %v3621 = vadd.f32 %v3513, %v3620
  %3622 = vmatmul.bf16.gmra.mxu0 %v2989
  %v3623 = vpop.f32.mrf.mxu0
  %v3624 = vadd.f32 %v3516, %v3623
  %v3625 = vpop.f32.mrf.mxu0
  %v3626 = vadd.f32 %v3518, %v3625
  %3627 = vmatmul.bf16.gmra.mxu0 %v2992
  %v3628 = vpop.f32.mrf.mxu0
  %v3629 = vadd.f32 %v3521, %v3628
  %v3630 = vpop.f32.mrf.mxu0
  %v3631 = vadd.f32 %v3523, %v3630
  %3632 = vmatmul.bf16.gmra.mxu0 %v2995
  %v3633 = vpop.f32.mrf.mxu0
  %v3634 = vadd.f32 %v3526, %v3633
  %v3635 = vpop.f32.mrf.mxu0
  %v3636 = vadd.f32 %v3528, %v3635
  %3637 = vmatmul.bf16.gmra.mxu0 %v2998
  %v3638 = vpop.f32.mrf.mxu0
  %v3639 = vadd.f32 %v3531, %v3638
  %v3640 = vpop.f32.mrf.mxu0
  %v3641 = vadd.f32 %v3533, %v3640
  %3642 = vmatmul.bf16.gmra.mxu0 %v3001
  %v3643 = vpop.f32.mrf.mxu0
  %v3644 = vadd.f32 %v3536, %v3643
  %v3645 = vpop.f32.mrf.mxu0
  %v3646 = vadd.f32 %v3538, %v3645
  %3647 = vmatmul.bf16.gmra.mxu0 %v3004
  %v3648 = vpop.f32.mrf.mxu0
  %v3649 = vadd.f32 %v3541, %v3648
  %v3650 = vpop.f32.mrf.mxu0
  %v3651 = vadd.f32 %v3543, %v3650
  %3652 = vmatmul.bf16.gmra.mxu0 %v3007
  %v3653 = vpop.f32.mrf.mxu0
  %v3654 = vadd.f32 %v3546, %v3653
  %v3655 = vpop.f32.mrf.mxu0
  %v3656 = vadd.f32 %v3548, %v3655
  %3657 = vmatmul.bf16.gmra.mxu0 %v3010
  %v3658 = vpop.f32.mrf.mxu0
  %v3659 = vadd.f32 %v3551, %v3658
  %v3660 = vpop.f32.mrf.mxu0
  %v3661 = vadd.f32 %v3553, %v3660
  %3662 = vmatmul.bf16.gmra.mxu0 %v3013
  %v3663 = vpop.f32.mrf.mxu0
  %v3664 = vadd.f32 %v3556, %v3663
  %v3665 = vpop.f32.mrf.mxu0
  %v3666 = vadd.f32 %v3558, %v3665
  %3667 = vmatmul.bf16.gmra.mxu0 %v3016
  %v3668 = vpop.f32.mrf.mxu0
  %v3669 = vadd.f32 %v3561, %v3668
  %v3670 = vpop.f32.mrf.mxu0
  %3671 = vdwg.mxu0
  %v3672 = vld [vmem:[%s7] sm:$0xff]
  %v3673 = vld [vmem:[%s7 + $0x8] sm:$0xff]
  %v3674 = vld [vmem:[%s7 + $0x10] sm:$0xff]
  %v3675 = vld [vmem:[%s7 + $0x18] sm:$0xff]
  %v3676 = vld [vmem:[%s7 + $0x20] sm:$0xff]
  %v3677 = vld [vmem:[%s7 + $0x28] sm:$0xff]
  %v3678 = vld [vmem:[%s7 + $0x30] sm:$0xff]
  %v3679 = vld [vmem:[%s7 + $0x38] sm:$0xff]
  %v3680 = vld [vmem:[%s7 + $0x40] sm:$0xff]
  %v3681 = vld [vmem:[%s7 + $0x48] sm:$0xff]
  %v3682 = vld [vmem:[%s7 + $0x50] sm:$0xff]
  %v3683 = vld [vmem:[%s7 + $0x58] sm:$0xff]
  %v3684 = vld [vmem:[%s7 + $0x60] sm:$0xff]
  %v3685 = vld [vmem:[%s7 + $0x68] sm:$0xff]
  %v3686 = vld [vmem:[%s7 + $0x70] sm:$0xff]
  %v3687 = vld [vmem:[%s7 + $0x78] sm:$0xff]
  %v3688 = vld [vmem:[%s7 + $0x80] sm:$0xff]
  %v3689 = vld [vmem:[%s7 + $0x88] sm:$0xff]
  %v3690 = vld [vmem:[%s7 + $0x90] sm:$0xff]
  %v3691 = vld [vmem:[%s7 + $0x98] sm:$0xff]
  %v3692 = vld [vmem:[%s7 + $0xa0] sm:$0xff]
  %v3693 = vld [vmem:[%s7 + $0xa8] sm:$0xff]
  %v3694 = vld [vmem:[%s7 + $0xb0] sm:$0xff]
  %v3695 = vld [vmem:[%s7 + $0xb8] sm:$0xff]
  %v3696 = vld [vmem:[%s7 + $0xc0] sm:$0xff]
  %v3697 = vld [vmem:[%s7 + $0xc8] sm:$0xff]
  %v3698 = vld [vmem:[%s7 + $0xd0] sm:$0xff]
  %v3699 = vld [vmem:[%s7 + $0xd8] sm:$0xff]
  %v3700 = vld [vmem:[%s7 + $0xe0] sm:$0xff]
  %v3701 = vld [vmem:[%s7 + $0xe8] sm:$0xff]
  %v3702 = vld [vmem:[%s7 + $0xf0] sm:$0xff]
  %v3703 = vld [vmem:[%s7 + $0xf8] sm:$0xff]
  %v3704 = vld [vmem:[%s7 + $0x100] sm:$0xff]
  %v3705 = vld [vmem:[%s7 + $0x108] sm:$0xff]
  %v3706 = vld [vmem:[%s7 + $0x110] sm:$0xff]
  %v3707 = vld [vmem:[%s7 + $0x118] sm:$0xff]
  %v3708 = vld [vmem:[%s7 + $0x120] sm:$0xff]
  %v3709 = vld [vmem:[%s7 + $0x128] sm:$0xff]
  %v3710 = vld [vmem:[%s7 + $0x130] sm:$0xff]
  %3712 = vset.pattern.permute.xlu0 0
  %3713 = vperm.xlu0 %3712, %v3672
  %v3714 = vpop.permute.xlu0 %3713
  %3717 = vset.pattern.permute.xlu0 0
  %3718 = vperm.xlu0 %3717, %v3673
  %v3719 = vpop.permute.xlu0 %3718
  %3722 = vset.pattern.permute.xlu0 0
  %3723 = vperm.xlu0 %3722, %v3674
  %v3724 = vpop.permute.xlu0 %3723
  %3727 = vset.pattern.permute.xlu0 0
  %3728 = vperm.xlu0 %3727, %v3675
  %v3729 = vpop.permute.xlu0 %3728
  %3732 = vset.pattern.permute.xlu0 0
  %3733 = vperm.xlu0 %3732, %v3676
  %v3734 = vpop.permute.xlu0 %3733
  %3737 = vset.pattern.permute.xlu0 0
  %3738 = vperm.xlu0 %3737, %v3677
  %v3739 = vpop.permute.xlu0 %3738
  %3742 = vset.pattern.permute.xlu0 0
  %3743 = vperm.xlu0 %3742, %v3678
  %v3744 = vpop.permute.xlu0 %3743
  %3747 = vset.pattern.permute.xlu0 0
  %3748 = vperm.xlu0 %3747, %v3679
  %v3749 = vpop.permute.xlu0 %3748
  %3752 = vset.pattern.permute.xlu0 0
  %3753 = vperm.xlu0 %3752, %v3680
  %v3754 = vpop.permute.xlu0 %3753
  %3757 = vset.pattern.permute.xlu0 0
  %3758 = vperm.xlu0 %3757, %v3681
  %v3759 = vpop.permute.xlu0 %3758
  %3762 = vset.pattern.permute.xlu0 0
  %3763 = vperm.xlu0 %3762, %v3682
  %v3764 = vpop.permute.xlu0 %3763
  %3767 = vset.pattern.permute.xlu0 0
  %3768 = vperm.xlu0 %3767, %v3683
  %v3769 = vpop.permute.xlu0 %3768
  %3772 = vset.pattern.permute.xlu0 0
  %3773 = vperm.xlu0 %3772, %v3684
  %v3774 = vpop.permute.xlu0 %3773
  %3777 = vset.pattern.permute.xlu0 0
  %3778 = vperm.xlu0 %3777, %v3685
  %v3779 = vpop.permute.xlu0 %3778
  %3782 = vset.pattern.permute.xlu0 0
  %3783 = vperm.xlu0 %3782, %v3686
  %v3784 = vpop.permute.xlu0 %3783
  %3787 = vset.pattern.permute.xlu0 0
  %3788 = vperm.xlu0 %3787, %v3687
  %v3789 = vpop.permute.xlu0 %3788
  %3792 = vset.pattern.permute.xlu0 0
  %3793 = vperm.xlu0 %3792, %v3688
  %v3794 = vpop.permute.xlu0 %3793
  %3797 = vset.pattern.permute.xlu0 0
  %3798 = vperm.xlu0 %3797, %v3689
  %v3799 = vpop.permute.xlu0 %3798
  %3802 = vset.pattern.permute.xlu0 0
  %3803 = vperm.xlu0 %3802, %v3690
  %v3804 = vpop.permute.xlu0 %3803
  %3807 = vset.pattern.permute.xlu0 0
  %3808 = vperm.xlu0 %3807, %v3691
  %v3809 = vpop.permute.xlu0 %3808
  %3812 = vset.pattern.permute.xlu0 0
  %3813 = vperm.xlu0 %3812, %v3692
  %v3814 = vpop.permute.xlu0 %3813
  %3817 = vset.pattern.permute.xlu0 0
  %3818 = vperm.xlu0 %3817, %v3693
  %v3819 = vpop.permute.xlu0 %3818
  %3822 = vset.pattern.permute.xlu0 0
  %3823 = vperm.xlu0 %3822, %v3694
  %v3824 = vpop.permute.xlu0 %3823
  %3827 = vset.pattern.permute.xlu0 0
  %3828 = vperm.xlu0 %3827, %v3695
  %v3829 = vpop.permute.xlu0 %3828
  %3832 = vset.pattern.permute.xlu0 0
  %3833 = vperm.xlu0 %3832, %v3696
  %v3834 = vpop.permute.xlu0 %3833
  %3837 = vset.pattern.permute.xlu0 0
  %3838 = vperm.xlu0 %3837, %v3697
  %v3839 = vpop.permute.xlu0 %3838
  %3842 = vset.pattern.permute.xlu0 0
  %3843 = vperm.xlu0 %3842, %v3698
  %v3844 = vpop.permute.xlu0 %3843
  %3847 = vset.pattern.permute.xlu0 0
  %3848 = vperm.xlu0 %3847, %v3699
  %v3849 = vpop.permute.xlu0 %3848
  %3852 = vset.pattern.permute.xlu0 0
  %3853 = vperm.xlu0 %3852, %v3700
  %v3854 = vpop.permute.xlu0 %3853
  %3857 = vset.pattern.permute.xlu0 0
  %3858 = vperm.xlu0 %3857, %v3701
  %v3859 = vpop.permute.xlu0 %3858
  %3862 = vset.pattern.permute.xlu0 0
  %3863 = vperm.xlu0 %3862, %v3702
  %v3864 = vpop.permute.xlu0 %3863
  %3867 = vset.pattern.permute.xlu0 0
  %3868 = vperm.xlu0 %3867, %v3703
  %v3869 = vpop.permute.xlu0 %3868
  %3872 = vset.pattern.permute.xlu0 0
  %3873 = vperm.xlu0 %3872, %v3704
  %v3874 = vpop.permute.xlu0 %3873
  %3877 = vset.pattern.permute.xlu0 0
  %3878 = vperm.xlu0 %3877, %v3705
  %v3879 = vpop.permute.xlu0 %3878
  %3882 = vset.pattern.permute.xlu0 0
  %3883 = vperm.xlu0 %3882, %v3706
  %v3884 = vpop.permute.xlu0 %3883
  %3887 = vset.pattern.permute.xlu0 0
  %3888 = vperm.xlu0 %3887, %v3707
  %v3889 = vpop.permute.xlu0 %3888
  %3892 = vset.pattern.permute.xlu0 0
  %3893 = vperm.xlu0 %3892, %v3708
  %v3894 = vpop.permute.xlu0 %3893
  %3897 = vset.pattern.permute.xlu0 0
  %3898 = vperm.xlu0 %3897, %v3709
  %v3899 = vpop.permute.xlu0 %3898
  %3902 = vset.pattern.permute.xlu0 0
  %3903 = vperm.xlu0 %3902, %v3710
  %v3904 = vpop.permute.xlu0 %3903
  %v3906 = vadd.f32 %v3250, %v3714
  %v3907 = vadd.f32 %v3574, %v3714
  %v3908 = vadd.f32 %v3252, %v3719
  %v3909 = vadd.f32 %v3576, %v3719
  %v3910 = vadd.f32 %v3255, %v3724
  %v3911 = vadd.f32 %v3579, %v3724
  %v3912 = vadd.f32 %v3257, %v3729
  %v3913 = vadd.f32 %v3581, %v3729
  %v3914 = vadd.f32 %v3260, %v3734
  %v3915 = vadd.f32 %v3584, %v3734
  %v3916 = vadd.f32 %v3262, %v3739
  %v3917 = vadd.f32 %v3586, %v3739
  %v3918 = vadd.f32 %v3265, %v3744
  %v3919 = vadd.f32 %v3589, %v3744
  %v3920 = vadd.f32 %v3267, %v3749
  %v3921 = vadd.f32 %v3591, %v3749
  %v3922 = vadd.f32 %v3270, %v3754
  %v3923 = vadd.f32 %v3594, %v3754
  %v3924 = vadd.f32 %v3272, %v3759
  %v3925 = vadd.f32 %v3596, %v3759
  %v3926 = vadd.f32 %v3275, %v3764
  %v3927 = vadd.f32 %v3599, %v3764
  %v3928 = vadd.f32 %v3277, %v3769
  %v3929 = vadd.f32 %v3601, %v3769
  %v3930 = vadd.f32 %v3280, %v3774
  %v3931 = vadd.f32 %v3604, %v3774
  %v3932 = vadd.f32 %v3282, %v3779
  %v3933 = vadd.f32 %v3606, %v3779
  %v3934 = vadd.f32 %v3285, %v3784
  %v3935 = vadd.f32 %v3609, %v3784
  %v3936 = vadd.f32 %v3287, %v3789
  %v3937 = vadd.f32 %v3611, %v3789
  %v3938 = vadd.f32 %v3290, %v3794
  %v3939 = vadd.f32 %v3614, %v3794
  %v3940 = vadd.f32 %v3292, %v3799
  %v3941 = vadd.f32 %v3616, %v3799
  %v3942 = vadd.f32 %v3295, %v3804
  %v3943 = vadd.f32 %v3619, %v3804
  %v3944 = vadd.f32 %v3297, %v3809
  %v3945 = vadd.f32 %v3621, %v3809
  %v3946 = vadd.f32 %v3300, %v3814
  %v3947 = vadd.f32 %v3624, %v3814
  %v3948 = vadd.f32 %v3302, %v3819
  %v3949 = vadd.f32 %v3626, %v3819
  %v3950 = vadd.f32 %v3305, %v3824
  %v3951 = vadd.f32 %v3629, %v3824
  %v3952 = vadd.f32 %v3307, %v3829
  %v3953 = vadd.f32 %v3631, %v3829
  %v3954 = vadd.f32 %v3310, %v3834
  %v3955 = vadd.f32 %v3634, %v3834
  %v3956 = vadd.f32 %v3312, %v3839
  %v3957 = vadd.f32 %v3636, %v3839
  %v3958 = vadd.f32 %v3315, %v3844
  %v3959 = vadd.f32 %v3639, %v3844
  %v3960 = vadd.f32 %v3317, %v3849
  %v3961 = vadd.f32 %v3641, %v3849
  %v3962 = vadd.f32 %v3320, %v3854
  %v3963 = vadd.f32 %v3644, %v3854
  %v3964 = vadd.f32 %v3322, %v3859
  %v3965 = vadd.f32 %v3646, %v3859
  %v3966 = vadd.f32 %v3325, %v3864
  %v3967 = vadd.f32 %v3649, %v3864
  %v3968 = vadd.f32 %v3327, %v3869
  %v3969 = vadd.f32 %v3651, %v3869
  %v3970 = vadd.f32 %v3330, %v3874
  %v3971 = vadd.f32 %v3654, %v3874
  %v3972 = vadd.f32 %v3332, %v3879
  %v3973 = vadd.f32 %v3656, %v3879
  %v3974 = vadd.f32 %v3335, %v3884
  %v3975 = vadd.f32 %v3659, %v3884
  %v3976 = vadd.f32 %v3337, %v3889
  %v3977 = vadd.f32 %v3661, %v3889
  %v3978 = vadd.f32 %v3340, %v3894
  %v3979 = vadd.f32 %v3664, %v3894
  %v3980 = vadd.f32 %v3342, %v3899
  %v3981 = vadd.f32 %v3666, %v3899
  %v3982 = vadd.f32 %v3345, %v3904
  %v3983 = vadd.f32 %v3669, %v3904
  %v3984 = vmax.f32 %v3906, 0.0
  %v3985 = vmax.f32 %v3907, 0.0
  %v3986 = vmax.f32 %v3908, 0.0
  %v3987 = vmax.f32 %v3909, 0.0
  %v3988 = vmax.f32 %v3910, 0.0
  %v3989 = vmax.f32 %v3911, 0.0
  %v3990 = vmax.f32 %v3912, 0.0
  %v3991 = vmax.f32 %v3913, 0.0
  %v3992 = vmax.f32 %v3914, 0.0
  %v3993 = vmax.f32 %v3915, 0.0
  %v3994 = vmax.f32 %v3916, 0.0
  %v3995 = vmax.f32 %v3917, 0.0
  %v3996 = vmax.f32 %v3918, 0.0
  %v3997 = vmax.f32 %v3919, 0.0
  %v3998 = vmax.f32 %v3920, 0.0
  %v3999 = vmax.f32 %v3921, 0.0
  %v4000 = vmax.f32 %v3922, 0.0
  %v4001 = vmax.f32 %v3923, 0.0
  %v4002 = vmax.f32 %v3924, 0.0
  %v4003 = vmax.f32 %v3925, 0.0
  %v4004 = vmax.f32 %v3926, 0.0
  %v4005 = vmax.f32 %v3927, 0.0
  %v4006 = vmax.f32 %v3928, 0.0
  %v4007 = vmax.f32 %v3929, 0.0
  %v4008 = vmax.f32 %v3930, 0.0
  %v4009 = vmax.f32 %v3931, 0.0
  %v4010 = vmax.f32 %v3932, 0.0
  %v4011 = vmax.f32 %v3933, 0.0
  %v4012 = vmax.f32 %v3934, 0.0
  %v4013 = vmax.f32 %v3935, 0.0
  %v4014 = vmax.f32 %v3936, 0.0
  %v4015 = vmax.f32 %v3937, 0.0
  %v4016 = vmax.f32 %v3938, 0.0
  %v4017 = vmax.f32 %v3939, 0.0
  %v4018 = vmax.f32 %v3940, 0.0
  %v4019 = vmax.f32 %v3941, 0.0
  %v4020 = vmax.f32 %v3942, 0.0
  %v4021 = vmax.f32 %v3943, 0.0
  %v4022 = vmax.f32 %v3944, 0.0
  %v4023 = vmax.f32 %v3945, 0.0
  %v4024 = vmax.f32 %v3946, 0.0
  %v4025 = vmax.f32 %v3947, 0.0
  %v4026 = vmax.f32 %v3948, 0.0
  %v4027 = vmax.f32 %v3949, 0.0
  %v4028 = vmax.f32 %v3950, 0.0
  %v4029 = vmax.f32 %v3951, 0.0
  %v4030 = vmax.f32 %v3952, 0.0
  %v4031 = vmax.f32 %v3953, 0.0
  %v4032 = vmax.f32 %v3954, 0.0
  %v4033 = vmax.f32 %v3955, 0.0
  %v4034 = vmax.f32 %v3956, 0.0
  %v4035 = vmax.f32 %v3957, 0.0
  %v4036 = vmax.f32 %v3958, 0.0
  %v4037 = vmax.f32 %v3959, 0.0
  %v4038 = vmax.f32 %v3960, 0.0
  %v4039 = vmax.f32 %v3961, 0.0
  %v4040 = vmax.f32 %v3962, 0.0
  %v4041 = vmax.f32 %v3963, 0.0
  %v4042 = vmax.f32 %v3964, 0.0
  %v4043 = vmax.f32 %v3965, 0.0
  %v4044 = vmax.f32 %v3966, 0.0
  %v4045 = vmax.f32 %v3967, 0.0
  %v4046 = vmax.f32 %v3968, 0.0
  %v4047 = vmax.f32 %v3969, 0.0
  %v4048 = vmax.f32 %v3970, 0.0
  %v4049 = vmax.f32 %v3971, 0.0
  %v4050 = vmax.f32 %v3972, 0.0
  %v4051 = vmax.f32 %v3973, 0.0
  %v4052 = vmax.f32 %v3974, 0.0
  %v4053 = vmax.f32 %v3975, 0.0
  %v4054 = vmax.f32 %v3976, 0.0
  %v4055 = vmax.f32 %v3977, 0.0
  %v4056 = vmax.f32 %v3978, 0.0
  %v4057 = vmax.f32 %v3979, 0.0
  %v4058 = vmax.f32 %v3980, 0.0
  %v4059 = vmax.f32 %v3981, 0.0
  %v4060 = vmax.f32 %v3982, 0.0
  %v4061 = vmax.f32 %v3983, 0.0
  %v4062 = vld [vmem:[%s8] sm:$0xff]
  %v4063 = vld [vmem:[%s8 + $0x8] sm:$0xf]
  %v4064 = vld [vmem:[%s8 + $0xc] sm:$0xff]
  %v4065 = vld [vmem:[%s8 + $0x14] sm:$0xf]
  %v4066 = vld [vmem:[%s8 + $0x18] sm:$0xff]
  %v4067 = vld [vmem:[%s8 + $0x20] sm:$0xf]
  %v4068 = vld [vmem:[%s8 + $0x24] sm:$0xff]
  %v4069 = vld [vmem:[%s8 + $0x2c] sm:$0xf]
  %v4070 = vld [vmem:[%s8 + $0x30] sm:$0xff]
  %v4071 = vld [vmem:[%s8 + $0x38] sm:$0xf]
  %v4072 = vld [vmem:[%s8 + $0x3c] sm:$0xff]
  %v4073 = vld [vmem:[%s8 + $0x44] sm:$0xf]
  %v4074 = vld [vmem:[%s8 + $0x48] sm:$0xff]
  %v4075 = vld [vmem:[%s8 + $0x50] sm:$0xf]
  %v4076 = vld [vmem:[%s8 + $0x54] sm:$0xff]
  %v4077 = vld [vmem:[%s8 + $0x5c] sm:$0xf]
  %v4078 = vld [vmem:[%s8 + $0x60] sm:$0xff]
  %v4079 = vld [vmem:[%s8 + $0x68] sm:$0xf]
  %v4080 = vld [vmem:[%s8 + $0x6c] sm:$0xff]
  %v4081 = vld [vmem:[%s8 + $0x74] sm:$0xf]
  %v4082 = vld [vmem:[%s8 + $0x78] sm:$0xff]
  %v4083 = vld [vmem:[%s8 + $0x80] sm:$0xf]
  %v4084 = vld [vmem:[%s8 + $0x84] sm:$0xff]
  %v4085 = vld [vmem:[%s8 + $0x8c] sm:$0xf]
  %v4086 = vld [vmem:[%s8 + $0x90] sm:$0xff]
  %v4087 = vld [vmem:[%s8 + $0x98] sm:$0xf]
  %v4088 = vld [vmem:[%s8 + $0x9c] sm:$0xff]
  %v4089 = vld [vmem:[%s8 + $0xa4] sm:$0xf]
  %v4090 = vld [vmem:[%s8 + $0xa8] sm:$0xff]
  %v4091 = vld [vmem:[%s8 + $0xb0] sm:$0xf]
  %v4092 = vld [vmem:[%s8 + $0xb4] sm:$0xff]
  %v4093 = vld [vmem:[%s8 + $0xbc] sm:$0xf]
  %v4094 = vpack.c.bf16 %v3986, %v3984
  %v4095 = vpack.c.bf16 %v3987, %v3985
  %v4096 = vpack.c.bf16 %v3990, %v3988
  %v4097 = vpack.c.bf16 %v3991, %v3989
  %v4098 = vpack.c.bf16 %v3994, %v3992
  %v4099 = vpack.c.bf16 %v3995, %v3993
  %v4100 = vpack.c.bf16 %v3998, %v3996
  %v4101 = vpack.c.bf16 %v3999, %v3997
  %v4102 = vpack.c.bf16 %v4002, %v4000
  %v4103 = vpack.c.bf16 %v4003, %v4001
  %v4104 = vpack.c.bf16 %v4006, %v4004
  %v4105 = vpack.c.bf16 %v4007, %v4005
  %v4106 = vpack.c.bf16 %v4010, %v4008
  %v4107 = vpack.c.bf16 %v4011, %v4009
  %v4108 = vpack.c.bf16 %v4014, %v4012
  %v4109 = vpack.c.bf16 %v4015, %v4013
  %v4110 = vpack.c.bf16 %v4018, %v4016
  %v4111 = vpack.c.bf16 %v4019, %v4017
  %v4112 = vpack.c.bf16 %v4022, %v4020
  %v4113 = vpack.c.bf16 %v4023, %v4021
  %v4114 = vpack.c.bf16 %v4026, %v4024
  %v4115 = vpack.c.bf16 %v4027, %v4025
  %v4116 = vpack.c.bf16 %v4030, %v4028
  %v4117 = vpack.c.bf16 %v4031, %v4029
  %v4118 = vpack.c.bf16 %v4034, %v4032
  %v4119 = vpack.c.bf16 %v4035, %v4033
  %v4120 = vpack.c.bf16 %v4038, %v4036
  %v4121 = vpack.c.bf16 %v4039, %v4037
  %v4122 = vpack.c.bf16 %v4042, %v4040
  %v4123 = vpack.c.bf16 %v4043, %v4041
  %v4124 = vpack.c.bf16 %v4046, %v4044
  %v4125 = vpack.c.bf16 %v4047, %v4045
  %v4126 = vpack.c.bf16 %v4050, %v4048
  %v4127 = vpack.c.bf16 %v4051, %v4049
  %v4128 = vpack.c.bf16 %v4054, %v4052
  %v4129 = vpack.c.bf16 %v4055, %v4053
  %v4130 = vpack.c.bf16 %v4058, %v4056
  %v4131 = vpack.c.bf16 %v4059, %v4057
  %v4132 = vpack.c.bf16 %v4060, %v4060
  %v4133 = vpack.c.bf16 %v4061, %v4061
  %v4134 = vld [vmem:[%s9] sm:$0xff]
  %v4135 = vld [vmem:[%s9 + $0x8] sm:$0xff]
  %v4136 = vld [vmem:[%s9 + $0x10] sm:$0xff]
  %v4137 = vld [vmem:[%s9 + $0x18] sm:$0xff]
  %v4138 = vld [vmem:[%s9 + $0x20] sm:$0xff]
  %v4139 = vld [vmem:[%s9 + $0x28] sm:$0xff]
  %v4140 = vld [vmem:[%s9 + $0x30] sm:$0xff]
  %v4141 = vld [vmem:[%s9 + $0x38] sm:$0xff]
  %v4142 = vld [vmem:[%s9 + $0x40] sm:$0xff]
  %v4143 = vld [vmem:[%s9 + $0x48] sm:$0xff]
  %v4144 = vld [vmem:[%s9 + $0x50] sm:$0xff]
  %v4145 = vld [vmem:[%s9 + $0x58] sm:$0xff]
  %v4146 = vld [vmem:[%s9 + $0x60] sm:$0xff]
  %v4147 = vld [vmem:[%s9 + $0x68] sm:$0xff]
  %v4148 = vld [vmem:[%s9 + $0x70] sm:$0xff]
  %v4149 = vld [vmem:[%s9 + $0x78] sm:$0xff]
  %4151 = vset.pattern.permute.xlu0 0
  %4152 = vperm.xlu0 %4151, %v4134
  %v4153 = vpop.permute.xlu0 %4152
  %4156 = vset.pattern.permute.xlu0 0
  %4157 = vperm.xlu0 %4156, %v4135
  %v4158 = vpop.permute.xlu0 %4157
  %4161 = vset.pattern.permute.xlu0 0
  %4162 = vperm.xlu0 %4161, %v4136
  %v4163 = vpop.permute.xlu0 %4162
  %4166 = vset.pattern.permute.xlu0 0
  %4167 = vperm.xlu0 %4166, %v4137
  %v4168 = vpop.permute.xlu0 %4167
  %4171 = vset.pattern.permute.xlu0 0
  %4172 = vperm.xlu0 %4171, %v4138
  %v4173 = vpop.permute.xlu0 %4172
  %4176 = vset.pattern.permute.xlu0 0
  %4177 = vperm.xlu0 %4176, %v4139
  %v4178 = vpop.permute.xlu0 %4177
  %4181 = vset.pattern.permute.xlu0 0
  %4182 = vperm.xlu0 %4181, %v4140
  %v4183 = vpop.permute.xlu0 %4182
  %4186 = vset.pattern.permute.xlu0 0
  %4187 = vperm.xlu0 %4186, %v4141
  %v4188 = vpop.permute.xlu0 %4187
  %4191 = vset.pattern.permute.xlu0 0
  %4192 = vperm.xlu0 %4191, %v4142
  %v4193 = vpop.permute.xlu0 %4192
  %4196 = vset.pattern.permute.xlu0 0
  %4197 = vperm.xlu0 %4196, %v4143
  %v4198 = vpop.permute.xlu0 %4197
  %4201 = vset.pattern.permute.xlu0 0
  %4202 = vperm.xlu0 %4201, %v4144
  %v4203 = vpop.permute.xlu0 %4202
  %4206 = vset.pattern.permute.xlu0 0
  %4207 = vperm.xlu0 %4206, %v4145
  %v4208 = vpop.permute.xlu0 %4207
  %4211 = vset.pattern.permute.xlu0 0
  %4212 = vperm.xlu0 %4211, %v4146
  %v4213 = vpop.permute.xlu0 %4212
  %4216 = vset.pattern.permute.xlu0 0
  %4217 = vperm.xlu0 %4216, %v4147
  %v4218 = vpop.permute.xlu0 %4217
  %4221 = vset.pattern.permute.xlu0 0
  %4222 = vperm.xlu0 %4221, %v4148
  %v4223 = vpop.permute.xlu0 %4222
  %4226 = vset.pattern.permute.xlu0 0
  %4227 = vperm.xlu0 %4226, %v4149
  %v4228 = vpop.permute.xlu0 %4227
  %v4262 = vunpack.c.l.b16 %v4062
  %v4263 = vunpack.c.h.b16 %v4062
  %v4264 = vunpack.c.l.b16 %v4063
  %v4265 = vunpack.c.l.b16 %v4064
  %v4266 = vunpack.c.h.b16 %v4064
  %v4267 = vunpack.c.l.b16 %v4065
  %v4268 = vunpack.c.l.b16 %v4066
  %v4269 = vunpack.c.h.b16 %v4066
  %v4270 = vunpack.c.l.b16 %v4067
  %v4271 = vunpack.c.l.b16 %v4068
  %v4272 = vunpack.c.h.b16 %v4068
  %v4273 = vunpack.c.l.b16 %v4069
  %v4274 = vunpack.c.l.b16 %v4070
  %v4275 = vunpack.c.h.b16 %v4070
  %v4276 = vunpack.c.l.b16 %v4071
  %v4277 = vunpack.c.l.b16 %v4072
  %v4278 = vunpack.c.h.b16 %v4072
  %v4279 = vunpack.c.l.b16 %v4073
  %v4280 = vunpack.c.l.b16 %v4074
  %v4281 = vunpack.c.h.b16 %v4074
  %v4282 = vunpack.c.l.b16 %v4075
  %v4283 = vunpack.c.l.b16 %v4076
  %v4284 = vunpack.c.h.b16 %v4076
  %v4285 = vunpack.c.l.b16 %v4077
  %v4286 = vunpack.c.l.b16 %v4078
  %v4287 = vunpack.c.h.b16 %v4078
  %v4288 = vunpack.c.l.b16 %v4079
  %v4289 = vunpack.c.l.b16 %v4080
  %v4290 = vunpack.c.h.b16 %v4080
  %v4291 = vunpack.c.l.b16 %v4081
  %v4292 = vunpack.c.l.b16 %v4082
  %v4293 = vunpack.c.h.b16 %v4082
  %v4294 = vunpack.c.l.b16 %v4083
  %v4295 = vunpack.c.l.b16 %v4084
  %v4296 = vunpack.c.h.b16 %v4084
  %v4297 = vunpack.c.l.b16 %v4085
  %v4298 = vunpack.c.l.b16 %v4086
  %v4299 = vunpack.c.h.b16 %v4086
  %v4300 = vunpack.c.l.b16 %v4087
  %v4301 = vunpack.c.l.b16 %v4088
  %v4302 = vunpack.c.h.b16 %v4088
  %v4303 = vunpack.c.l.b16 %v4089
  %v4304 = vunpack.c.l.b16 %v4090
  %v4305 = vunpack.c.h.b16 %v4090
  %v4306 = vunpack.c.l.b16 %v4091
  %v4307 = vunpack.c.l.b16 %v4092
  %v4308 = vunpack.c.h.b16 %v4092
  %v4309 = vunpack.c.l.b16 %v4093
  %v4310 = vpack.c.b16 %v4265, %v4262
  %v4311 = vpack.c.b16 %v4266, %v4263
  %v4312 = vpack.c.b16 %v4267, %v4264
  %v4313 = vpack.c.b16 %v4271, %v4268
  %v4314 = vpack.c.b16 %v4272, %v4269
  %v4315 = vpack.c.b16 %v4273, %v4270
  %v4316 = vpack.c.b16 %v4277, %v4274
  %v4317 = vpack.c.b16 %v4278, %v4275
  %v4318 = vpack.c.b16 %v4279, %v4276
  %v4319 = vpack.c.b16 %v4283, %v4280
  %v4320 = vpack.c.b16 %v4284, %v4281
  %v4321 = vpack.c.b16 %v4285, %v4282
  %v4322 = vpack.c.b16 %v4289, %v4286
  %v4323 = vpack.c.b16 %v4290, %v4287
  %v4324 = vpack.c.b16 %v4291, %v4288
  %v4325 = vpack.c.b16 %v4295, %v4292
  %v4326 = vpack.c.b16 %v4296, %v4293
  %v4327 = vpack.c.b16 %v4297, %v4294
  %v4328 = vpack.c.b16 %v4301, %v4298
  %v4329 = vpack.c.b16 %v4302, %v4299
  %v4330 = vpack.c.b16 %v4303, %v4300
  %v4331 = vpack.c.b16 %v4307, %v4304
  %v4332 = vpack.c.b16 %v4308, %v4305
  %v4333 = vpack.c.b16 %v4309, %v4306
  %v4351 = vsel %vm1439, %v4312, 0
  %v4354 = vsel %vm1439, %v4315, 0
  %v4357 = vsel %vm1439, %v4318, 0
  %v4360 = vsel %vm1439, %v4321, 0
  %v4363 = vsel %vm1439, %v4324, 0
  %v4366 = vsel %vm1439, %v4327, 0
  %v4369 = vsel %vm1439, %v4330, 0
  %v4372 = vsel %vm1439, %v4333, 0
  %v4375 = vsel %vm1500, %v4132, 0
  %v4378 = vsel %vm1500, %v4133, 0
  %4380 = vmatpush.bf16.msra.mxu0 %v4108
  %4381 = vmatpush.bf16.msra.mxu0 %v4106
  %4382 = vmatpush.bf16.msra.mxu0 %v4104
  %4383 = vmatpush.bf16.msra.mxu0 %v4102
  %4384 = vmatpush.bf16.msra.mxu0 %v4100
  %4385 = vmatpush.bf16.msra.mxu0 %v4098
  %4386 = vmatpush.bf16.msra.mxu0 %v4096
  %4387 = vmatpush.bf16.msra.mxu0 %v4094
  %4388 = vmatmul.bf16.gmra.mxu0 %v4310
  %v4389 = vpop.f32.mrf.mxu0
  %v4390 = vadd.f32 %v4153, %v4389
  %v4391 = vpop.f32.mrf.mxu0
  %v4392 = vadd.f32 %v4158, %v4391
  %4393 = vmatmul.bf16.gmra.mxu0 %v4313
  %v4394 = vpop.f32.mrf.mxu0
  %v4395 = vadd.f32 %v4163, %v4394
  %v4396 = vpop.f32.mrf.mxu0
  %v4397 = vadd.f32 %v4168, %v4396
  %4398 = vmatmul.bf16.gmra.mxu0 %v4316
  %v4399 = vpop.f32.mrf.mxu0
  %v4400 = vadd.f32 %v4173, %v4399
  %v4401 = vpop.f32.mrf.mxu0
  %v4402 = vadd.f32 %v4178, %v4401
  %4403 = vmatmul.bf16.gmra.mxu0 %v4319
  %v4404 = vpop.f32.mrf.mxu0
  %v4405 = vadd.f32 %v4183, %v4404
  %v4406 = vpop.f32.mrf.mxu0
  %v4407 = vadd.f32 %v4188, %v4406
  %4408 = vmatmul.bf16.gmra.mxu0 %v4322
  %v4409 = vpop.f32.mrf.mxu0
  %v4410 = vadd.f32 %v4193, %v4409
  %v4411 = vpop.f32.mrf.mxu0
  %v4412 = vadd.f32 %v4198, %v4411
  %4413 = vmatmul.bf16.gmra.mxu0 %v4325
  %v4414 = vpop.f32.mrf.mxu0
  %v4415 = vadd.f32 %v4203, %v4414
  %v4416 = vpop.f32.mrf.mxu0
  %v4417 = vadd.f32 %v4208, %v4416
  %4418 = vmatmul.bf16.gmra.mxu0 %v4328
  %v4419 = vpop.f32.mrf.mxu0
  %v4420 = vadd.f32 %v4213, %v4419
  %v4421 = vpop.f32.mrf.mxu0
  %v4422 = vadd.f32 %v4218, %v4421
  %4423 = vmatmul.bf16.gmra.mxu0 %v4331
  %v4424 = vpop.f32.mrf.mxu0
  %v4425 = vadd.f32 %v4223, %v4424
  %v4426 = vpop.f32.mrf.mxu0
  %v4427 = vadd.f32 %v4228, %v4426
  %4428 = vdwg.mxu0
  %4429 = vmatpush.bf16.msra.mxu0 %v4124
  %4430 = vmatpush.bf16.msra.mxu0 %v4122
  %4431 = vmatpush.bf16.msra.mxu0 %v4120
  %4432 = vmatpush.bf16.msra.mxu0 %v4118
  %4433 = vmatpush.bf16.msra.mxu0 %v4116
  %4434 = vmatpush.bf16.msra.mxu0 %v4114
  %4435 = vmatpush.bf16.msra.mxu0 %v4112
  %4436 = vmatpush.bf16.msra.mxu0 %v4110
  %4437 = vmatmul.bf16.gmra.mxu0 %v4311
  %v4438 = vpop.f32.mrf.mxu0
  %v4439 = vadd.f32 %v4390, %v4438
  %v4440 = vpop.f32.mrf.mxu0
  %v4441 = vadd.f32 %v4392, %v4440
  %4442 = vmatmul.bf16.gmra.mxu0 %v4314
  %v4443 = vpop.f32.mrf.mxu0
  %v4444 = vadd.f32 %v4395, %v4443
  %v4445 = vpop.f32.mrf.mxu0
  %v4446 = vadd.f32 %v4397, %v4445
  %4447 = vmatmul.bf16.gmra.mxu0 %v4317
  %v4448 = vpop.f32.mrf.mxu0
  %v4449 = vadd.f32 %v4400, %v4448
  %v4450 = vpop.f32.mrf.mxu0
  %v4451 = vadd.f32 %v4402, %v4450
  %4452 = vmatmul.bf16.gmra.mxu0 %v4320
  %v4453 = vpop.f32.mrf.mxu0
  %v4454 = vadd.f32 %v4405, %v4453
  %v4455 = vpop.f32.mrf.mxu0
  %v4456 = vadd.f32 %v4407, %v4455
  %4457 = vmatmul.bf16.gmra.mxu0 %v4323
  %v4458 = vpop.f32.mrf.mxu0
  %v4459 = vadd.f32 %v4410, %v4458
  %v4460 = vpop.f32.mrf.mxu0
  %v4461 = vadd.f32 %v4412, %v4460
  %4462 = vmatmul.bf16.gmra.mxu0 %v4326
  %v4463 = vpop.f32.mrf.mxu0
  %v4464 = vadd.f32 %v4415, %v4463
  %v4465 = vpop.f32.mrf.mxu0
  %v4466 = vadd.f32 %v4417, %v4465
  %4467 = vmatmul.bf16.gmra.mxu0 %v4329
  %v4468 = vpop.f32.mrf.mxu0
  %v4469 = vadd.f32 %v4420, %v4468
  %v4470 = vpop.f32.mrf.mxu0
  %v4471 = vadd.f32 %v4422, %v4470
  %4472 = vmatmul.bf16.gmra.mxu0 %v4332
  %v4473 = vpop.f32.mrf.mxu0
  %v4474 = vadd.f32 %v4425, %v4473
  %v4475 = vpop.f32.mrf.mxu0
  %v4476 = vadd.f32 %v4427, %v4475
  %4477 = vdwg.mxu0
  %4478 = vmatpush.bf16.msra.mxu0 0
  %4479 = vmatpush.bf16.msra.mxu0 0
  %4480 = vmatpush.bf16.msra.mxu0 0
  %4481 = vmatpush.bf16.msra.mxu0 0
  %4482 = vmatpush.bf16.msra.mxu0 %v4375
  %4483 = vmatpush.bf16.msra.mxu0 %v4130
  %4484 = vmatpush.bf16.msra.mxu0 %v4128
  %4485 = vmatpush.bf16.msra.mxu0 %v4126
  %4486 = vmatmul.bf16.gmra.mxu0 %v4351
  %v4487 = vpop.f32.mrf.mxu0
  %v4488 = vadd.f32 %v4439, %v4487
  %v4489 = vpop.f32.mrf.mxu0
  %v4490 = vadd.f32 %v4441, %v4489
  %4491 = vmatmul.bf16.gmra.mxu0 %v4354
  %v4492 = vpop.f32.mrf.mxu0
  %v4493 = vadd.f32 %v4444, %v4492
  %v4494 = vpop.f32.mrf.mxu0
  %v4495 = vadd.f32 %v4446, %v4494
  %4496 = vmatmul.bf16.gmra.mxu0 %v4357
  %v4497 = vpop.f32.mrf.mxu0
  %v4498 = vadd.f32 %v4449, %v4497
  %v4499 = vpop.f32.mrf.mxu0
  %v4500 = vadd.f32 %v4451, %v4499
  %4501 = vmatmul.bf16.gmra.mxu0 %v4360
  %v4502 = vpop.f32.mrf.mxu0
  %v4503 = vadd.f32 %v4454, %v4502
  %v4504 = vpop.f32.mrf.mxu0
  %v4505 = vadd.f32 %v4456, %v4504
  %4506 = vmatmul.bf16.gmra.mxu0 %v4363
  %v4507 = vpop.f32.mrf.mxu0
  %v4508 = vadd.f32 %v4459, %v4507
  %v4509 = vpop.f32.mrf.mxu0
  %v4510 = vadd.f32 %v4461, %v4509
  %4511 = vmatmul.bf16.gmra.mxu0 %v4366
  %v4512 = vpop.f32.mrf.mxu0
  %v4513 = vadd.f32 %v4464, %v4512
  %v4514 = vpop.f32.mrf.mxu0
  %v4515 = vadd.f32 %v4466, %v4514
  %4516 = vmatmul.bf16.gmra.mxu0 %v4369
  %v4517 = vpop.f32.mrf.mxu0
  %v4518 = vadd.f32 %v4469, %v4517
  %v4519 = vpop.f32.mrf.mxu0
  %v4520 = vadd.f32 %v4471, %v4519
  %4521 = vmatmul.bf16.gmra.mxu0 %v4372
  %v4522 = vpop.f32.mrf.mxu0
  %v4523 = vadd.f32 %v4474, %v4522
  %v4524 = vpop.f32.mrf.mxu0
  %v4525 = vadd.f32 %v4476, %v4524
  %4526 = vdwg.mxu0
  %4527 = vmatpush.bf16.msra.mxu0 %v4109
  %4528 = vmatpush.bf16.msra.mxu0 %v4107
  %4529 = vmatpush.bf16.msra.mxu0 %v4105
  %4530 = vmatpush.bf16.msra.mxu0 %v4103
  %4531 = vmatpush.bf16.msra.mxu0 %v4101
  %4532 = vmatpush.bf16.msra.mxu0 %v4099
  %4533 = vmatpush.bf16.msra.mxu0 %v4097
  %4534 = vmatpush.bf16.msra.mxu0 %v4095
  %4535 = vmatmul.bf16.gmra.mxu0 %v4310
  %v4536 = vpop.f32.mrf.mxu0
  %v4537 = vadd.f32 %v4153, %v4536
  %v4538 = vpop.f32.mrf.mxu0
  %v4539 = vadd.f32 %v4158, %v4538
  %4540 = vmatmul.bf16.gmra.mxu0 %v4313
  %v4541 = vpop.f32.mrf.mxu0
  %v4542 = vadd.f32 %v4163, %v4541
  %v4543 = vpop.f32.mrf.mxu0
  %v4544 = vadd.f32 %v4168, %v4543
  %4545 = vmatmul.bf16.gmra.mxu0 %v4316
  %v4546 = vpop.f32.mrf.mxu0
  %v4547 = vadd.f32 %v4173, %v4546
  %v4548 = vpop.f32.mrf.mxu0
  %v4549 = vadd.f32 %v4178, %v4548
  %4550 = vmatmul.bf16.gmra.mxu0 %v4319
  %v4551 = vpop.f32.mrf.mxu0
  %v4552 = vadd.f32 %v4183, %v4551
  %v4553 = vpop.f32.mrf.mxu0
  %v4554 = vadd.f32 %v4188, %v4553
  %4555 = vmatmul.bf16.gmra.mxu0 %v4322
  %v4556 = vpop.f32.mrf.mxu0
  %v4557 = vadd.f32 %v4193, %v4556
  %v4558 = vpop.f32.mrf.mxu0
  %v4559 = vadd.f32 %v4198, %v4558
  %4560 = vmatmul.bf16.gmra.mxu0 %v4325
  %v4561 = vpop.f32.mrf.mxu0
  %v4562 = vadd.f32 %v4203, %v4561
  %v4563 = vpop.f32.mrf.mxu0
  %v4564 = vadd.f32 %v4208, %v4563
  %4565 = vmatmul.bf16.gmra.mxu0 %v4328
  %v4566 = vpop.f32.mrf.mxu0
  %v4567 = vadd.f32 %v4213, %v4566
  %v4568 = vpop.f32.mrf.mxu0
  %v4569 = vadd.f32 %v4218, %v4568
  %4570 = vmatmul.bf16.gmra.mxu0 %v4331
  %v4571 = vpop.f32.mrf.mxu0
  %v4572 = vadd.f32 %v4223, %v4571
  %v4573 = vpop.f32.mrf.mxu0
  %v4574 = vadd.f32 %v4228, %v4573
  %4575 = vdwg.mxu0
  %4576 = vmatpush.bf16.msra.mxu0 %v4125
  %4577 = vmatpush.bf16.msra.mxu0 %v4123
  %4578 = vmatpush.bf16.msra.mxu0 %v4121
  %4579 = vmatpush.bf16.msra.mxu0 %v4119
  %4580 = vmatpush.bf16.msra.mxu0 %v4117
  %4581 = vmatpush.bf16.msra.mxu0 %v4115
  %4582 = vmatpush.bf16.msra.mxu0 %v4113
  %4583 = vmatpush.bf16.msra.mxu0 %v4111
  %4584 = vmatmul.bf16.gmra.mxu0 %v4311
  %v4585 = vpop.f32.mrf.mxu0
  %v4586 = vadd.f32 %v4537, %v4585
  %v4587 = vpop.f32.mrf.mxu0
  %v4588 = vadd.f32 %v4539, %v4587
  %4589 = vmatmul.bf16.gmra.mxu0 %v4314
  %v4590 = vpop.f32.mrf.mxu0
  %v4591 = vadd.f32 %v4542, %v4590
  %v4592 = vpop.f32.mrf.mxu0
  %v4593 = vadd.f32 %v4544, %v4592
  %4594 = vmatmul.bf16.gmra.mxu0 %v4317
  %v4595 = vpop.f32.mrf.mxu0
  %v4596 = vadd.f32 %v4547, %v4595
  %v4597 = vpop.f32.mrf.mxu0
  %v4598 = vadd.f32 %v4549, %v4597
  %4599 = vmatmul.bf16.gmra.mxu0 %v4320
  %v4600 = vpop.f32.mrf.mxu0
  %v4601 = vadd.f32 %v4552, %v4600
  %v4602 = vpop.f32.mrf.mxu0
  %v4603 = vadd.f32 %v4554, %v4602
  %4604 = vmatmul.bf16.gmra.mxu0 %v4323
  %v4605 = vpop.f32.mrf.mxu0
  %v4606 = vadd.f32 %v4557, %v4605
  %v4607 = vpop.f32.mrf.mxu0
  %v4608 = vadd.f32 %v4559, %v4607
  %4609 = vmatmul.bf16.gmra.mxu0 %v4326
  %v4610 = vpop.f32.mrf.mxu0
  %v4611 = vadd.f32 %v4562, %v4610
  %v4612 = vpop.f32.mrf.mxu0
  %v4613 = vadd.f32 %v4564, %v4612
  %4614 = vmatmul.bf16.gmra.mxu0 %v4329
  %v4615 = vpop.f32.mrf.mxu0
  %v4616 = vadd.f32 %v4567, %v4615
  %v4617 = vpop.f32.mrf.mxu0
  %v4618 = vadd.f32 %v4569, %v4617
  %4619 = vmatmul.bf16.gmra.mxu0 %v4332
  %v4620 = vpop.f32.mrf.mxu0
  %v4621 = vadd.f32 %v4572, %v4620
  %v4622 = vpop.f32.mrf.mxu0
  %v4623 = vadd.f32 %v4574, %v4622
  %4624 = vdwg.mxu0
  %4625 = vmatpush.bf16.msra.mxu0 0
  %4626 = vmatpush.bf16.msra.mxu0 0
  %4627 = vmatpush.bf16.msra.mxu0 0
  %4628 = vmatpush.bf16.msra.mxu0 0
  %4629 = vmatpush.bf16.msra.mxu0 %v4378
  %4630 = vmatpush.bf16.msra.mxu0 %v4131
  %4631 = vmatpush.bf16.msra.mxu0 %v4129
  %4632 = vmatpush.bf16.msra.mxu0 %v4127
  %4633 = vmatmul.bf16.gmra.mxu0 %v4351
  %v4634 = vpop.f32.mrf.mxu0
  %v4635 = vadd.f32 %v4586, %v4634
  %v4636 = vpop.f32.mrf.mxu0
  %v4637 = vadd.f32 %v4588, %v4636
  %4638 = vmatmul.bf16.gmra.mxu0 %v4354
  %v4639 = vpop.f32.mrf.mxu0
  %v4640 = vadd.f32 %v4591, %v4639
  %v4641 = vpop.f32.mrf.mxu0
  %v4642 = vadd.f32 %v4593, %v4641
  %4643 = vmatmul.bf16.gmra.mxu0 %v4357
  %v4644 = vpop.f32.mrf.mxu0
  %v4645 = vadd.f32 %v4596, %v4644
  %v4646 = vpop.f32.mrf.mxu0
  %v4647 = vadd.f32 %v4598, %v4646
  %4648 = vmatmul.bf16.gmra.mxu0 %v4360
  %v4649 = vpop.f32.mrf.mxu0
  %v4650 = vadd.f32 %v4601, %v4649
  %v4651 = vpop.f32.mrf.mxu0
  %v4652 = vadd.f32 %v4603, %v4651
  %4653 = vmatmul.bf16.gmra.mxu0 %v4363
  %v4654 = vpop.f32.mrf.mxu0
  %v4655 = vadd.f32 %v4606, %v4654
  %v4656 = vpop.f32.mrf.mxu0
  %v4657 = vadd.f32 %v4608, %v4656
  %4658 = vmatmul.bf16.gmra.mxu0 %v4366
  %v4659 = vpop.f32.mrf.mxu0
  %v4660 = vadd.f32 %v4611, %v4659
  %v4661 = vpop.f32.mrf.mxu0
  %v4662 = vadd.f32 %v4613, %v4661
  %4663 = vmatmul.bf16.gmra.mxu0 %v4369
  %v4664 = vpop.f32.mrf.mxu0
  %v4665 = vadd.f32 %v4616, %v4664
  %v4666 = vpop.f32.mrf.mxu0
  %v4667 = vadd.f32 %v4618, %v4666
  %4668 = vmatmul.bf16.gmra.mxu0 %v4372
  %v4669 = vpop.f32.mrf.mxu0
  %v4670 = vadd.f32 %v4621, %v4669
  %v4671 = vpop.f32.mrf.mxu0
  %v4672 = vadd.f32 %v4623, %v4671
  %4673 = vdwg.mxu0
  %v4674 = vmax.f32 %v4488, 0.0
  %v4675 = vmax.f32 %v4635, 0.0
  %v4676 = vmax.f32 %v4490, 0.0
  %v4677 = vmax.f32 %v4637, 0.0
  %v4678 = vmax.f32 %v4493, 0.0
  %v4679 = vmax.f32 %v4640, 0.0
  %v4680 = vmax.f32 %v4495, 0.0
  %v4681 = vmax.f32 %v4642, 0.0
  %v4682 = vmax.f32 %v4498, 0.0
  %v4683 = vmax.f32 %v4645, 0.0
  %v4684 = vmax.f32 %v4500, 0.0
  %v4685 = vmax.f32 %v4647, 0.0
  %v4686 = vmax.f32 %v4503, 0.0
  %v4687 = vmax.f32 %v4650, 0.0
  %v4688 = vmax.f32 %v4505, 0.0
  %v4689 = vmax.f32 %v4652, 0.0
  %v4690 = vmax.f32 %v4508, 0.0
  %v4691 = vmax.f32 %v4655, 0.0
  %v4692 = vmax.f32 %v4510, 0.0
  %v4693 = vmax.f32 %v4657, 0.0
  %v4694 = vmax.f32 %v4513, 0.0
  %v4695 = vmax.f32 %v4660, 0.0
  %v4696 = vmax.f32 %v4515, 0.0
  %v4697 = vmax.f32 %v4662, 0.0
  %v4698 = vmax.f32 %v4518, 0.0
  %v4699 = vmax.f32 %v4665, 0.0
  %v4700 = vmax.f32 %v4520, 0.0
  %v4701 = vmax.f32 %v4667, 0.0
  %v4702 = vmax.f32 %v4523, 0.0
  %v4703 = vmax.f32 %v4670, 0.0
  %v4704 = vmax.f32 %v4525, 0.0
  %v4705 = vmax.f32 %v4672, 0.0
  %v4706 = vld [vmem:[%s10] sm:$0xf]
  %v4707 = vld [vmem:[%s10 + $0x4] sm:$0xf]
  %v4708 = vld [vmem:[%s10 + $0x8] sm:$0xf]
  %v4709 = vld [vmem:[%s10 + $0xc] sm:$0xf]
  %v4710 = vld [vmem:[%s10 + $0x10] sm:$0xf]
  %v4711 = vld [vmem:[%s10 + $0x14] sm:$0xf]
  %v4712 = vld [vmem:[%s10 + $0x18] sm:$0xf]
  %v4713 = vld [vmem:[%s10 + $0x1c] sm:$0xf]
  %v4714 = vld [vmem:[%s10 + $0x20] sm:$0xf]
  %v4715 = vld [vmem:[%s10 + $0x24] sm:$0xf]
  %v4716 = vld [vmem:[%s10 + $0x28] sm:$0xf]
  %v4717 = vld [vmem:[%s10 + $0x2c] sm:$0xf]
  %v4718 = vld [vmem:[%s10 + $0x30] sm:$0xf]
  %v4719 = vld [vmem:[%s10 + $0x34] sm:$0xf]
  %v4720 = vld [vmem:[%s10 + $0x38] sm:$0xf]
  %v4721 = vld [vmem:[%s10 + $0x3c] sm:$0xf]
  %v4722 = vpack.c.bf16 %v4676, %v4674
  %v4723 = vpack.c.bf16 %v4677, %v4675
  %v4724 = vpack.c.bf16 %v4680, %v4678
  %v4725 = vpack.c.bf16 %v4681, %v4679
  %v4726 = vpack.c.bf16 %v4684, %v4682
  %v4727 = vpack.c.bf16 %v4685, %v4683
  %v4728 = vpack.c.bf16 %v4688, %v4686
  %v4729 = vpack.c.bf16 %v4689, %v4687
  %v4730 = vpack.c.bf16 %v4692, %v4690
  %v4731 = vpack.c.bf16 %v4693, %v4691
  %v4732 = vpack.c.bf16 %v4696, %v4694
  %v4733 = vpack.c.bf16 %v4697, %v4695
  %v4734 = vpack.c.bf16 %v4700, %v4698
  %v4735 = vpack.c.bf16 %v4701, %v4699
  %v4736 = vpack.c.bf16 %v4704, %v4702
  %v4737 = vpack.c.bf16 %v4705, %v4703
  %v4738 = vld [vmem:[%s11] sm:$0xff]
  %v4739 = vld [vmem:[%s11 + $0x8] sm:$0xff]
  %v4740 = vld [vmem:[%s11 + $0x10] sm:$0xff]
  %v4741 = vld [vmem:[%s11 + $0x18] sm:$0xff]
  %v4742 = vld [vmem:[%s11 + $0x20] sm:$0xff]
  %v4743 = vld [vmem:[%s11 + $0x28] sm:$0xff]
  %v4744 = vld [vmem:[%s11 + $0x30] sm:$0xff]
  %v4745 = vld [vmem:[%s11 + $0x38] sm:$0xff]
  %v4746 = vld [vmem:[%s11 + $0x40] sm:$0xff]
  %v4747 = vld [vmem:[%s11 + $0x48] sm:$0xff]
  %v4748 = vld [vmem:[%s11 + $0x50] sm:$0xff]
  %v4749 = vld [vmem:[%s11 + $0x58] sm:$0xff]
  %v4750 = vld [vmem:[%s11 + $0x60] sm:$0xff]
  %v4751 = vld [vmem:[%s11 + $0x68] sm:$0xff]
  %v4752 = vld [vmem:[%s11 + $0x70] sm:$0xff]
  %v4753 = vld [vmem:[%s11 + $0x78] sm:$0xff]
  %4755 = vset.pattern.permute.xlu0 0
  %4756 = vperm.xlu0 %4755, %v4738
  %v4757 = vpop.permute.xlu0 %4756
  %4760 = vset.pattern.permute.xlu0 0
  %4761 = vperm.xlu0 %4760, %v4739
  %v4762 = vpop.permute.xlu0 %4761
  %4765 = vset.pattern.permute.xlu0 0
  %4766 = vperm.xlu0 %4765, %v4740
  %v4767 = vpop.permute.xlu0 %4766
  %4770 = vset.pattern.permute.xlu0 0
  %4771 = vperm.xlu0 %4770, %v4741
  %v4772 = vpop.permute.xlu0 %4771
  %4775 = vset.pattern.permute.xlu0 0
  %4776 = vperm.xlu0 %4775, %v4742
  %v4777 = vpop.permute.xlu0 %4776
  %4780 = vset.pattern.permute.xlu0 0
  %4781 = vperm.xlu0 %4780, %v4743
  %v4782 = vpop.permute.xlu0 %4781
  %4785 = vset.pattern.permute.xlu0 0
  %4786 = vperm.xlu0 %4785, %v4744
  %v4787 = vpop.permute.xlu0 %4786
  %4790 = vset.pattern.permute.xlu0 0
  %4791 = vperm.xlu0 %4790, %v4745
  %v4792 = vpop.permute.xlu0 %4791
  %4795 = vset.pattern.permute.xlu0 0
  %4796 = vperm.xlu0 %4795, %v4746
  %v4797 = vpop.permute.xlu0 %4796
  %4800 = vset.pattern.permute.xlu0 0
  %4801 = vperm.xlu0 %4800, %v4747
  %v4802 = vpop.permute.xlu0 %4801
  %4805 = vset.pattern.permute.xlu0 0
  %4806 = vperm.xlu0 %4805, %v4748
  %v4807 = vpop.permute.xlu0 %4806
  %4810 = vset.pattern.permute.xlu0 0
  %4811 = vperm.xlu0 %4810, %v4749
  %v4812 = vpop.permute.xlu0 %4811
  %4815 = vset.pattern.permute.xlu0 0
  %4816 = vperm.xlu0 %4815, %v4750
  %v4817 = vpop.permute.xlu0 %4816
  %4820 = vset.pattern.permute.xlu0 0
  %4821 = vperm.xlu0 %4820, %v4751
  %v4822 = vpop.permute.xlu0 %4821
  %4825 = vset.pattern.permute.xlu0 0
  %4826 = vperm.xlu0 %4825, %v4752
  %v4827 = vpop.permute.xlu0 %4826
  %4830 = vset.pattern.permute.xlu0 0
  %4831 = vperm.xlu0 %4830, %v4753
  %v4832 = vpop.permute.xlu0 %4831
  %v4850 = vunpack.c.l.b16 %v4706
  %v4851 = vunpack.c.l.b16 %v4707
  %v4852 = vunpack.c.l.b16 %v4708
  %v4853 = vunpack.c.l.b16 %v4709
  %v4854 = vunpack.c.l.b16 %v4710
  %v4855 = vunpack.c.l.b16 %v4711
  %v4856 = vunpack.c.l.b16 %v4712
  %v4857 = vunpack.c.l.b16 %v4713
  %v4858 = vunpack.c.l.b16 %v4714
  %v4859 = vunpack.c.l.b16 %v4715
  %v4860 = vunpack.c.l.b16 %v4716
  %v4861 = vunpack.c.l.b16 %v4717
  %v4862 = vunpack.c.l.b16 %v4718
  %v4863 = vunpack.c.l.b16 %v4719
  %v4864 = vunpack.c.l.b16 %v4720
  %v4865 = vunpack.c.l.b16 %v4721
  %v4866 = vpack.c.b16 %v4851, %v4850
  %v4867 = vpack.c.b16 %v4853, %v4852
  %v4868 = vpack.c.b16 %v4855, %v4854
  %v4869 = vpack.c.b16 %v4857, %v4856
  %v4870 = vpack.c.b16 %v4859, %v4858
  %v4871 = vpack.c.b16 %v4861, %v4860
  %v4872 = vpack.c.b16 %v4863, %v4862
  %v4873 = vpack.c.b16 %v4865, %v4864
  %4882 = vmatpush.bf16.msra.mxu0 %v4736
  %4883 = vmatpush.bf16.msra.mxu0 %v4734
  %4884 = vmatpush.bf16.msra.mxu0 %v4732
  %4885 = vmatpush.bf16.msra.mxu0 %v4730
  %4886 = vmatpush.bf16.msra.mxu0 %v4728
  %4887 = vmatpush.bf16.msra.mxu0 %v4726
  %4888 = vmatpush.bf16.msra.mxu0 %v4724
  %4889 = vmatpush.bf16.msra.mxu0 %v4722
  %4890 = vmatmul.bf16.gmra.mxu0 %v4866
  %v4891 = vpop.f32.mrf.mxu0
  %v4892 = vadd.f32 %v4757, %v4891
  %v4893 = vpop.f32.mrf.mxu0
  %v4894 = vadd.f32 %v4762, %v4893
  %4895 = vmatmul.bf16.gmra.mxu0 %v4867
  %v4896 = vpop.f32.mrf.mxu0
  %v4897 = vadd.f32 %v4767, %v4896
  %v4898 = vpop.f32.mrf.mxu0
  %v4899 = vadd.f32 %v4772, %v4898
  %4900 = vmatmul.bf16.gmra.mxu0 %v4868
  %v4901 = vpop.f32.mrf.mxu0
  %v4902 = vadd.f32 %v4777, %v4901
  %v4903 = vpop.f32.mrf.mxu0
  %v4904 = vadd.f32 %v4782, %v4903
  %4905 = vmatmul.bf16.gmra.mxu0 %v4869
  %v4906 = vpop.f32.mrf.mxu0
  %v4907 = vadd.f32 %v4787, %v4906
  %v4908 = vpop.f32.mrf.mxu0
  %v4909 = vadd.f32 %v4792, %v4908
  %4910 = vmatmul.bf16.gmra.mxu0 %v4870
  %v4911 = vpop.f32.mrf.mxu0
  %v4912 = vadd.f32 %v4797, %v4911
  %v4913 = vpop.f32.mrf.mxu0
  %v4914 = vadd.f32 %v4802, %v4913
  %4915 = vmatmul.bf16.gmra.mxu0 %v4871
  %v4916 = vpop.f32.mrf.mxu0
  %v4917 = vadd.f32 %v4807, %v4916
  %v4918 = vpop.f32.mrf.mxu0
  %v4919 = vadd.f32 %v4812, %v4918
  %4920 = vmatmul.bf16.gmra.mxu0 %v4872
  %v4921 = vpop.f32.mrf.mxu0
  %v4922 = vadd.f32 %v4817, %v4921
  %v4923 = vpop.f32.mrf.mxu0
  %v4924 = vadd.f32 %v4822, %v4923
  %4925 = vmatmul.bf16.gmra.mxu0 %v4873
  %v4926 = vpop.f32.mrf.mxu0
  %v4927 = vadd.f32 %v4827, %v4926
  %v4928 = vpop.f32.mrf.mxu0
  %v4929 = vadd.f32 %v4832, %v4928
  %4930 = vdwg.mxu0
  %4931 = vmatpush.bf16.msra.mxu0 %v4737
  %4932 = vmatpush.bf16.msra.mxu0 %v4735
  %4933 = vmatpush.bf16.msra.mxu0 %v4733
  %4934 = vmatpush.bf16.msra.mxu0 %v4731
  %4935 = vmatpush.bf16.msra.mxu0 %v4729
  %4936 = vmatpush.bf16.msra.mxu0 %v4727
  %4937 = vmatpush.bf16.msra.mxu0 %v4725
  %4938 = vmatpush.bf16.msra.mxu0 %v4723
  %4939 = vmatmul.bf16.gmra.mxu0 %v4866
  %v4940 = vpop.f32.mrf.mxu0
  %v4941 = vadd.f32 %v4757, %v4940
  %v4942 = vpop.f32.mrf.mxu0
  %v4943 = vadd.f32 %v4762, %v4942
  %4944 = vmatmul.bf16.gmra.mxu0 %v4867
  %v4945 = vpop.f32.mrf.mxu0
  %v4946 = vadd.f32 %v4767, %v4945
  %v4947 = vpop.f32.mrf.mxu0
  %v4948 = vadd.f32 %v4772, %v4947
  %4949 = vmatmul.bf16.gmra.mxu0 %v4868
  %v4950 = vpop.f32.mrf.mxu0
  %v4951 = vadd.f32 %v4777, %v4950
  %v4952 = vpop.f32.mrf.mxu0
  %v4953 = vadd.f32 %v4782, %v4952
  %4954 = vmatmul.bf16.gmra.mxu0 %v4869
  %v4955 = vpop.f32.mrf.mxu0
  %v4956 = vadd.f32 %v4787, %v4955
  %v4957 = vpop.f32.mrf.mxu0
  %v4958 = vadd.f32 %v4792, %v4957
  %4959 = vmatmul.bf16.gmra.mxu0 %v4870
  %v4960 = vpop.f32.mrf.mxu0
  %v4961 = vadd.f32 %v4797, %v4960
  %v4962 = vpop.f32.mrf.mxu0
  %v4963 = vadd.f32 %v4802, %v4962
  %4964 = vmatmul.bf16.gmra.mxu0 %v4871
  %v4965 = vpop.f32.mrf.mxu0
  %v4966 = vadd.f32 %v4807, %v4965
  %v4967 = vpop.f32.mrf.mxu0
  %v4968 = vadd.f32 %v4812, %v4967
  %4969 = vmatmul.bf16.gmra.mxu0 %v4872
  %v4970 = vpop.f32.mrf.mxu0
  %v4971 = vadd.f32 %v4817, %v4970
  %v4972 = vpop.f32.mrf.mxu0
  %v4973 = vadd.f32 %v4822, %v4972
  %4974 = vmatmul.bf16.gmra.mxu0 %v4873
  %v4975 = vpop.f32.mrf.mxu0
  %v4976 = vadd.f32 %v4827, %v4975
  %v4977 = vpop.f32.mrf.mxu0
  %v4978 = vadd.f32 %v4832, %v4977
  %4979 = vdwg.mxu0
  %4980 = vst [vmem:[%s12] sm:$0xff] %v4892
  %4981 = vst [vmem:[%s12 + $0x8] sm:$0xff] %v4941
  %4982 = vst [vmem:[%s12 + $0x10] sm:$0xff] %v4894
  %4983 = vst [vmem:[%s12 + $0x18] sm:$0xff] %v4943
  %4984 = vst [vmem:[%s12 + $0x20] sm:$0xff] %v4897
  %4985 = vst [vmem:[%s12 + $0x28] sm:$0xff] %v4946
  %4986 = vst [vmem:[%s12 + $0x30] sm:$0xff] %v4899
  %4987 = vst [vmem:[%s12 + $0x38] sm:$0xff] %v4948
  %4988 = vst [vmem:[%s12 + $0x40] sm:$0xff] %v4902
  %4989 = vst [vmem:[%s12 + $0x48] sm:$0xff] %v4951
  %4990 = vst [vmem:[%s12 + $0x50] sm:$0xff] %v4904
  %4991 = vst [vmem:[%s12 + $0x58] sm:$0xff] %v4953
  %4992 = vst [vmem:[%s12 + $0x60] sm:$0xff] %v4907
  %4993 = vst [vmem:[%s12 + $0x68] sm:$0xff] %v4956
  %4994 = vst [vmem:[%s12 + $0x70] sm:$0xff] %v4909
  %4995 = vst [vmem:[%s12 + $0x78] sm:$0xff] %v4958
  %4996 = vst [vmem:[%s12 + $0x80] sm:$0xff] %v4912
  %4997 = vst [vmem:[%s12 + $0x88] sm:$0xff] %v4961
  %4998 = vst [vmem:[%s12 + $0x90] sm:$0xff] %v4914
  %4999 = vst [vmem:[%s12 + $0x98] sm:$0xff] %v4963
  %5000 = vst [vmem:[%s12 + $0xa0] sm:$0xff] %v4917
  %5001 = vst [vmem:[%s12 + $0xa8] sm:$0xff] %v4966
  %5002 = vst [vmem:[%s12 + $0xb0] sm:$0xff] %v4919
  %5003 = vst [vmem:[%s12 + $0xb8] sm:$0xff] %v4968
  %5004 = vst [vmem:[%s12 + $0xc0] sm:$0xff] %v4922
  %5005 = vst [vmem:[%s12 + $0xc8] sm:$0xff] %v4971
  %5006 = vst [vmem:[%s12 + $0xd0] sm:$0xff] %v4924
  %5007 = vst [vmem:[%s12 + $0xd8] sm:$0xff] %v4973
  %5008 = vst [vmem:[%s12 + $0xe0] sm:$0xff] %v4927
  %5009 = vst [vmem:[%s12 + $0xe8] sm:$0xff] %v4976
  %5010 = vst [vmem:[%s12 + $0xf0] sm:$0xff] %v4929
  %5011 = vst [vmem:[%s12 + $0xf8] sm:$0xff] %v4978
  // Predicated region
  $region50: #{_forward_jit.1} parent=0 // pred_check
    _
  $region51: #{_forward_jit.1} parent=0 // pred_check_branch
    %5013 = sbr.rel (0) target = $region53
  $region52: #{_forward_jit.1} parent=0 // pred_region
    _
  $region53: #{_forward_jit.1} parent=0 // pred_fallthru
    _
  // Predicated region
  $region54: #{_forward_jit.1} parent=0 // pred_check
    _
  $region55: #{_forward_jit.1} parent=0 // pred_check_branch
    %5015 = sbr.rel (0) target = $region57
  $region56: #{_forward_jit.1} parent=0 // pred_region
    _
  $region57: #{_forward_jit.1} parent=0 // pred_fallthru
    _

</llo_original>
